<compile_context>
chip_gen: v7x
topology: tpu7x:2x2x1
jax: 0.10.0
libtpu: 0.0.40
codegen_flags: <defaults>
</compile_context>

<pallas_src>
import jax
import jax.numpy as jnp
from jax.experimental import pallas as pl
from jax.experimental.pallas import tpu as pltpu

IN_DIM = 32 * 32 * 3   # 3072
HID = 512
OUT_DIM = 100
OUT_PAD = 128          # lane-dense padded class dimension


def mlp_kernel(x_ref, w1_ref, b1_ref, w2_ref, b2_ref, w3_ref, b3_ref, out_ref):
    # f32 activation tile straight from HBM; bf16 cast here (VPU, hidden
    # under the MXU work) instead of a separate wrapper-side XLA pass.
    x = x_ref[...].astype(jnp.bfloat16)                              # (TM, 3072)

    # fc1 + ReLU (bf16 x bf16 -> f32 accumulation on the MXU)
    h1 = jnp.dot(x, w1_ref[...], preferred_element_type=jnp.float32) + b1_ref[...]
    h1 = jnp.maximum(h1, 0.0).astype(jnp.bfloat16)

    # fc2 + ReLU
    h2 = jnp.dot(h1, w2_ref[...], preferred_element_type=jnp.float32) + b2_ref[...]
    h2 = jnp.maximum(h2, 0.0).astype(jnp.bfloat16)

    # fc3 (padded to 128 output lanes; padded columns have zero weights and a
    # -1e30 bias, so exp() underflows to 0 and softmax over 128 == softmax
    # over the real 100 classes).
    logits = jnp.dot(h2, w3_ref[...], preferred_element_type=jnp.float32) + b3_ref[...]

    # Numerically stable softmax over dim=1. Exact divide: keeps row sums at
    # 1.0 to f32 precision (the approx reciprocal previously broke this).
    m = jnp.max(logits, axis=-1, keepdims=True)
    e = jnp.exp(logits - m)
    out_ref[...] = (e / jnp.sum(e, axis=-1, keepdims=True)).astype(out_ref.dtype)


def prepare_params(params):
    """One-time conversion of f32 (in, out)-layout weights into the kernel's
    layout: bf16 weights (native MXU dtype, halves weight HBM traffic), f32
    biases, fc3 padded 100 -> 128 with a -1e30 mask bias on padded columns."""
    w1, b1, w2, b2, w3, b3 = params
    w1b = w1.astype(jnp.bfloat16)
    w2b = w2.astype(jnp.bfloat16)
    w3p = jnp.pad(w3, ((0, 0), (0, OUT_PAD - OUT_DIM))).astype(jnp.bfloat16)
    b1f = b1.astype(jnp.float32)
    b2f = b2.astype(jnp.float32)
    b3p = jnp.pad(b3.astype(jnp.float32), ((0, 0), (0, OUT_PAD - OUT_DIM)),
                  constant_values=-1e30)
    return (w1b, b1f, w2b, b2f, w3p, b3p)


def mlp_forward(x_nchw, prepared_params, *, tm=512):
    """x_nchw: (N, 3, 32, 32) float; prepared_params from prepare_params()."""
    w1b, b1f, w2b, b2f, w3p, b3p = prepared_params
    n = x_nchw.shape[0]
    x2d = x_nchw.reshape(n, IN_DIM).astype(jnp.float32)   # x.view(-1, 32*32*3)

    # Batch tile: multiple of 8 (f32 sublane packing). Default 512 amortizes
    # grid-step overhead on v6e/v7x while fitting v7x's 64 MiB VMEM; v5e is
    # already MXU-bound at this size. For v7x tuning keep cdiv(n, tm) >= 2 so
    # the "parallel" batch axis can be split across both TensorCores.
    round8 = lambda v: -(-v // 8) * 8
    tm = min(tm, max(8, round8(n)))
    grid = (pl.cdiv(n, tm),)   # ragged last block handled by Pallas, no jnp.pad copy

    row_spec = lambda shape: pl.BlockSpec(shape, lambda i: (i, 0))   # batch-tiled
    # Grid-invariant weights/biases: constant index_map -> fetched once, stay
    # VMEM-resident across the batch loop. (Mosaic does not refill them after
    # step 0; single-buffering them further is a possible VMEM saving.)
    res_spec = lambda shape: pl.BlockSpec(shape, lambda i: (0, 0))

    out = pl.pallas_call(
        mlp_kernel,
        out_shape=jax.ShapeDtypeStruct((n, OUT_PAD), jnp.float32),
        grid=grid,
        in_specs=[
            row_spec((tm, IN_DIM)),
            res_spec((IN_DIM, HID)),  res_spec((1, HID)),
            res_spec((HID, HID)),     res_spec((1, HID)),
            res_spec((HID, OUT_PAD)), res_spec((1, OUT_PAD)),
        ],
        out_specs=row_spec((tm, OUT_PAD)),
        compiler_params=pltpu.CompilerParams(
            dimension_semantics=("parallel",),      # megacore shard on v7x
            vmem_limit_bytes=40 << 20,              # fits v7x's 64 MiB VMEM/TC
        ),
    )(x2d, w1b, b1f, w2b, b2f, w3p, b3p)

    return out[:, :OUT_DIM]


def init_params(key):
    """Deterministic init mimicking nn.Linear's uniform(-1/sqrt(fan_in), +1/sqrt(fan_in)).
    Weights returned already transposed to (in_features, out_features), f32."""
    ks = jax.random.split(key, 6)

    def linear(kw, kb, fan_in, fan_out):
        bound = 1.0 / jnp.sqrt(jnp.float32(fan_in))
        w = jax.random.uniform(kw, (fan_in, fan_out), jnp.float32, -bound, bound)
        b = jax.random.uniform(kb, (1, fan_out), jnp.float32, -bound, bound)
        return w, b

    w1, b1 = linear(ks[0], ks[1], IN_DIM, HID)
    w2, b2 = linear(ks[2], ks[3], HID, HID)
    w3, b3 = linear(ks[4], ks[5], HID, OUT_DIM)
    return (w1, b1, w2, b2, w3, b3)


if __name__ == "__main__":
    key = jax.random.PRNGKey(0)
    k_x, k_p = jax.random.split(key)

    # Small CIFAR-like batch: (N, C, H, W) = (2, 3, 32, 32)
    x = jax.random.normal(k_x, (2, 3, 32, 32), dtype=jnp.float32)
    params = init_params(k_p)
    prepared = prepare_params(params)   # one-time weight prep (hoisted out of forward)

    probs = mlp_forward(x, prepared)
    probs = jax.block_until_ready(probs)

    # Reference in plain JAX using the same bf16-rounded operands (f32 math),
    # so only accumulation-order differences remain.
    w1, b1, w2, b2, w3, b3 = params
    x2d = x.reshape(x.shape[0], IN_DIM).astype(jnp.bfloat16).astype(jnp.float32)
    w1r = w1.astype(jnp.bfloat16).astype(jnp.float32)
    w2r = w2.astype(jnp.bfloat16).astype(jnp.float32)
    w3r = w3.astype(jnp.bfloat16).astype(jnp.float32)
    h1 = jnp.maximum(x2d @ w1r + b1, 0.0).astype(jnp.bfloat16).astype(jnp.float32)
    h2 = jnp.maximum(h1 @ w2r + b2, 0.0).astype(jnp.bfloat16).astype(jnp.float32)
    ref = jax.nn.softmax(h2 @ w3r + b3, axis=1)

    assert probs.shape == (2, OUT_DIM)
    assert bool(jnp.all(jnp.isfinite(probs)))
    assert jnp.allclose(probs, ref, atol=2e-3, rtol=2e-3)
    assert jnp.allclose(jnp.sum(probs, axis=1), 1.0, atol=2e-3)

    print("KERNEL_OK")
</pallas_src>

<mosaic_0001>
module attributes {stable_mosaic.version = 11 : i64} {
  func.func @mlp_kernel(%arg0: i32, %arg1: memref<8x3072xf32, #tpu.memory_space<vmem>>, %arg2: memref<3072x512xbf16, #tpu.memory_space<vmem>>, %arg3: memref<1x512xf32, #tpu.memory_space<vmem>>, %arg4: memref<512x512xbf16, #tpu.memory_space<vmem>>, %arg5: memref<1x512xf32, #tpu.memory_space<vmem>>, %arg6: memref<512x128xbf16, #tpu.memory_space<vmem>>, %arg7: memref<1x128xf32, #tpu.memory_space<vmem>>, %arg8: memref<8x128xf32, #tpu.memory_space<vmem>>) attributes {dimension_semantics = [#tpu.dimension_semantics<parallel>], iteration_bounds = array<i64: 1>, scalar_prefetch = 0 : i64, scratch_operands = 0 : i64, tpu.core_type = #tpu.core_type<tc>, window_params = [{transform_indices = @transform_0, window_bounds = array<i64: 8, 3072>}, {pipeline_mode = #tpu.pipeline_mode<synchronous>, transform_indices = @transform_1, window_bounds = array<i64: 3072, 512>}, {pipeline_mode = #tpu.pipeline_mode<synchronous>, transform_indices = @transform_2, window_bounds = array<i64: 1, 512>}, {pipeline_mode = #tpu.pipeline_mode<synchronous>, transform_indices = @transform_3, window_bounds = array<i64: 512, 512>}, {pipeline_mode = #tpu.pipeline_mode<synchronous>, transform_indices = @transform_4, window_bounds = array<i64: 1, 512>}, {pipeline_mode = #tpu.pipeline_mode<synchronous>, transform_indices = @transform_5, window_bounds = array<i64: 512, 128>}, {pipeline_mode = #tpu.pipeline_mode<synchronous>, transform_indices = @transform_6, window_bounds = array<i64: 1, 128>}, {transform_indices = @transform_7, window_bounds = array<i64: 8, 128>}]} {
    %c0 = arith.constant 0 : index
    %c0_0 = arith.constant 0 : index
    %0 = vector.load %arg1[%c0, %c0_0] : memref<8x3072xf32, #tpu.memory_space<vmem>>, vector<8x3072xf32>
    %1 = arith.truncf %0 : vector<8x3072xf32> to vector<8x3072xbf16>
    %c0_1 = arith.constant 0 : index
    %c0_2 = arith.constant 0 : index
    %2 = vector.load %arg2[%c0_1, %c0_2] : memref<3072x512xbf16, #tpu.memory_space<vmem>>, vector<3072x512xbf16>
    %cst = arith.constant dense<0.000000e+00> : vector<8x512xf32>
    %3 = tpu.matmul %1, %2, %cst {dimension_numbers = #tpu.dot_dimension_numbers<[1], [0], [0], [1], [0, 0, 1, 1], [], []>} : vector<8x3072xbf16>, vector<3072x512xbf16>, vector<8x512xf32> -> vector<8x512xf32>
    %c0_3 = arith.constant 0 : index
    %c0_4 = arith.constant 0 : index
    %4 = vector.load %arg3[%c0_3, %c0_4] : memref<1x512xf32, #tpu.memory_space<vmem>>, vector<1x512xf32>
    %5 = vector.broadcast %4 : vector<1x512xf32> to vector<8x512xf32>
    %6 = arith.addf %3, %5 : vector<8x512xf32>
    %cst_5 = arith.constant 0.000000e+00 : f32
    %7 = vector.broadcast %cst_5 : f32 to vector<8x512xf32>
    %8 = arith.maximumf %6, %7 : vector<8x512xf32>
    %9 = arith.truncf %8 : vector<8x512xf32> to vector<8x512xbf16>
    %c0_6 = arith.constant 0 : index
    %c0_7 = arith.constant 0 : index
    %10 = vector.load %arg4[%c0_6, %c0_7] : memref<512x512xbf16, #tpu.memory_space<vmem>>, vector<512x512xbf16>
    %cst_8 = arith.constant dense<0.000000e+00> : vector<8x512xf32>
    %11 = tpu.matmul %9, %10, %cst_8 {dimension_numbers = #tpu.dot_dimension_numbers<[1], [0], [0], [1], [0, 0, 1, 1], [], []>} : vector<8x512xbf16>, vector<512x512xbf16>, vector<8x512xf32> -> vector<8x512xf32>
    %c0_9 = arith.constant 0 : index
    %c0_10 = arith.constant 0 : index
    %12 = vector.load %arg5[%c0_9, %c0_10] : memref<1x512xf32, #tpu.memory_space<vmem>>, vector<1x512xf32>
    %13 = vector.broadcast %12 : vector<1x512xf32> to vector<8x512xf32>
    %14 = arith.addf %11, %13 : vector<8x512xf32>
    %cst_11 = arith.constant 0.000000e+00 : f32
    %15 = vector.broadcast %cst_11 : f32 to vector<8x512xf32>
    %16 = arith.maximumf %14, %15 : vector<8x512xf32>
    %17 = arith.truncf %16 : vector<8x512xf32> to vector<8x512xbf16>
    %c0_12 = arith.constant 0 : index
    %c0_13 = arith.constant 0 : index
    %18 = vector.load %arg6[%c0_12, %c0_13] : memref<512x128xbf16, #tpu.memory_space<vmem>>, vector<512x128xbf16>
    %cst_14 = arith.constant dense<0.000000e+00> : vector<8x128xf32>
    %19 = tpu.matmul %17, %18, %cst_14 {dimension_numbers = #tpu.dot_dimension_numbers<[1], [0], [0], [1], [0, 0, 1, 1], [], []>} : vector<8x512xbf16>, vector<512x128xbf16>, vector<8x128xf32> -> vector<8x128xf32>
    %c0_15 = arith.constant 0 : index
    %c0_16 = arith.constant 0 : index
    %20 = vector.load %arg7[%c0_15, %c0_16] : memref<1x128xf32, #tpu.memory_space<vmem>>, vector<1x128xf32>
    %21 = vector.broadcast %20 : vector<1x128xf32> to vector<8x128xf32>
    %22 = arith.addf %19, %21 : vector<8x128xf32>
    %cst_17 = arith.constant dense<0xFF800000> : vector<8xf32>
    %23 = vector.multi_reduction <maximumf>, %22, %cst_17 [1] : vector<8x128xf32> to vector<8xf32>
    %24 = vector.shape_cast %23 : vector<8xf32> to vector<8x1xf32>
    %25 = vector.broadcast %24 : vector<8x1xf32> to vector<8x128xf32>
    %26 = arith.subf %22, %25 : vector<8x128xf32>
    %27 = math.exp %26 : vector<8x128xf32>
    %cst_18 = arith.constant dense<0.000000e+00> : vector<8xf32>
    %28 = vector.multi_reduction <add>, %27, %cst_18 [1] : vector<8x128xf32> to vector<8xf32>
    %29 = vector.shape_cast %28 : vector<8xf32> to vector<8x1xf32>
    %30 = vector.broadcast %29 : vector<8x1xf32> to vector<8x128xf32>
    %31 = arith.divf %27, %30 : vector<8x128xf32>
    %c0_19 = arith.constant 0 : index
    %c0_20 = arith.constant 0 : index
    %32 = vector.load %arg8[%c0_19, %c0_20] : memref<8x128xf32, #tpu.memory_space<vmem>>, vector<8x128xf32>
    tpu.vector_store %arg8[%c0_19, %c0_20], %31 {strides = array<i32>} : memref<8x128xf32, #tpu.memory_space<vmem>>, vector<8x128xf32>,
    return
  }
  func.func @transform_0(%arg0: i32) -> (i32, i32) {
    %c0_i32 = arith.constant 0 : i32
    %c0_i32_0 = arith.constant 0 : i32
    return %arg0, %c0_i32 : i32, i32
  }
  func.func @transform_1(%arg0: i32) -> (i32, i32) {
    %c0_i32 = arith.constant 0 : i32
    %c0_i32_0 = arith.constant 0 : i32
    %c0_i32_1 = arith.constant 0 : i32
    return %c0_i32, %c0_i32_0 : i32, i32
  }
  func.func @transform_2(%arg0: i32) -> (i32, i32) {
    %c0_i32 = arith.constant 0 : i32
    %c0_i32_0 = arith.constant 0 : i32
    %c0_i32_1 = arith.constant 0 : i32
    return %c0_i32, %c0_i32_0 : i32, i32
  }
  func.func @transform_3(%arg0: i32) -> (i32, i32) {
    %c0_i32 = arith.constant 0 : i32
    %c0_i32_0 = arith.constant 0 : i32
    %c0_i32_1 = arith.constant 0 : i32
    return %c0_i32, %c0_i32_0 : i32, i32
  }
  func.func @transform_4(%arg0: i32) -> (i32, i32) {
    %c0_i32 = arith.constant 0 : i32
    %c0_i32_0 = arith.constant 0 : i32
    %c0_i32_1 = arith.constant 0 : i32
    return %c0_i32, %c0_i32_0 : i32, i32
  }
  func.func @transform_5(%arg0: i32) -> (i32, i32) {
    %c0_i32 = arith.constant 0 : i32
    %c0_i32_0 = arith.constant 0 : i32
    %c0_i32_1 = arith.constant 0 : i32
    return %c0_i32, %c0_i32_0 : i32, i32
  }
  func.func @transform_6(%arg0: i32) -> (i32, i32) {
    %c0_i32 = arith.constant 0 : i32
    %c0_i32_0 = arith.constant 0 : i32
    %c0_i32_1 = arith.constant 0 : i32
    return %c0_i32, %c0_i32_0 : i32, i32
  }
  func.func @transform_7(%arg0: i32) -> (i32, i32) {
    %c0_i32 = arith.constant 0 : i32
    %c0_i32_0 = arith.constant 0 : i32
    return %arg0, %c0_i32 : i32, i32
  }
}

</mosaic_0001>

<llo_original>
// kernel: tpu_custom_call.1
$region0: #{tpu_custom_call.1}
  #allocation0 [shape = 'u32[]', space=smem, size = 0x4, offset = 0x4, fixed_abs, tag = 'smem constant byte address 0x4 - core index']
  #allocation1 [shape = 'u32[144,128]{1,0:T(1,128)}', space=vmem, size = 0x12000, scoped, tag = 'internal scratch']
  %s0 = inlined_call_operand.hbm [shape: f32[2,3072], index: 0, kind: input, shape index: {}]
  %s1 = inlined_call_operand.hbm [shape: bf16[3072,512], index: 1, kind: input, shape index: {}]
  %s2 = inlined_call_operand.hbm [shape: f32[1,512], index: 2, kind: input, shape index: {}]
  %s3 = inlined_call_operand.hbm [shape: bf16[512,512], index: 3, kind: input, shape index: {}]
  %s4 = inlined_call_operand.hbm [shape: f32[1,512], index: 4, kind: input, shape index: {}]
  %s5 = inlined_call_operand.hbm [shape: bf16[512,128], index: 5, kind: input, shape index: {}]
  %s6 = inlined_call_operand.hbm [shape: f32[1,128], index: 6, kind: input, shape index: {}]
  %s7 = inlined_call_operand.hbm [shape: f32[2,128], index: 7, kind: output, shape index: {}]
  %s8 = sld [smem:[#allocation0]]
  $region66: #{tpu_custom_call.1} parent=0
    _
  %s10 = ssub.s32 1, %s8
  %s11 = scalar_select 0, %s10, %s8
  $region1: #{tpu_custom_call.1} parent=0
    #allocation2 [shape = 'u8[98304]{0}', space=vmem, size = 0x18000, scoped, tag = 'input window, operand 0, single buffered']
    #allocation3 [shape = 's32[1]{0}', space=sflag, size = 0x4, scoped, tag = 'scoped memory for tpu_custom_call.1']
    #allocation4 [shape = 's32[1]{0}', space=sflag, size = 0x4, scoped, tag = 'scoped memory for tpu_custom_call.1']
    #allocation5 [shape = 'u8[3145728]{0}', space=vmem, size = 0x300000, scoped, tag = 'input window, operand 1, single buffered']
    #allocation6 [shape = 's32[1]{0}', space=sflag, size = 0x4, scoped, tag = 'scoped memory for tpu_custom_call.1']
    #allocation7 [shape = 'u8[2048]{0}', space=vmem, size = 0x800, scoped, tag = 'input window, operand 2, single buffered']
    #allocation8 [shape = 'u8[524288]{0}', space=vmem, size = 0x80000, scoped, tag = 'input window, operand 3, single buffered']
    #allocation9 [shape = 's32[1]{0}', space=sflag, size = 0x4, scoped, tag = 'scoped memory for tpu_custom_call.1']
    #allocation10 [shape = 'u8[2048]{0}', space=vmem, size = 0x800, scoped, tag = 'input window, operand 4, single buffered']
    #allocation11 [shape = 'u8[131072]{0}', space=vmem, size = 0x20000, scoped, tag = 'input window, operand 5, single buffered']
    #allocation12 [shape = 's32[1]{0}', space=sflag, size = 0x4, scoped, tag = 'scoped memory for tpu_custom_call.1']
    #allocation13 [shape = 'u8[512]{0}', space=vmem, size = 0x400, scoped, tag = 'input window, operand 6, single buffered']
    #allocation14 [shape = 'u8[4096]{0}', space=vmem, size = 0x1000, scoped, tag = 'output window, operand 0, single buffered']
    %12 = vsyncpa [#allocation3], 0
    %13 = vsyncpa [#allocation6], 0
    %14 = vsyncpa [#allocation9], 0
    %15 = vsyncpa [#allocation12], 0
    %16 = vsyncpa [#allocation4], 0
    // Predicated region
    $region2: #{tpu_custom_call.1} parent=1 // pred_check
      _
    $region3: #{tpu_custom_call.1} parent=1 // pred_check_branch
      %18 = sbr.rel (0) target = $region5
    $region4: #{tpu_custom_call.1} parent=1 // pred_region
      %s20 = ssub.s32 3072, 768
      %21 = vsyncadd [#allocation3], %s20
      %s22 = sshll.u32 [#allocation2], 4
      %s23 = int_to_ptr.vmem [resolvable:$true] %s22
      %28 = dma.hbm_to_vmem [thread:$0]  %s0, 768, %s23, [#allocation3], 768, 768, 48
    $region5: #{tpu_custom_call.1} parent=1 // pred_fallthru
      _
    // Predicated region
    $region6: #{tpu_custom_call.1} parent=1 // pred_check
      _
    $region7: #{tpu_custom_call.1} parent=1 // pred_check_branch
      %30 = sbr.rel (0) target = $region9
    $region8: #{tpu_custom_call.1} parent=1 // pred_region
      %s32 = ssub.s32 98304, 98304
      %33 = vsyncadd [#allocation6], %s32
      %s34 = sshll.u32 [#allocation5], 4
      %s35 = int_to_ptr.vmem [resolvable:$true] %s34
      %40 = dma.hbm_to_vmem [thread:$0]  %s1, 98304, %s35, [#allocation6], 256, 256, 16
    $region9: #{tpu_custom_call.1} parent=1 // pred_fallthru
      _
    // Predicated region
    $region10: #{tpu_custom_call.1} parent=1 // pred_check
      _
    $region11: #{tpu_custom_call.1} parent=1 // pred_check_branch
      %42 = sbr.rel (0) target = $region13
    $region12: #{tpu_custom_call.1} parent=1 // pred_region
      %s44 = ssub.s32 64, 64
      %45 = vsyncadd [#allocation6], %s44
      %s47 = sshll.u32 [#allocation7], 4
      %s48 = int_to_ptr.vmem [resolvable:$true] %s47
      %50 = dma.hbm_to_vmem [thread:$0]  %s2, 64, %s48, [#allocation6]
    $region13: #{tpu_custom_call.1} parent=1 // pred_fallthru
      _
    // Predicated region
    $region14: #{tpu_custom_call.1} parent=1 // pred_check
      _
    $region15: #{tpu_custom_call.1} parent=1 // pred_check_branch
      %52 = sbr.rel (0) target = $region17
    $region16: #{tpu_custom_call.1} parent=1 // pred_region
      %s54 = ssub.s32 16384, 16384
      %55 = vsyncadd [#allocation9], %s54
      %s56 = sshll.u32 [#allocation8], 4
      %s57 = int_to_ptr.vmem [resolvable:$true] %s56
      %62 = dma.hbm_to_vmem [thread:$0]  %s3, 16384, %s57, [#allocation9], 256, 256, 16
    $region17: #{tpu_custom_call.1} parent=1 // pred_fallthru
      _
    // Predicated region
    $region18: #{tpu_custom_call.1} parent=1 // pred_check
      _
    $region19: #{tpu_custom_call.1} parent=1 // pred_check_branch
      %64 = sbr.rel (0) target = $region21
    $region20: #{tpu_custom_call.1} parent=1 // pred_region
      %s66 = ssub.s32 64, 64
      %67 = vsyncadd [#allocation9], %s66
      %s69 = sshll.u32 [#allocation10], 4
      %s70 = int_to_ptr.vmem [resolvable:$true] %s69
      %72 = dma.hbm_to_vmem [thread:$0]  %s4, 64, %s70, [#allocation9]
    $region21: #{tpu_custom_call.1} parent=1 // pred_fallthru
      _
    // Predicated region
    $region22: #{tpu_custom_call.1} parent=1 // pred_check
      _
    $region23: #{tpu_custom_call.1} parent=1 // pred_check_branch
      %74 = sbr.rel (0) target = $region25
    $region24: #{tpu_custom_call.1} parent=1 // pred_region
      %s76 = ssub.s32 4096, 4096
      %77 = vsyncadd [#allocation12], %s76
      %s78 = sshll.u32 [#allocation11], 4
      %s79 = int_to_ptr.vmem [resolvable:$true] %s78
      %84 = dma.hbm_to_vmem [thread:$0]  %s5, 4096, %s79, [#allocation12], 64, 64, 4
    $region25: #{tpu_custom_call.1} parent=1 // pred_fallthru
      _
    // Predicated region
    $region26: #{tpu_custom_call.1} parent=1 // pred_check
      _
    $region27: #{tpu_custom_call.1} parent=1 // pred_check_branch
      %86 = sbr.rel (0) target = $region29
    $region28: #{tpu_custom_call.1} parent=1 // pred_region
      %s88 = ssub.s32 16, 16
      %89 = vsyncadd [#allocation12], %s88
      %s91 = sshll.u32 [#allocation13], 4
      %s92 = int_to_ptr.vmem [resolvable:$true] %s91
      %94 = dma.hbm_to_vmem [thread:$0]  %s6, 16, %s92, [#allocation12]
    $region29: #{tpu_custom_call.1} parent=1 // pred_fallthru
      _
    // Predicated region
    $region30: #{tpu_custom_call.1} parent=1 // pred_check
      _
    $region31: #{tpu_custom_call.1} parent=1 // pred_check_branch
      %96 = sbr.rel (0) target = $region33
    $region32: #{tpu_custom_call.1} parent=1 // pred_region
      %97 = dma.done [#allocation3], 3072
    $region33: #{tpu_custom_call.1} parent=1 // pred_fallthru
      _
    // Predicated region
    $region34: #{tpu_custom_call.1} parent=1 // pred_check
      _
    $region35: #{tpu_custom_call.1} parent=1 // pred_check_branch
      %99 = sbr.rel (0) target = $region37
    $region36: #{tpu_custom_call.1} parent=1 // pred_region
      %100 = dma.done [#allocation6], 98304
    $region37: #{tpu_custom_call.1} parent=1 // pred_fallthru
      _
    // Predicated region
    $region38: #{tpu_custom_call.1} parent=1 // pred_check
      _
    $region39: #{tpu_custom_call.1} parent=1 // pred_check_branch
      %102 = sbr.rel (0) target = $region41
    $region40: #{tpu_custom_call.1} parent=1 // pred_region
      %103 = dma.done [#allocation6], 64
    $region41: #{tpu_custom_call.1} parent=1 // pred_fallthru
      _
    // Predicated region
    $region42: #{tpu_custom_call.1} parent=1 // pred_check
      _
    $region43: #{tpu_custom_call.1} parent=1 // pred_check_branch
      %105 = sbr.rel (0) target = $region45
    $region44: #{tpu_custom_call.1} parent=1 // pred_region
      %106 = dma.done [#allocation9], 16384
    $region45: #{tpu_custom_call.1} parent=1 // pred_fallthru
      _
    // Predicated region
    $region46: #{tpu_custom_call.1} parent=1 // pred_check
      _
    $region47: #{tpu_custom_call.1} parent=1 // pred_check_branch
      %108 = sbr.rel (0) target = $region49
    $region48: #{tpu_custom_call.1} parent=1 // pred_region
      %109 = dma.done [#allocation9], 64
    $region49: #{tpu_custom_call.1} parent=1 // pred_fallthru
      _
    // Predicated region
    $region50: #{tpu_custom_call.1} parent=1 // pred_check
      _
    $region51: #{tpu_custom_call.1} parent=1 // pred_check_branch
      %111 = sbr.rel (0) target = $region53
    $region52: #{tpu_custom_call.1} parent=1 // pred_region
      %112 = dma.done [#allocation12], 4096
    $region53: #{tpu_custom_call.1} parent=1 // pred_fallthru
      _
    // Predicated region
    $region54: #{tpu_custom_call.1} parent=1 // pred_check
      _
    $region55: #{tpu_custom_call.1} parent=1 // pred_check_branch
      %114 = sbr.rel (0) target = $region57
    $region56: #{tpu_custom_call.1} parent=1 // pred_region
      %115 = dma.done [#allocation12], 16
    $region57: #{tpu_custom_call.1} parent=1 // pred_fallthru
      _
    %v117 = vld [vmem:[#allocation2] sm:$0xff]
    %v118 = vld [vmem:[#allocation2 + $0x8] sm:$0xff]
    %v119 = vld [vmem:[#allocation2 + $0x10] sm:$0xff]
    %v120 = vld [vmem:[#allocation2 + $0x18] sm:$0xff]
    %v121 = vld [vmem:[#allocation2 + $0x20] sm:$0xff]
    %v122 = vld [vmem:[#allocation2 + $0x28] sm:$0xff]
    %v123 = vld [vmem:[#allocation2 + $0x30] sm:$0xff]
    %v124 = vld [vmem:[#allocation2 + $0x38] sm:$0xff]
    %v125 = vld [vmem:[#allocation2 + $0x40] sm:$0xff]
    %v126 = vld [vmem:[#allocation2 + $0x48] sm:$0xff]
    %v127 = vld [vmem:[#allocation2 + $0x50] sm:$0xff]
    %v128 = vld [vmem:[#allocation2 + $0x58] sm:$0xff]
    %v129 = vld [vmem:[#allocation2 + $0x60] sm:$0xff]
    %v130 = vld [vmem:[#allocation2 + $0x68] sm:$0xff]
    %v131 = vld [vmem:[#allocation2 + $0x70] sm:$0xff]
    %v132 = vld [vmem:[#allocation2 + $0x78] sm:$0xff]
    %v133 = vld [vmem:[#allocation2 + $0x80] sm:$0xff]
    %v134 = vld [vmem:[#allocation2 + $0x88] sm:$0xff]
    %v135 = vld [vmem:[#allocation2 + $0x90] sm:$0xff]
    %v136 = vld [vmem:[#allocation2 + $0x98] sm:$0xff]
    %v137 = vld [vmem:[#allocation2 + $0xa0] sm:$0xff]
    %v138 = vld [vmem:[#allocation2 + $0xa8] sm:$0xff]
    %v139 = vld [vmem:[#allocation2 + $0xb0] sm:$0xff]
    %v140 = vld [vmem:[#allocation2 + $0xb8] sm:$0xff]
    %v165 = vcombine.low %v117, %v123
    %v166 = vcombine.high %v117, %v123
    %v167 = vcombine.low %v129, %v135
    %v168 = vcombine.high %v129, %v135
    %v170 = vunpack.c.l.s4 1983009808
    %v171 = vunpack.c.0.s8 %v170
    %v172 = vlaneseq
    %v173 = vshrl.u32 %v172, 7
    %v174 = vsub.s32 %v171, %v173
    %v175 = vrot.slane %v165, %v174
    %v177 = vunpack.c.l.s4 1983009808
    %v178 = vunpack.c.0.s8 %v177
    %v179 = vlaneseq
    %v180 = vshrl.u32 %v179, 7
    %v181 = vsub.s32 %v178, %v180
    %v182 = vrot.slane %v166, %v181
    %v184 = vunpack.c.l.s4 1983009808
    %v185 = vunpack.c.0.s8 %v184
    %v186 = vlaneseq
    %v187 = vshrl.u32 %v186, 7
    %v188 = vsub.s32 %v185, %v187
    %v189 = vrot.slane %v167, %v188
    %v191 = vunpack.c.l.s4 1983009808
    %v192 = vunpack.c.0.s8 %v191
    %v193 = vlaneseq
    %v194 = vshrl.u32 %v193, 7
    %v195 = vsub.s32 %v192, %v194
    %v196 = vrot.slane %v168, %v195
    %v197 = vcombine.low %v175, %v189
    %v198 = vcombine.high %v175, %v189
    %v199 = vcombine.low %v182, %v196
    %v200 = vcombine.high %v182, %v196
    %v201 = vcombine.low %v118, %v124
    %v202 = vcombine.high %v118, %v124
    %v203 = vcombine.low %v130, %v136
    %v204 = vcombine.high %v130, %v136
    %v206 = vunpack.c.l.s4 1983009808
    %v207 = vunpack.c.0.s8 %v206
    %v208 = vlaneseq
    %v209 = vshrl.u32 %v208, 7
    %v210 = vsub.s32 %v207, %v209
    %v211 = vrot.slane %v201, %v210
    %v213 = vunpack.c.l.s4 1983009808
    %v214 = vunpack.c.0.s8 %v213
    %v215 = vlaneseq
    %v216 = vshrl.u32 %v215, 7
    %v217 = vsub.s32 %v214, %v216
    %v218 = vrot.slane %v202, %v217
    %v220 = vunpack.c.l.s4 1983009808
    %v221 = vunpack.c.0.s8 %v220
    %v222 = vlaneseq
    %v223 = vshrl.u32 %v222, 7
    %v224 = vsub.s32 %v221, %v223
    %v225 = vrot.slane %v203, %v224
    %v227 = vunpack.c.l.s4 1983009808
    %v228 = vunpack.c.0.s8 %v227
    %v229 = vlaneseq
    %v230 = vshrl.u32 %v229, 7
    %v231 = vsub.s32 %v228, %v230
    %v232 = vrot.slane %v204, %v231
    %v233 = vcombine.low %v211, %v225
    %v234 = vcombine.high %v211, %v225
    %v235 = vcombine.low %v218, %v232
    %v236 = vcombine.high %v218, %v232
    %v237 = vcombine.low %v119, %v125
    %v238 = vcombine.high %v119, %v125
    %v239 = vcombine.low %v131, %v137
    %v240 = vcombine.high %v131, %v137
    %v242 = vunpack.c.l.s4 1983009808
    %v243 = vunpack.c.0.s8 %v242
    %v244 = vlaneseq
    %v245 = vshrl.u32 %v244, 7
    %v246 = vsub.s32 %v243, %v245
    %v247 = vrot.slane %v237, %v246
    %v249 = vunpack.c.l.s4 1983009808
    %v250 = vunpack.c.0.s8 %v249
    %v251 = vlaneseq
    %v252 = vshrl.u32 %v251, 7
    %v253 = vsub.s32 %v250, %v252
    %v254 = vrot.slane %v238, %v253
    %v256 = vunpack.c.l.s4 1983009808
    %v257 = vunpack.c.0.s8 %v256
    %v258 = vlaneseq
    %v259 = vshrl.u32 %v258, 7
    %v260 = vsub.s32 %v257, %v259
    %v261 = vrot.slane %v239, %v260
    %v263 = vunpack.c.l.s4 1983009808
    %v264 = vunpack.c.0.s8 %v263
    %v265 = vlaneseq
    %v266 = vshrl.u32 %v265, 7
    %v267 = vsub.s32 %v264, %v266
    %v268 = vrot.slane %v240, %v267
    %v269 = vcombine.low %v247, %v261
    %v270 = vcombine.high %v247, %v261
    %v271 = vcombine.low %v254, %v268
    %v272 = vcombine.high %v254, %v268
    %v273 = vcombine.low %v120, %v126
    %v274 = vcombine.high %v120, %v126
    %v275 = vcombine.low %v132, %v138
    %v276 = vcombine.high %v132, %v138
    %v278 = vunpack.c.l.s4 1983009808
    %v279 = vunpack.c.0.s8 %v278
    %v280 = vlaneseq
    %v281 = vshrl.u32 %v280, 7
    %v282 = vsub.s32 %v279, %v281
    %v283 = vrot.slane %v273, %v282
    %v285 = vunpack.c.l.s4 1983009808
    %v286 = vunpack.c.0.s8 %v285
    %v287 = vlaneseq
    %v288 = vshrl.u32 %v287, 7
    %v289 = vsub.s32 %v286, %v288
    %v290 = vrot.slane %v274, %v289
    %v292 = vunpack.c.l.s4 1983009808
    %v293 = vunpack.c.0.s8 %v292
    %v294 = vlaneseq
    %v295 = vshrl.u32 %v294, 7
    %v296 = vsub.s32 %v293, %v295
    %v297 = vrot.slane %v275, %v296
    %v299 = vunpack.c.l.s4 1983009808
    %v300 = vunpack.c.0.s8 %v299
    %v301 = vlaneseq
    %v302 = vshrl.u32 %v301, 7
    %v303 = vsub.s32 %v300, %v302
    %v304 = vrot.slane %v276, %v303
    %v305 = vcombine.low %v283, %v297
    %v306 = vcombine.high %v283, %v297
    %v307 = vcombine.low %v290, %v304
    %v308 = vcombine.high %v290, %v304
    %v309 = vcombine.low %v121, %v127
    %v310 = vcombine.high %v121, %v127
    %v311 = vcombine.low %v133, %v139
    %v312 = vcombine.high %v133, %v139
    %v314 = vunpack.c.l.s4 1983009808
    %v315 = vunpack.c.0.s8 %v314
    %v316 = vlaneseq
    %v317 = vshrl.u32 %v316, 7
    %v318 = vsub.s32 %v315, %v317
    %v319 = vrot.slane %v309, %v318
    %v321 = vunpack.c.l.s4 1983009808
    %v322 = vunpack.c.0.s8 %v321
    %v323 = vlaneseq
    %v324 = vshrl.u32 %v323, 7
    %v325 = vsub.s32 %v322, %v324
    %v326 = vrot.slane %v310, %v325
    %v328 = vunpack.c.l.s4 1983009808
    %v329 = vunpack.c.0.s8 %v328
    %v330 = vlaneseq
    %v331 = vshrl.u32 %v330, 7
    %v332 = vsub.s32 %v329, %v331
    %v333 = vrot.slane %v311, %v332
    %v335 = vunpack.c.l.s4 1983009808
    %v336 = vunpack.c.0.s8 %v335
    %v337 = vlaneseq
    %v338 = vshrl.u32 %v337, 7
    %v339 = vsub.s32 %v336, %v338
    %v340 = vrot.slane %v312, %v339
    %v341 = vcombine.low %v319, %v333
    %v342 = vcombine.high %v319, %v333
    %v343 = vcombine.low %v326, %v340
    %v344 = vcombine.high %v326, %v340
    %v345 = vcombine.low %v122, %v128
    %v346 = vcombine.high %v122, %v128
    %v347 = vcombine.low %v134, %v140
    %v348 = vcombine.high %v134, %v140
    %v350 = vunpack.c.l.s4 1983009808
    %v351 = vunpack.c.0.s8 %v350
    %v352 = vlaneseq
    %v353 = vshrl.u32 %v352, 7
    %v354 = vsub.s32 %v351, %v353
    %v355 = vrot.slane %v345, %v354
    %v357 = vunpack.c.l.s4 1983009808
    %v358 = vunpack.c.0.s8 %v357
    %v359 = vlaneseq
    %v360 = vshrl.u32 %v359, 7
    %v361 = vsub.s32 %v358, %v360
    %v362 = vrot.slane %v346, %v361
    %v364 = vunpack.c.l.s4 1983009808
    %v365 = vunpack.c.0.s8 %v364
    %v366 = vlaneseq
    %v367 = vshrl.u32 %v366, 7
    %v368 = vsub.s32 %v365, %v367
    %v369 = vrot.slane %v347, %v368
    %v371 = vunpack.c.l.s4 1983009808
    %v372 = vunpack.c.0.s8 %v371
    %v373 = vlaneseq
    %v374 = vshrl.u32 %v373, 7
    %v375 = vsub.s32 %v372, %v374
    %v376 = vrot.slane %v348, %v375
    %v377 = vcombine.low %v355, %v369
    %v378 = vcombine.high %v355, %v369
    %v379 = vcombine.low %v362, %v376
    %v380 = vcombine.high %v362, %v376
    %v405 = vpack.c.bf16 %v197, %v197
    %v406 = vpack.c.bf16 %v198, %v198
    %v407 = vpack.c.bf16 %v199, %v199
    %v408 = vpack.c.bf16 %v200, %v200
    %v409 = vpack.c.bf16 %v233, %v233
    %v410 = vpack.c.bf16 %v234, %v234
    %v411 = vpack.c.bf16 %v235, %v235
    %v412 = vpack.c.bf16 %v236, %v236
    %v413 = vpack.c.bf16 %v269, %v269
    %v414 = vpack.c.bf16 %v270, %v270
    %v415 = vpack.c.bf16 %v271, %v271
    %v416 = vpack.c.bf16 %v272, %v272
    %v417 = vpack.c.bf16 %v305, %v305
    %v418 = vpack.c.bf16 %v306, %v306
    %v419 = vpack.c.bf16 %v307, %v307
    %v420 = vpack.c.bf16 %v308, %v308
    %v421 = vpack.c.bf16 %v341, %v341
    %v422 = vpack.c.bf16 %v342, %v342
    %v423 = vpack.c.bf16 %v343, %v343
    %v424 = vpack.c.bf16 %v344, %v344
    %v425 = vpack.c.bf16 %v377, %v377
    %v426 = vpack.c.bf16 %v378, %v378
    %v427 = vpack.c.bf16 %v379, %v379
    %v428 = vpack.c.bf16 %v380, %v380
    %v429 = vld [vmem:[#allocation5] sm:$0xff]
    %v430 = vld [vmem:[#allocation5 + $0x8] sm:$0xff]
    %v431 = vld [vmem:[#allocation5 + $0x10] sm:$0xff]
    %v432 = vld [vmem:[#allocation5 + $0x18] sm:$0xff]
    %v433 = vld [vmem:[#allocation5 + $0x20] sm:$0xff]
    %v434 = vld [vmem:[#allocation5 + $0x28] sm:$0xff]
    %v435 = vld [vmem:[#allocation5 + $0x30] sm:$0xff]
    %v436 = vld [vmem:[#allocation5 + $0x38] sm:$0xff]
    %v437 = vld [vmem:[#allocation5 + $0x40] sm:$0xff]
    %v438 = vld [vmem:[#allocation5 + $0x48] sm:$0xff]
    %v439 = vld [vmem:[#allocation5 + $0x50] sm:$0xff]
    %v440 = vld [vmem:[#allocation5 + $0x58] sm:$0xff]
    %v441 = vld [vmem:[#allocation5 + $0x60] sm:$0xff]
    %v442 = vld [vmem:[#allocation5 + $0x68] sm:$0xff]
    %v443 = vld [vmem:[#allocation5 + $0x70] sm:$0xff]
    %v444 = vld [vmem:[#allocation5 + $0x78] sm:$0xff]
    %v445 = vld [vmem:[#allocation5 + $0x80] sm:$0xff]
    %v446 = vld [vmem:[#allocation5 + $0x88] sm:$0xff]
    %v447 = vld [vmem:[#allocation5 + $0x90] sm:$0xff]
    %v448 = vld [vmem:[#allocation5 + $0x98] sm:$0xff]
    %v449 = vld [vmem:[#allocation5 + $0xa0] sm:$0xff]
    %v450 = vld [vmem:[#allocation5 + $0xa8] sm:$0xff]
    %v451 = vld [vmem:[#allocation5 + $0xb0] sm:$0xff]
    %v452 = vld [vmem:[#allocation5 + $0xb8] sm:$0xff]
    %v453 = vld [vmem:[#allocation5 + $0xc0] sm:$0xff]
    %v454 = vld [vmem:[#allocation5 + $0xc8] sm:$0xff]
    %v455 = vld [vmem:[#allocation5 + $0xd0] sm:$0xff]
    %v456 = vld [vmem:[#allocation5 + $0xd8] sm:$0xff]
    %v457 = vld [vmem:[#allocation5 + $0xe0] sm:$0xff]
    %v458 = vld [vmem:[#allocation5 + $0xe8] sm:$0xff]
    %v459 = vld [vmem:[#allocation5 + $0xf0] sm:$0xff]
    %v460 = vld [vmem:[#allocation5 + $0xf8] sm:$0xff]
    %v461 = vld [vmem:[#allocation5 + $0x100] sm:$0xff]
    %v462 = vld [vmem:[#allocation5 + $0x108] sm:$0xff]
    %v463 = vld [vmem:[#allocation5 + $0x110] sm:$0xff]
    %v464 = vld [vmem:[#allocation5 + $0x118] sm:$0xff]
    %v465 = vld [vmem:[#allocation5 + $0x120] sm:$0xff]
    %v466 = vld [vmem:[#allocation5 + $0x128] sm:$0xff]
    %v467 = vld [vmem:[#allocation5 + $0x130] sm:$0xff]
    %v468 = vld [vmem:[#allocation5 + $0x138] sm:$0xff]
    %v469 = vld [vmem:[#allocation5 + $0x140] sm:$0xff]
    %v470 = vld [vmem:[#allocation5 + $0x148] sm:$0xff]
    %v471 = vld [vmem:[#allocation5 + $0x150] sm:$0xff]
    %v472 = vld [vmem:[#allocation5 + $0x158] sm:$0xff]
    %v473 = vld [vmem:[#allocation5 + $0x160] sm:$0xff]
    %v474 = vld [vmem:[#allocation5 + $0x168] sm:$0xff]
    %v475 = vld [vmem:[#allocation5 + $0x170] sm:$0xff]
    %v476 = vld [vmem:[#allocation5 + $0x178] sm:$0xff]
    %v477 = vld [vmem:[#allocation5 + $0x180] sm:$0xff]
    %v478 = vld [vmem:[#allocation5 + $0x188] sm:$0xff]
    %v479 = vld [vmem:[#allocation5 + $0x190] sm:$0xff]
    %v480 = vld [vmem:[#allocation5 + $0x198] sm:$0xff]
    %v481 = vld [vmem:[#allocation5 + $0x1a0] sm:$0xff]
    %v482 = vld [vmem:[#allocation5 + $0x1a8] sm:$0xff]
    %v483 = vld [vmem:[#allocation5 + $0x1b0] sm:$0xff]
    %v484 = vld [vmem:[#allocation5 + $0x1b8] sm:$0xff]
    %v485 = vld [vmem:[#allocation5 + $0x1c0] sm:$0xff]
    %v486 = vld [vmem:[#allocation5 + $0x1c8] sm:$0xff]
    %v487 = vld [vmem:[#allocation5 + $0x1d0] sm:$0xff]
    %v488 = vld [vmem:[#allocation5 + $0x1d8] sm:$0xff]
    %v489 = vld [vmem:[#allocation5 + $0x1e0] sm:$0xff]
    %v490 = vld [vmem:[#allocation5 + $0x1e8] sm:$0xff]
    %v491 = vld [vmem:[#allocation5 + $0x1f0] sm:$0xff]
    %v492 = vld [vmem:[#allocation5 + $0x1f8] sm:$0xff]
    %v493 = vld [vmem:[#allocation5 + $0x200] sm:$0xff]
    %v494 = vld [vmem:[#allocation5 + $0x208] sm:$0xff]
    %v495 = vld [vmem:[#allocation5 + $0x210] sm:$0xff]
    %v496 = vld [vmem:[#allocation5 + $0x218] sm:$0xff]
    %v497 = vld [vmem:[#allocation5 + $0x220] sm:$0xff]
    %v498 = vld [vmem:[#allocation5 + $0x228] sm:$0xff]
    %v499 = vld [vmem:[#allocation5 + $0x230] sm:$0xff]
    %v500 = vld [vmem:[#allocation5 + $0x238] sm:$0xff]
    %v501 = vld [vmem:[#allocation5 + $0x240] sm:$0xff]
    %v502 = vld [vmem:[#allocation5 + $0x248] sm:$0xff]
    %v503 = vld [vmem:[#allocation5 + $0x250] sm:$0xff]
    %v504 = vld [vmem:[#allocation5 + $0x258] sm:$0xff]
    %v505 = vld [vmem:[#allocation5 + $0x260] sm:$0xff]
    %v506 = vld [vmem:[#allocation5 + $0x268] sm:$0xff]
    %v507 = vld [vmem:[#allocation5 + $0x270] sm:$0xff]
    %v508 = vld [vmem:[#allocation5 + $0x278] sm:$0xff]
    %v509 = vld [vmem:[#allocation5 + $0x280] sm:$0xff]
    %v510 = vld [vmem:[#allocation5 + $0x288] sm:$0xff]
    %v511 = vld [vmem:[#allocation5 + $0x290] sm:$0xff]
    %v512 = vld [vmem:[#allocation5 + $0x298] sm:$0xff]
    %v513 = vld [vmem:[#allocation5 + $0x2a0] sm:$0xff]
    %v514 = vld [vmem:[#allocation5 + $0x2a8] sm:$0xff]
    %v515 = vld [vmem:[#allocation5 + $0x2b0] sm:$0xff]
    %v516 = vld [vmem:[#allocation5 + $0x2b8] sm:$0xff]
    %v517 = vld [vmem:[#allocation5 + $0x2c0] sm:$0xff]
    %v518 = vld [vmem:[#allocation5 + $0x2c8] sm:$0xff]
    %v519 = vld [vmem:[#allocation5 + $0x2d0] sm:$0xff]
    %v520 = vld [vmem:[#allocation5 + $0x2d8] sm:$0xff]
    %v521 = vld [vmem:[#allocation5 + $0x2e0] sm:$0xff]
    %v522 = vld [vmem:[#allocation5 + $0x2e8] sm:$0xff]
    %v523 = vld [vmem:[#allocation5 + $0x2f0] sm:$0xff]
    %v524 = vld [vmem:[#allocation5 + $0x2f8] sm:$0xff]
    %v525 = vld [vmem:[#allocation5 + $0x300] sm:$0xff]
    %v526 = vld [vmem:[#allocation5 + $0x308] sm:$0xff]
    %v527 = vld [vmem:[#allocation5 + $0x310] sm:$0xff]
    %v528 = vld [vmem:[#allocation5 + $0x318] sm:$0xff]
    %v529 = vld [vmem:[#allocation5 + $0x320] sm:$0xff]
    %v530 = vld [vmem:[#allocation5 + $0x328] sm:$0xff]
    %v531 = vld [vmem:[#allocation5 + $0x330] sm:$0xff]
    %v532 = vld [vmem:[#allocation5 + $0x338] sm:$0xff]
    %v533 = vld [vmem:[#allocation5 + $0x340] sm:$0xff]
    %v534 = vld [vmem:[#allocation5 + $0x348] sm:$0xff]
    %v535 = vld [vmem:[#allocation5 + $0x350] sm:$0xff]
    %v536 = vld [vmem:[#allocation5 + $0x358] sm:$0xff]
    %v537 = vld [vmem:[#allocation5 + $0x360] sm:$0xff]
    %v538 = vld [vmem:[#allocation5 + $0x368] sm:$0xff]
    %v539 = vld [vmem:[#allocation5 + $0x370] sm:$0xff]
    %v540 = vld [vmem:[#allocation5 + $0x378] sm:$0xff]
    %v541 = vld [vmem:[#allocation5 + $0x380] sm:$0xff]
    %v542 = vld [vmem:[#allocation5 + $0x388] sm:$0xff]
    %v543 = vld [vmem:[#allocation5 + $0x390] sm:$0xff]
    %v544 = vld [vmem:[#allocation5 + $0x398] sm:$0xff]
    %v545 = vld [vmem:[#allocation5 + $0x3a0] sm:$0xff]
    %v546 = vld [vmem:[#allocation5 + $0x3a8] sm:$0xff]
    %v547 = vld [vmem:[#allocation5 + $0x3b0] sm:$0xff]
    %v548 = vld [vmem:[#allocation5 + $0x3b8] sm:$0xff]
    %v549 = vld [vmem:[#allocation5 + $0x3c0] sm:$0xff]
    %v550 = vld [vmem:[#allocation5 + $0x3c8] sm:$0xff]
    %v551 = vld [vmem:[#allocation5 + $0x3d0] sm:$0xff]
    %v552 = vld [vmem:[#allocation5 + $0x3d8] sm:$0xff]
    %v553 = vld [vmem:[#allocation5 + $0x3e0] sm:$0xff]
    %v554 = vld [vmem:[#allocation5 + $0x3e8] sm:$0xff]
    %v555 = vld [vmem:[#allocation5 + $0x3f0] sm:$0xff]
    %v556 = vld [vmem:[#allocation5 + $0x3f8] sm:$0xff]
    %v557 = vld [vmem:[#allocation5 + $0x400] sm:$0xff]
    %v558 = vld [vmem:[#allocation5 + $0x408] sm:$0xff]
    %v559 = vld [vmem:[#allocation5 + $0x410] sm:$0xff]
    %v560 = vld [vmem:[#allocation5 + $0x418] sm:$0xff]
    %v561 = vld [vmem:[#allocation5 + $0x420] sm:$0xff]
    %v562 = vld [vmem:[#allocation5 + $0x428] sm:$0xff]
    %v563 = vld [vmem:[#allocation5 + $0x430] sm:$0xff]
    %v564 = vld [vmem:[#allocation5 + $0x438] sm:$0xff]
    %v565 = vld [vmem:[#allocation5 + $0x440] sm:$0xff]
    %v566 = vld [vmem:[#allocation5 + $0x448] sm:$0xff]
    %v567 = vld [vmem:[#allocation5 + $0x450] sm:$0xff]
    %v568 = vld [vmem:[#allocation5 + $0x458] sm:$0xff]
    %v569 = vld [vmem:[#allocation5 + $0x460] sm:$0xff]
    %v570 = vld [vmem:[#allocation5 + $0x468] sm:$0xff]
    %v571 = vld [vmem:[#allocation5 + $0x470] sm:$0xff]
    %v572 = vld [vmem:[#allocation5 + $0x478] sm:$0xff]
    %v573 = vld [vmem:[#allocation5 + $0x480] sm:$0xff]
    %v574 = vld [vmem:[#allocation5 + $0x488] sm:$0xff]
    %v575 = vld [vmem:[#allocation5 + $0x490] sm:$0xff]
    %v576 = vld [vmem:[#allocation5 + $0x498] sm:$0xff]
    %v577 = vld [vmem:[#allocation5 + $0x4a0] sm:$0xff]
    %v578 = vld [vmem:[#allocation5 + $0x4a8] sm:$0xff]
    %v579 = vld [vmem:[#allocation5 + $0x4b0] sm:$0xff]
    %v580 = vld [vmem:[#allocation5 + $0x4b8] sm:$0xff]
    %v581 = vld [vmem:[#allocation5 + $0x4c0] sm:$0xff]
    %v582 = vld [vmem:[#allocation5 + $0x4c8] sm:$0xff]
    %v583 = vld [vmem:[#allocation5 + $0x4d0] sm:$0xff]
    %v584 = vld [vmem:[#allocation5 + $0x4d8] sm:$0xff]
    %v585 = vld [vmem:[#allocation5 + $0x4e0] sm:$0xff]
    %v586 = vld [vmem:[#allocation5 + $0x4e8] sm:$0xff]
    %v587 = vld [vmem:[#allocation5 + $0x4f0] sm:$0xff]
    %v588 = vld [vmem:[#allocation5 + $0x4f8] sm:$0xff]
    %v589 = vld [vmem:[#allocation5 + $0x500] sm:$0xff]
    %v590 = vld [vmem:[#allocation5 + $0x508] sm:$0xff]
    %v591 = vld [vmem:[#allocation5 + $0x510] sm:$0xff]
    %v592 = vld [vmem:[#allocation5 + $0x518] sm:$0xff]
    %v593 = vld [vmem:[#allocation5 + $0x520] sm:$0xff]
    %v594 = vld [vmem:[#allocation5 + $0x528] sm:$0xff]
    %v595 = vld [vmem:[#allocation5 + $0x530] sm:$0xff]
    %v596 = vld [vmem:[#allocation5 + $0x538] sm:$0xff]
    %v597 = vld [vmem:[#allocation5 + $0x540] sm:$0xff]
    %v598 = vld [vmem:[#allocation5 + $0x548] sm:$0xff]
    %v599 = vld [vmem:[#allocation5 + $0x550] sm:$0xff]
    %v600 = vld [vmem:[#allocation5 + $0x558] sm:$0xff]
    %v601 = vld [vmem:[#allocation5 + $0x560] sm:$0xff]
    %v602 = vld [vmem:[#allocation5 + $0x568] sm:$0xff]
    %v603 = vld [vmem:[#allocation5 + $0x570] sm:$0xff]
    %v604 = vld [vmem:[#allocation5 + $0x578] sm:$0xff]
    %v605 = vld [vmem:[#allocation5 + $0x580] sm:$0xff]
    %v606 = vld [vmem:[#allocation5 + $0x588] sm:$0xff]
    %v607 = vld [vmem:[#allocation5 + $0x590] sm:$0xff]
    %v608 = vld [vmem:[#allocation5 + $0x598] sm:$0xff]
    %v609 = vld [vmem:[#allocation5 + $0x5a0] sm:$0xff]
    %v610 = vld [vmem:[#allocation5 + $0x5a8] sm:$0xff]
    %v611 = vld [vmem:[#allocation5 + $0x5b0] sm:$0xff]
    %v612 = vld [vmem:[#allocation5 + $0x5b8] sm:$0xff]
    %v613 = vld [vmem:[#allocation5 + $0x5c0] sm:$0xff]
    %v614 = vld [vmem:[#allocation5 + $0x5c8] sm:$0xff]
    %v615 = vld [vmem:[#allocation5 + $0x5d0] sm:$0xff]
    %v616 = vld [vmem:[#allocation5 + $0x5d8] sm:$0xff]
    %v617 = vld [vmem:[#allocation5 + $0x5e0] sm:$0xff]
    %v618 = vld [vmem:[#allocation5 + $0x5e8] sm:$0xff]
    %v619 = vld [vmem:[#allocation5 + $0x5f0] sm:$0xff]
    %v620 = vld [vmem:[#allocation5 + $0x5f8] sm:$0xff]
    %v621 = vld [vmem:[#allocation5 + $0x600] sm:$0xff]
    %v622 = vld [vmem:[#allocation5 + $0x608] sm:$0xff]
    %v623 = vld [vmem:[#allocation5 + $0x610] sm:$0xff]
    %v624 = vld [vmem:[#allocation5 + $0x618] sm:$0xff]
    %v625 = vld [vmem:[#allocation5 + $0x620] sm:$0xff]
    %v626 = vld [vmem:[#allocation5 + $0x628] sm:$0xff]
    %v627 = vld [vmem:[#allocation5 + $0x630] sm:$0xff]
    %v628 = vld [vmem:[#allocation5 + $0x638] sm:$0xff]
    %v629 = vld [vmem:[#allocation5 + $0x640] sm:$0xff]
    %v630 = vld [vmem:[#allocation5 + $0x648] sm:$0xff]
    %v631 = vld [vmem:[#allocation5 + $0x650] sm:$0xff]
    %v632 = vld [vmem:[#allocation5 + $0x658] sm:$0xff]
    %v633 = vld [vmem:[#allocation5 + $0x660] sm:$0xff]
    %v634 = vld [vmem:[#allocation5 + $0x668] sm:$0xff]
    %v635 = vld [vmem:[#allocation5 + $0x670] sm:$0xff]
    %v636 = vld [vmem:[#allocation5 + $0x678] sm:$0xff]
    %v637 = vld [vmem:[#allocation5 + $0x680] sm:$0xff]
    %v638 = vld [vmem:[#allocation5 + $0x688] sm:$0xff]
    %v639 = vld [vmem:[#allocation5 + $0x690] sm:$0xff]
    %v640 = vld [vmem:[#allocation5 + $0x698] sm:$0xff]
    %v641 = vld [vmem:[#allocation5 + $0x6a0] sm:$0xff]
    %v642 = vld [vmem:[#allocation5 + $0x6a8] sm:$0xff]
    %v643 = vld [vmem:[#allocation5 + $0x6b0] sm:$0xff]
    %v644 = vld [vmem:[#allocation5 + $0x6b8] sm:$0xff]
    %v645 = vld [vmem:[#allocation5 + $0x6c0] sm:$0xff]
    %v646 = vld [vmem:[#allocation5 + $0x6c8] sm:$0xff]
    %v647 = vld [vmem:[#allocation5 + $0x6d0] sm:$0xff]
    %v648 = vld [vmem:[#allocation5 + $0x6d8] sm:$0xff]
    %v649 = vld [vmem:[#allocation5 + $0x6e0] sm:$0xff]
    %v650 = vld [vmem:[#allocation5 + $0x6e8] sm:$0xff]
    %v651 = vld [vmem:[#allocation5 + $0x6f0] sm:$0xff]
    %v652 = vld [vmem:[#allocation5 + $0x6f8] sm:$0xff]
    %v653 = vld [vmem:[#allocation5 + $0x700] sm:$0xff]
    %v654 = vld [vmem:[#allocation5 + $0x708] sm:$0xff]
    %v655 = vld [vmem:[#allocation5 + $0x710] sm:$0xff]
    %v656 = vld [vmem:[#allocation5 + $0x718] sm:$0xff]
    %v657 = vld [vmem:[#allocation5 + $0x720] sm:$0xff]
    %v658 = vld [vmem:[#allocation5 + $0x728] sm:$0xff]
    %v659 = vld [vmem:[#allocation5 + $0x730] sm:$0xff]
    %v660 = vld [vmem:[#allocation5 + $0x738] sm:$0xff]
    %v661 = vld [vmem:[#allocation5 + $0x740] sm:$0xff]
    %v662 = vld [vmem:[#allocation5 + $0x748] sm:$0xff]
    %v663 = vld [vmem:[#allocation5 + $0x750] sm:$0xff]
    %v664 = vld [vmem:[#allocation5 + $0x758] sm:$0xff]
    %v665 = vld [vmem:[#allocation5 + $0x760] sm:$0xff]
    %v666 = vld [vmem:[#allocation5 + $0x768] sm:$0xff]
    %v667 = vld [vmem:[#allocation5 + $0x770] sm:$0xff]
    %v668 = vld [vmem:[#allocation5 + $0x778] sm:$0xff]
    %v669 = vld [vmem:[#allocation5 + $0x780] sm:$0xff]
    %v670 = vld [vmem:[#allocation5 + $0x788] sm:$0xff]
    %v671 = vld [vmem:[#allocation5 + $0x790] sm:$0xff]
    %v672 = vld [vmem:[#allocation5 + $0x798] sm:$0xff]
    %v673 = vld [vmem:[#allocation5 + $0x7a0] sm:$0xff]
    %v674 = vld [vmem:[#allocation5 + $0x7a8] sm:$0xff]
    %v675 = vld [vmem:[#allocation5 + $0x7b0] sm:$0xff]
    %v676 = vld [vmem:[#allocation5 + $0x7b8] sm:$0xff]
    %v677 = vld [vmem:[#allocation5 + $0x7c0] sm:$0xff]
    %v678 = vld [vmem:[#allocation5 + $0x7c8] sm:$0xff]
    %v679 = vld [vmem:[#allocation5 + $0x7d0] sm:$0xff]
    %v680 = vld [vmem:[#allocation5 + $0x7d8] sm:$0xff]
    %v681 = vld [vmem:[#allocation5 + $0x7e0] sm:$0xff]
    %v682 = vld [vmem:[#allocation5 + $0x7e8] sm:$0xff]
    %v683 = vld [vmem:[#allocation5 + $0x7f0] sm:$0xff]
    %v684 = vld [vmem:[#allocation5 + $0x7f8] sm:$0xff]
    %v685 = vld [vmem:[#allocation5 + $0x800] sm:$0xff]
    %v686 = vld [vmem:[#allocation5 + $0x808] sm:$0xff]
    %v687 = vld [vmem:[#allocation5 + $0x810] sm:$0xff]
    %v688 = vld [vmem:[#allocation5 + $0x818] sm:$0xff]
    %v689 = vld [vmem:[#allocation5 + $0x820] sm:$0xff]
    %v690 = vld [vmem:[#allocation5 + $0x828] sm:$0xff]
    %v691 = vld [vmem:[#allocation5 + $0x830] sm:$0xff]
    %v692 = vld [vmem:[#allocation5 + $0x838] sm:$0xff]
    %v693 = vld [vmem:[#allocation5 + $0x840] sm:$0xff]
    %v694 = vld [vmem:[#allocation5 + $0x848] sm:$0xff]
    %v695 = vld [vmem:[#allocation5 + $0x850] sm:$0xff]
    %v696 = vld [vmem:[#allocation5 + $0x858] sm:$0xff]
    %v697 = vld [vmem:[#allocation5 + $0x860] sm:$0xff]
    %v698 = vld [vmem:[#allocation5 + $0x868] sm:$0xff]
    %v699 = vld [vmem:[#allocation5 + $0x870] sm:$0xff]
    %v700 = vld [vmem:[#allocation5 + $0x878] sm:$0xff]
    %v701 = vld [vmem:[#allocation5 + $0x880] sm:$0xff]
    %v702 = vld [vmem:[#allocation5 + $0x888] sm:$0xff]
    %v703 = vld [vmem:[#allocation5 + $0x890] sm:$0xff]
    %v704 = vld [vmem:[#allocation5 + $0x898] sm:$0xff]
    %v705 = vld [vmem:[#allocation5 + $0x8a0] sm:$0xff]
    %v706 = vld [vmem:[#allocation5 + $0x8a8] sm:$0xff]
    %v707 = vld [vmem:[#allocation5 + $0x8b0] sm:$0xff]
    %v708 = vld [vmem:[#allocation5 + $0x8b8] sm:$0xff]
    %v709 = vld [vmem:[#allocation5 + $0x8c0] sm:$0xff]
    %v710 = vld [vmem:[#allocation5 + $0x8c8] sm:$0xff]
    %v711 = vld [vmem:[#allocation5 + $0x8d0] sm:$0xff]
    %v712 = vld [vmem:[#allocation5 + $0x8d8] sm:$0xff]
    %v713 = vld [vmem:[#allocation5 + $0x8e0] sm:$0xff]
    %v714 = vld [vmem:[#allocation5 + $0x8e8] sm:$0xff]
    %v715 = vld [vmem:[#allocation5 + $0x8f0] sm:$0xff]
    %v716 = vld [vmem:[#allocation5 + $0x8f8] sm:$0xff]
    %v717 = vld [vmem:[#allocation5 + $0x900] sm:$0xff]
    %v718 = vld [vmem:[#allocation5 + $0x908] sm:$0xff]
    %v719 = vld [vmem:[#allocation5 + $0x910] sm:$0xff]
    %v720 = vld [vmem:[#allocation5 + $0x918] sm:$0xff]
    %v721 = vld [vmem:[#allocation5 + $0x920] sm:$0xff]
    %v722 = vld [vmem:[#allocation5 + $0x928] sm:$0xff]
    %v723 = vld [vmem:[#allocation5 + $0x930] sm:$0xff]
    %v724 = vld [vmem:[#allocation5 + $0x938] sm:$0xff]
    %v725 = vld [vmem:[#allocation5 + $0x940] sm:$0xff]
    %v726 = vld [vmem:[#allocation5 + $0x948] sm:$0xff]
    %v727 = vld [vmem:[#allocation5 + $0x950] sm:$0xff]
    %v728 = vld [vmem:[#allocation5 + $0x958] sm:$0xff]
    %v729 = vld [vmem:[#allocation5 + $0x960] sm:$0xff]
    %v730 = vld [vmem:[#allocation5 + $0x968] sm:$0xff]
    %v731 = vld [vmem:[#allocation5 + $0x970] sm:$0xff]
    %v732 = vld [vmem:[#allocation5 + $0x978] sm:$0xff]
    %v733 = vld [vmem:[#allocation5 + $0x980] sm:$0xff]
    %v734 = vld [vmem:[#allocation5 + $0x988] sm:$0xff]
    %v735 = vld [vmem:[#allocation5 + $0x990] sm:$0xff]
    %v736 = vld [vmem:[#allocation5 + $0x998] sm:$0xff]
    %v737 = vld [vmem:[#allocation5 + $0x9a0] sm:$0xff]
    %v738 = vld [vmem:[#allocation5 + $0x9a8] sm:$0xff]
    %v739 = vld [vmem:[#allocation5 + $0x9b0] sm:$0xff]
    %v740 = vld [vmem:[#allocation5 + $0x9b8] sm:$0xff]
    %v741 = vld [vmem:[#allocation5 + $0x9c0] sm:$0xff]
    %v742 = vld [vmem:[#allocation5 + $0x9c8] sm:$0xff]
    %v743 = vld [vmem:[#allocation5 + $0x9d0] sm:$0xff]
    %v744 = vld [vmem:[#allocation5 + $0x9d8] sm:$0xff]
    %v745 = vld [vmem:[#allocation5 + $0x9e0] sm:$0xff]
    %v746 = vld [vmem:[#allocation5 + $0x9e8] sm:$0xff]
    %v747 = vld [vmem:[#allocation5 + $0x9f0] sm:$0xff]
    %v748 = vld [vmem:[#allocation5 + $0x9f8] sm:$0xff]
    %v749 = vld [vmem:[#allocation5 + $0xa00] sm:$0xff]
    %v750 = vld [vmem:[#allocation5 + $0xa08] sm:$0xff]
    %v751 = vld [vmem:[#allocation5 + $0xa10] sm:$0xff]
    %v752 = vld [vmem:[#allocation5 + $0xa18] sm:$0xff]
    %v753 = vld [vmem:[#allocation5 + $0xa20] sm:$0xff]
    %v754 = vld [vmem:[#allocation5 + $0xa28] sm:$0xff]
    %v755 = vld [vmem:[#allocation5 + $0xa30] sm:$0xff]
    %v756 = vld [vmem:[#allocation5 + $0xa38] sm:$0xff]
    %v757 = vld [vmem:[#allocation5 + $0xa40] sm:$0xff]
    %v758 = vld [vmem:[#allocation5 + $0xa48] sm:$0xff]
    %v759 = vld [vmem:[#allocation5 + $0xa50] sm:$0xff]
    %v760 = vld [vmem:[#allocation5 + $0xa58] sm:$0xff]
    %v761 = vld [vmem:[#allocation5 + $0xa60] sm:$0xff]
    %v762 = vld [vmem:[#allocation5 + $0xa68] sm:$0xff]
    %v763 = vld [vmem:[#allocation5 + $0xa70] sm:$0xff]
    %v764 = vld [vmem:[#allocation5 + $0xa78] sm:$0xff]
    %v765 = vld [vmem:[#allocation5 + $0xa80] sm:$0xff]
    %v766 = vld [vmem:[#allocation5 + $0xa88] sm:$0xff]
    %v767 = vld [vmem:[#allocation5 + $0xa90] sm:$0xff]
    %v768 = vld [vmem:[#allocation5 + $0xa98] sm:$0xff]
    %v769 = vld [vmem:[#allocation5 + $0xaa0] sm:$0xff]
    %v770 = vld [vmem:[#allocation5 + $0xaa8] sm:$0xff]
    %v771 = vld [vmem:[#allocation5 + $0xab0] sm:$0xff]
    %v772 = vld [vmem:[#allocation5 + $0xab8] sm:$0xff]
    %v773 = vld [vmem:[#allocation5 + $0xac0] sm:$0xff]
    %v774 = vld [vmem:[#allocation5 + $0xac8] sm:$0xff]
    %v775 = vld [vmem:[#allocation5 + $0xad0] sm:$0xff]
    %v776 = vld [vmem:[#allocation5 + $0xad8] sm:$0xff]
    %v777 = vld [vmem:[#allocation5 + $0xae0] sm:$0xff]
    %v778 = vld [vmem:[#allocation5 + $0xae8] sm:$0xff]
    %v779 = vld [vmem:[#allocation5 + $0xaf0] sm:$0xff]
    %v780 = vld [vmem:[#allocation5 + $0xaf8] sm:$0xff]
    %v781 = vld [vmem:[#allocation5 + $0xb00] sm:$0xff]
    %v782 = vld [vmem:[#allocation5 + $0xb08] sm:$0xff]
    %v783 = vld [vmem:[#allocation5 + $0xb10] sm:$0xff]
    %v784 = vld [vmem:[#allocation5 + $0xb18] sm:$0xff]
    %v785 = vld [vmem:[#allocation5 + $0xb20] sm:$0xff]
    %v786 = vld [vmem:[#allocation5 + $0xb28] sm:$0xff]
    %v787 = vld [vmem:[#allocation5 + $0xb30] sm:$0xff]
    %v788 = vld [vmem:[#allocation5 + $0xb38] sm:$0xff]
    %v789 = vld [vmem:[#allocation5 + $0xb40] sm:$0xff]
    %v790 = vld [vmem:[#allocation5 + $0xb48] sm:$0xff]
    %v791 = vld [vmem:[#allocation5 + $0xb50] sm:$0xff]
    %v792 = vld [vmem:[#allocation5 + $0xb58] sm:$0xff]
    %v793 = vld [vmem:[#allocation5 + $0xb60] sm:$0xff]
    %v794 = vld [vmem:[#allocation5 + $0xb68] sm:$0xff]
    %v795 = vld [vmem:[#allocation5 + $0xb70] sm:$0xff]
    %v796 = vld [vmem:[#allocation5 + $0xb78] sm:$0xff]
    %v797 = vld [vmem:[#allocation5 + $0xb80] sm:$0xff]
    %v798 = vld [vmem:[#allocation5 + $0xb88] sm:$0xff]
    %v799 = vld [vmem:[#allocation5 + $0xb90] sm:$0xff]
    %v800 = vld [vmem:[#allocation5 + $0xb98] sm:$0xff]
    %v801 = vld [vmem:[#allocation5 + $0xba0] sm:$0xff]
    %v802 = vld [vmem:[#allocation5 + $0xba8] sm:$0xff]
    %v803 = vld [vmem:[#allocation5 + $0xbb0] sm:$0xff]
    %v804 = vld [vmem:[#allocation5 + $0xbb8] sm:$0xff]
    %v805 = vld [vmem:[#allocation5 + $0xbc0] sm:$0xff]
    %v806 = vld [vmem:[#allocation5 + $0xbc8] sm:$0xff]
    %v807 = vld [vmem:[#allocation5 + $0xbd0] sm:$0xff]
    %v808 = vld [vmem:[#allocation5 + $0xbd8] sm:$0xff]
    %v809 = vld [vmem:[#allocation5 + $0xbe0] sm:$0xff]
    %v810 = vld [vmem:[#allocation5 + $0xbe8] sm:$0xff]
    %v811 = vld [vmem:[#allocation5 + $0xbf0] sm:$0xff]
    %v812 = vld [vmem:[#allocation5 + $0xbf8] sm:$0xff]
    %v813 = vld [vmem:[#allocation5 + $0xc00] sm:$0xff]
    %v814 = vld [vmem:[#allocation5 + $0xc08] sm:$0xff]
    %v815 = vld [vmem:[#allocation5 + $0xc10] sm:$0xff]
    %v816 = vld [vmem:[#allocation5 + $0xc18] sm:$0xff]
    %v817 = vld [vmem:[#allocation5 + $0xc20] sm:$0xff]
    %v818 = vld [vmem:[#allocation5 + $0xc28] sm:$0xff]
    %v819 = vld [vmem:[#allocation5 + $0xc30] sm:$0xff]
    %v820 = vld [vmem:[#allocation5 + $0xc38] sm:$0xff]
    %v821 = vld [vmem:[#allocation5 + $0xc40] sm:$0xff]
    %v822 = vld [vmem:[#allocation5 + $0xc48] sm:$0xff]
    %v823 = vld [vmem:[#allocation5 + $0xc50] sm:$0xff]
    %v824 = vld [vmem:[#allocation5 + $0xc58] sm:$0xff]
    %v825 = vld [vmem:[#allocation5 + $0xc60] sm:$0xff]
    %v826 = vld [vmem:[#allocation5 + $0xc68] sm:$0xff]
    %v827 = vld [vmem:[#allocation5 + $0xc70] sm:$0xff]
    %v828 = vld [vmem:[#allocation5 + $0xc78] sm:$0xff]
    %v829 = vld [vmem:[#allocation5 + $0xc80] sm:$0xff]
    %v830 = vld [vmem:[#allocation5 + $0xc88] sm:$0xff]
    %v831 = vld [vmem:[#allocation5 + $0xc90] sm:$0xff]
    %v832 = vld [vmem:[#allocation5 + $0xc98] sm:$0xff]
    %v833 = vld [vmem:[#allocation5 + $0xca0] sm:$0xff]
    %v834 = vld [vmem:[#allocation5 + $0xca8] sm:$0xff]
    %v835 = vld [vmem:[#allocation5 + $0xcb0] sm:$0xff]
    %v836 = vld [vmem:[#allocation5 + $0xcb8] sm:$0xff]
    %v837 = vld [vmem:[#allocation5 + $0xcc0] sm:$0xff]
    %v838 = vld [vmem:[#allocation5 + $0xcc8] sm:$0xff]
    %v839 = vld [vmem:[#allocation5 + $0xcd0] sm:$0xff]
    %v840 = vld [vmem:[#allocation5 + $0xcd8] sm:$0xff]
    %v841 = vld [vmem:[#allocation5 + $0xce0] sm:$0xff]
    %v842 = vld [vmem:[#allocation5 + $0xce8] sm:$0xff]
    %v843 = vld [vmem:[#allocation5 + $0xcf0] sm:$0xff]
    %v844 = vld [vmem:[#allocation5 + $0xcf8] sm:$0xff]
    %v845 = vld [vmem:[#allocation5 + $0xd00] sm:$0xff]
    %v846 = vld [vmem:[#allocation5 + $0xd08] sm:$0xff]
    %v847 = vld [vmem:[#allocation5 + $0xd10] sm:$0xff]
    %v848 = vld [vmem:[#allocation5 + $0xd18] sm:$0xff]
    %v849 = vld [vmem:[#allocation5 + $0xd20] sm:$0xff]
    %v850 = vld [vmem:[#allocation5 + $0xd28] sm:$0xff]
    %v851 = vld [vmem:[#allocation5 + $0xd30] sm:$0xff]
    %v852 = vld [vmem:[#allocation5 + $0xd38] sm:$0xff]
    %v853 = vld [vmem:[#allocation5 + $0xd40] sm:$0xff]
    %v854 = vld [vmem:[#allocation5 + $0xd48] sm:$0xff]
    %v855 = vld [vmem:[#allocation5 + $0xd50] sm:$0xff]
    %v856 = vld [vmem:[#allocation5 + $0xd58] sm:$0xff]
    %v857 = vld [vmem:[#allocation5 + $0xd60] sm:$0xff]
    %v858 = vld [vmem:[#allocation5 + $0xd68] sm:$0xff]
    %v859 = vld [vmem:[#allocation5 + $0xd70] sm:$0xff]
    %v860 = vld [vmem:[#allocation5 + $0xd78] sm:$0xff]
    %v861 = vld [vmem:[#allocation5 + $0xd80] sm:$0xff]
    %v862 = vld [vmem:[#allocation5 + $0xd88] sm:$0xff]
    %v863 = vld [vmem:[#allocation5 + $0xd90] sm:$0xff]
    %v864 = vld [vmem:[#allocation5 + $0xd98] sm:$0xff]
    %v865 = vld [vmem:[#allocation5 + $0xda0] sm:$0xff]
    %v866 = vld [vmem:[#allocation5 + $0xda8] sm:$0xff]
    %v867 = vld [vmem:[#allocation5 + $0xdb0] sm:$0xff]
    %v868 = vld [vmem:[#allocation5 + $0xdb8] sm:$0xff]
    %v869 = vld [vmem:[#allocation5 + $0xdc0] sm:$0xff]
    %v870 = vld [vmem:[#allocation5 + $0xdc8] sm:$0xff]
    %v871 = vld [vmem:[#allocation5 + $0xdd0] sm:$0xff]
    %v872 = vld [vmem:[#allocation5 + $0xdd8] sm:$0xff]
    %v873 = vld [vmem:[#allocation5 + $0xde0] sm:$0xff]
    %v874 = vld [vmem:[#allocation5 + $0xde8] sm:$0xff]
    %v875 = vld [vmem:[#allocation5 + $0xdf0] sm:$0xff]
    %v876 = vld [vmem:[#allocation5 + $0xdf8] sm:$0xff]
    %v877 = vld [vmem:[#allocation5 + $0xe00] sm:$0xff]
    %v878 = vld [vmem:[#allocation5 + $0xe08] sm:$0xff]
    %v879 = vld [vmem:[#allocation5 + $0xe10] sm:$0xff]
    %v880 = vld [vmem:[#allocation5 + $0xe18] sm:$0xff]
    %v881 = vld [vmem:[#allocation5 + $0xe20] sm:$0xff]
    %v882 = vld [vmem:[#allocation5 + $0xe28] sm:$0xff]
    %v883 = vld [vmem:[#allocation5 + $0xe30] sm:$0xff]
    %v884 = vld [vmem:[#allocation5 + $0xe38] sm:$0xff]
    %v885 = vld [vmem:[#allocation5 + $0xe40] sm:$0xff]
    %v886 = vld [vmem:[#allocation5 + $0xe48] sm:$0xff]
    %v887 = vld [vmem:[#allocation5 + $0xe50] sm:$0xff]
    %v888 = vld [vmem:[#allocation5 + $0xe58] sm:$0xff]
    %v889 = vld [vmem:[#allocation5 + $0xe60] sm:$0xff]
    %v890 = vld [vmem:[#allocation5 + $0xe68] sm:$0xff]
    %v891 = vld [vmem:[#allocation5 + $0xe70] sm:$0xff]
    %v892 = vld [vmem:[#allocation5 + $0xe78] sm:$0xff]
    %v893 = vld [vmem:[#allocation5 + $0xe80] sm:$0xff]
    %v894 = vld [vmem:[#allocation5 + $0xe88] sm:$0xff]
    %v895 = vld [vmem:[#allocation5 + $0xe90] sm:$0xff]
    %v896 = vld [vmem:[#allocation5 + $0xe98] sm:$0xff]
    %v897 = vld [vmem:[#allocation5 + $0xea0] sm:$0xff]
    %v898 = vld [vmem:[#allocation5 + $0xea8] sm:$0xff]
    %v899 = vld [vmem:[#allocation5 + $0xeb0] sm:$0xff]
    %v900 = vld [vmem:[#allocation5 + $0xeb8] sm:$0xff]
    %v901 = vld [vmem:[#allocation5 + $0xec0] sm:$0xff]
    %v902 = vld [vmem:[#allocation5 + $0xec8] sm:$0xff]
    %v903 = vld [vmem:[#allocation5 + $0xed0] sm:$0xff]
    %v904 = vld [vmem:[#allocation5 + $0xed8] sm:$0xff]
    %v905 = vld [vmem:[#allocation5 + $0xee0] sm:$0xff]
    %v906 = vld [vmem:[#allocation5 + $0xee8] sm:$0xff]
    %v907 = vld [vmem:[#allocation5 + $0xef0] sm:$0xff]
    %v908 = vld [vmem:[#allocation5 + $0xef8] sm:$0xff]
    %v909 = vld [vmem:[#allocation5 + $0xf00] sm:$0xff]
    %v910 = vld [vmem:[#allocation5 + $0xf08] sm:$0xff]
    %v911 = vld [vmem:[#allocation5 + $0xf10] sm:$0xff]
    %v912 = vld [vmem:[#allocation5 + $0xf18] sm:$0xff]
    %v913 = vld [vmem:[#allocation5 + $0xf20] sm:$0xff]
    %v914 = vld [vmem:[#allocation5 + $0xf28] sm:$0xff]
    %v915 = vld [vmem:[#allocation5 + $0xf30] sm:$0xff]
    %v916 = vld [vmem:[#allocation5 + $0xf38] sm:$0xff]
    %v917 = vld [vmem:[#allocation5 + $0xf40] sm:$0xff]
    %v918 = vld [vmem:[#allocation5 + $0xf48] sm:$0xff]
    %v919 = vld [vmem:[#allocation5 + $0xf50] sm:$0xff]
    %v920 = vld [vmem:[#allocation5 + $0xf58] sm:$0xff]
    %v921 = vld [vmem:[#allocation5 + $0xf60] sm:$0xff]
    %v922 = vld [vmem:[#allocation5 + $0xf68] sm:$0xff]
    %v923 = vld [vmem:[#allocation5 + $0xf70] sm:$0xff]
    %v924 = vld [vmem:[#allocation5 + $0xf78] sm:$0xff]
    %v925 = vld [vmem:[#allocation5 + $0xf80] sm:$0xff]
    %v926 = vld [vmem:[#allocation5 + $0xf88] sm:$0xff]
    %v927 = vld [vmem:[#allocation5 + $0xf90] sm:$0xff]
    %v928 = vld [vmem:[#allocation5 + $0xf98] sm:$0xff]
    %v929 = vld [vmem:[#allocation5 + $0xfa0] sm:$0xff]
    %v930 = vld [vmem:[#allocation5 + $0xfa8] sm:$0xff]
    %v931 = vld [vmem:[#allocation5 + $0xfb0] sm:$0xff]
    %v932 = vld [vmem:[#allocation5 + $0xfb8] sm:$0xff]
    %v933 = vld [vmem:[#allocation5 + $0xfc0] sm:$0xff]
    %v934 = vld [vmem:[#allocation5 + $0xfc8] sm:$0xff]
    %v935 = vld [vmem:[#allocation5 + $0xfd0] sm:$0xff]
    %v936 = vld [vmem:[#allocation5 + $0xfd8] sm:$0xff]
    %v937 = vld [vmem:[#allocation5 + $0xfe0] sm:$0xff]
    %v938 = vld [vmem:[#allocation5 + $0xfe8] sm:$0xff]
    %v939 = vld [vmem:[#allocation5 + $0xff0] sm:$0xff]
    %v940 = vld [vmem:[#allocation5 + $0xff8] sm:$0xff]
    %v941 = vld [vmem:[#allocation5 + $0x1000] sm:$0xff]
    %v942 = vld [vmem:[#allocation5 + $0x1008] sm:$0xff]
    %v943 = vld [vmem:[#allocation5 + $0x1010] sm:$0xff]
    %v944 = vld [vmem:[#allocation5 + $0x1018] sm:$0xff]
    %v945 = vld [vmem:[#allocation5 + $0x1020] sm:$0xff]
    %v946 = vld [vmem:[#allocation5 + $0x1028] sm:$0xff]
    %v947 = vld [vmem:[#allocation5 + $0x1030] sm:$0xff]
    %v948 = vld [vmem:[#allocation5 + $0x1038] sm:$0xff]
    %v949 = vld [vmem:[#allocation5 + $0x1040] sm:$0xff]
    %v950 = vld [vmem:[#allocation5 + $0x1048] sm:$0xff]
    %v951 = vld [vmem:[#allocation5 + $0x1050] sm:$0xff]
    %v952 = vld [vmem:[#allocation5 + $0x1058] sm:$0xff]
    %v953 = vld [vmem:[#allocation5 + $0x1060] sm:$0xff]
    %v954 = vld [vmem:[#allocation5 + $0x1068] sm:$0xff]
    %v955 = vld [vmem:[#allocation5 + $0x1070] sm:$0xff]
    %v956 = vld [vmem:[#allocation5 + $0x1078] sm:$0xff]
    %v957 = vld [vmem:[#allocation5 + $0x1080] sm:$0xff]
    %v958 = vld [vmem:[#allocation5 + $0x1088] sm:$0xff]
    %v959 = vld [vmem:[#allocation5 + $0x1090] sm:$0xff]
    %v960 = vld [vmem:[#allocation5 + $0x1098] sm:$0xff]
    %v961 = vld [vmem:[#allocation5 + $0x10a0] sm:$0xff]
    %v962 = vld [vmem:[#allocation5 + $0x10a8] sm:$0xff]
    %v963 = vld [vmem:[#allocation5 + $0x10b0] sm:$0xff]
    %v964 = vld [vmem:[#allocation5 + $0x10b8] sm:$0xff]
    %v965 = vld [vmem:[#allocation5 + $0x10c0] sm:$0xff]
    %v966 = vld [vmem:[#allocation5 + $0x10c8] sm:$0xff]
    %v967 = vld [vmem:[#allocation5 + $0x10d0] sm:$0xff]
    %v968 = vld [vmem:[#allocation5 + $0x10d8] sm:$0xff]
    %v969 = vld [vmem:[#allocation5 + $0x10e0] sm:$0xff]
    %v970 = vld [vmem:[#allocation5 + $0x10e8] sm:$0xff]
    %v971 = vld [vmem:[#allocation5 + $0x10f0] sm:$0xff]
    %v972 = vld [vmem:[#allocation5 + $0x10f8] sm:$0xff]
    %v973 = vld [vmem:[#allocation5 + $0x1100] sm:$0xff]
    %v974 = vld [vmem:[#allocation5 + $0x1108] sm:$0xff]
    %v975 = vld [vmem:[#allocation5 + $0x1110] sm:$0xff]
    %v976 = vld [vmem:[#allocation5 + $0x1118] sm:$0xff]
    %v977 = vld [vmem:[#allocation5 + $0x1120] sm:$0xff]
    %v978 = vld [vmem:[#allocation5 + $0x1128] sm:$0xff]
    %v979 = vld [vmem:[#allocation5 + $0x1130] sm:$0xff]
    %v980 = vld [vmem:[#allocation5 + $0x1138] sm:$0xff]
    %v981 = vld [vmem:[#allocation5 + $0x1140] sm:$0xff]
    %v982 = vld [vmem:[#allocation5 + $0x1148] sm:$0xff]
    %v983 = vld [vmem:[#allocation5 + $0x1150] sm:$0xff]
    %v984 = vld [vmem:[#allocation5 + $0x1158] sm:$0xff]
    %v985 = vld [vmem:[#allocation5 + $0x1160] sm:$0xff]
    %v986 = vld [vmem:[#allocation5 + $0x1168] sm:$0xff]
    %v987 = vld [vmem:[#allocation5 + $0x1170] sm:$0xff]
    %v988 = vld [vmem:[#allocation5 + $0x1178] sm:$0xff]
    %v989 = vld [vmem:[#allocation5 + $0x1180] sm:$0xff]
    %v990 = vld [vmem:[#allocation5 + $0x1188] sm:$0xff]
    %v991 = vld [vmem:[#allocation5 + $0x1190] sm:$0xff]
    %v992 = vld [vmem:[#allocation5 + $0x1198] sm:$0xff]
    %v993 = vld [vmem:[#allocation5 + $0x11a0] sm:$0xff]
    %v994 = vld [vmem:[#allocation5 + $0x11a8] sm:$0xff]
    %v995 = vld [vmem:[#allocation5 + $0x11b0] sm:$0xff]
    %v996 = vld [vmem:[#allocation5 + $0x11b8] sm:$0xff]
    %v997 = vld [vmem:[#allocation5 + $0x11c0] sm:$0xff]
    %v998 = vld [vmem:[#allocation5 + $0x11c8] sm:$0xff]
    %v999 = vld [vmem:[#allocation5 + $0x11d0] sm:$0xff]
    %v1000 = vld [vmem:[#allocation5 + $0x11d8] sm:$0xff]
    %v1001 = vld [vmem:[#allocation5 + $0x11e0] sm:$0xff]
    %v1002 = vld [vmem:[#allocation5 + $0x11e8] sm:$0xff]
    %v1003 = vld [vmem:[#allocation5 + $0x11f0] sm:$0xff]
    %v1004 = vld [vmem:[#allocation5 + $0x11f8] sm:$0xff]
    %v1005 = vld [vmem:[#allocation5 + $0x1200] sm:$0xff]
    %v1006 = vld [vmem:[#allocation5 + $0x1208] sm:$0xff]
    %v1007 = vld [vmem:[#allocation5 + $0x1210] sm:$0xff]
    %v1008 = vld [vmem:[#allocation5 + $0x1218] sm:$0xff]
    %v1009 = vld [vmem:[#allocation5 + $0x1220] sm:$0xff]
    %v1010 = vld [vmem:[#allocation5 + $0x1228] sm:$0xff]
    %v1011 = vld [vmem:[#allocation5 + $0x1230] sm:$0xff]
    %v1012 = vld [vmem:[#allocation5 + $0x1238] sm:$0xff]
    %v1013 = vld [vmem:[#allocation5 + $0x1240] sm:$0xff]
    %v1014 = vld [vmem:[#allocation5 + $0x1248] sm:$0xff]
    %v1015 = vld [vmem:[#allocation5 + $0x1250] sm:$0xff]
    %v1016 = vld [vmem:[#allocation5 + $0x1258] sm:$0xff]
    %v1017 = vld [vmem:[#allocation5 + $0x1260] sm:$0xff]
    %v1018 = vld [vmem:[#allocation5 + $0x1268] sm:$0xff]
    %v1019 = vld [vmem:[#allocation5 + $0x1270] sm:$0xff]
    %v1020 = vld [vmem:[#allocation5 + $0x1278] sm:$0xff]
    %v1021 = vld [vmem:[#allocation5 + $0x1280] sm:$0xff]
    %v1022 = vld [vmem:[#allocation5 + $0x1288] sm:$0xff]
    %v1023 = vld [vmem:[#allocation5 + $0x1290] sm:$0xff]
    %v1024 = vld [vmem:[#allocation5 + $0x1298] sm:$0xff]
    %v1025 = vld [vmem:[#allocation5 + $0x12a0] sm:$0xff]
    %v1026 = vld [vmem:[#allocation5 + $0x12a8] sm:$0xff]
    %v1027 = vld [vmem:[#allocation5 + $0x12b0] sm:$0xff]
    %v1028 = vld [vmem:[#allocation5 + $0x12b8] sm:$0xff]
    %v1029 = vld [vmem:[#allocation5 + $0x12c0] sm:$0xff]
    %v1030 = vld [vmem:[#allocation5 + $0x12c8] sm:$0xff]
    %v1031 = vld [vmem:[#allocation5 + $0x12d0] sm:$0xff]
    %v1032 = vld [vmem:[#allocation5 + $0x12d8] sm:$0xff]
    %v1033 = vld [vmem:[#allocation5 + $0x12e0] sm:$0xff]
    %v1034 = vld [vmem:[#allocation5 + $0x12e8] sm:$0xff]
    %v1035 = vld [vmem:[#allocation5 + $0x12f0] sm:$0xff]
    %v1036 = vld [vmem:[#allocation5 + $0x12f8] sm:$0xff]
    %v1037 = vld [vmem:[#allocation5 + $0x1300] sm:$0xff]
    %v1038 = vld [vmem:[#allocation5 + $0x1308] sm:$0xff]
    %v1039 = vld [vmem:[#allocation5 + $0x1310] sm:$0xff]
    %v1040 = vld [vmem:[#allocation5 + $0x1318] sm:$0xff]
    %v1041 = vld [vmem:[#allocation5 + $0x1320] sm:$0xff]
    %v1042 = vld [vmem:[#allocation5 + $0x1328] sm:$0xff]
    %v1043 = vld [vmem:[#allocation5 + $0x1330] sm:$0xff]
    %v1044 = vld [vmem:[#allocation5 + $0x1338] sm:$0xff]
    %v1045 = vld [vmem:[#allocation5 + $0x1340] sm:$0xff]
    %v1046 = vld [vmem:[#allocation5 + $0x1348] sm:$0xff]
    %v1047 = vld [vmem:[#allocation5 + $0x1350] sm:$0xff]
    %v1048 = vld [vmem:[#allocation5 + $0x1358] sm:$0xff]
    %v1049 = vld [vmem:[#allocation5 + $0x1360] sm:$0xff]
    %v1050 = vld [vmem:[#allocation5 + $0x1368] sm:$0xff]
    %v1051 = vld [vmem:[#allocation5 + $0x1370] sm:$0xff]
    %v1052 = vld [vmem:[#allocation5 + $0x1378] sm:$0xff]
    %v1053 = vld [vmem:[#allocation5 + $0x1380] sm:$0xff]
    %v1054 = vld [vmem:[#allocation5 + $0x1388] sm:$0xff]
    %v1055 = vld [vmem:[#allocation5 + $0x1390] sm:$0xff]
    %v1056 = vld [vmem:[#allocation5 + $0x1398] sm:$0xff]
    %v1057 = vld [vmem:[#allocation5 + $0x13a0] sm:$0xff]
    %v1058 = vld [vmem:[#allocation5 + $0x13a8] sm:$0xff]
    %v1059 = vld [vmem:[#allocation5 + $0x13b0] sm:$0xff]
    %v1060 = vld [vmem:[#allocation5 + $0x13b8] sm:$0xff]
    %v1061 = vld [vmem:[#allocation5 + $0x13c0] sm:$0xff]
    %v1062 = vld [vmem:[#allocation5 + $0x13c8] sm:$0xff]
    %v1063 = vld [vmem:[#allocation5 + $0x13d0] sm:$0xff]
    %v1064 = vld [vmem:[#allocation5 + $0x13d8] sm:$0xff]
    %v1065 = vld [vmem:[#allocation5 + $0x13e0] sm:$0xff]
    %v1066 = vld [vmem:[#allocation5 + $0x13e8] sm:$0xff]
    %v1067 = vld [vmem:[#allocation5 + $0x13f0] sm:$0xff]
    %v1068 = vld [vmem:[#allocation5 + $0x13f8] sm:$0xff]
    %v1069 = vld [vmem:[#allocation5 + $0x1400] sm:$0xff]
    %v1070 = vld [vmem:[#allocation5 + $0x1408] sm:$0xff]
    %v1071 = vld [vmem:[#allocation5 + $0x1410] sm:$0xff]
    %v1072 = vld [vmem:[#allocation5 + $0x1418] sm:$0xff]
    %v1073 = vld [vmem:[#allocation5 + $0x1420] sm:$0xff]
    %v1074 = vld [vmem:[#allocation5 + $0x1428] sm:$0xff]
    %v1075 = vld [vmem:[#allocation5 + $0x1430] sm:$0xff]
    %v1076 = vld [vmem:[#allocation5 + $0x1438] sm:$0xff]
    %v1077 = vld [vmem:[#allocation5 + $0x1440] sm:$0xff]
    %v1078 = vld [vmem:[#allocation5 + $0x1448] sm:$0xff]
    %v1079 = vld [vmem:[#allocation5 + $0x1450] sm:$0xff]
    %v1080 = vld [vmem:[#allocation5 + $0x1458] sm:$0xff]
    %v1081 = vld [vmem:[#allocation5 + $0x1460] sm:$0xff]
    %v1082 = vld [vmem:[#allocation5 + $0x1468] sm:$0xff]
    %v1083 = vld [vmem:[#allocation5 + $0x1470] sm:$0xff]
    %v1084 = vld [vmem:[#allocation5 + $0x1478] sm:$0xff]
    %v1085 = vld [vmem:[#allocation5 + $0x1480] sm:$0xff]
    %v1086 = vld [vmem:[#allocation5 + $0x1488] sm:$0xff]
    %v1087 = vld [vmem:[#allocation5 + $0x1490] sm:$0xff]
    %v1088 = vld [vmem:[#allocation5 + $0x1498] sm:$0xff]
    %v1089 = vld [vmem:[#allocation5 + $0x14a0] sm:$0xff]
    %v1090 = vld [vmem:[#allocation5 + $0x14a8] sm:$0xff]
    %v1091 = vld [vmem:[#allocation5 + $0x14b0] sm:$0xff]
    %v1092 = vld [vmem:[#allocation5 + $0x14b8] sm:$0xff]
    %v1093 = vld [vmem:[#allocation5 + $0x14c0] sm:$0xff]
    %v1094 = vld [vmem:[#allocation5 + $0x14c8] sm:$0xff]
    %v1095 = vld [vmem:[#allocation5 + $0x14d0] sm:$0xff]
    %v1096 = vld [vmem:[#allocation5 + $0x14d8] sm:$0xff]
    %v1097 = vld [vmem:[#allocation5 + $0x14e0] sm:$0xff]
    %v1098 = vld [vmem:[#allocation5 + $0x14e8] sm:$0xff]
    %v1099 = vld [vmem:[#allocation5 + $0x14f0] sm:$0xff]
    %v1100 = vld [vmem:[#allocation5 + $0x14f8] sm:$0xff]
    %v1101 = vld [vmem:[#allocation5 + $0x1500] sm:$0xff]
    %v1102 = vld [vmem:[#allocation5 + $0x1508] sm:$0xff]
    %v1103 = vld [vmem:[#allocation5 + $0x1510] sm:$0xff]
    %v1104 = vld [vmem:[#allocation5 + $0x1518] sm:$0xff]
    %v1105 = vld [vmem:[#allocation5 + $0x1520] sm:$0xff]
    %v1106 = vld [vmem:[#allocation5 + $0x1528] sm:$0xff]
    %v1107 = vld [vmem:[#allocation5 + $0x1530] sm:$0xff]
    %v1108 = vld [vmem:[#allocation5 + $0x1538] sm:$0xff]
    %v1109 = vld [vmem:[#allocation5 + $0x1540] sm:$0xff]
    %v1110 = vld [vmem:[#allocation5 + $0x1548] sm:$0xff]
    %v1111 = vld [vmem:[#allocation5 + $0x1550] sm:$0xff]
    %v1112 = vld [vmem:[#allocation5 + $0x1558] sm:$0xff]
    %v1113 = vld [vmem:[#allocation5 + $0x1560] sm:$0xff]
    %v1114 = vld [vmem:[#allocation5 + $0x1568] sm:$0xff]
    %v1115 = vld [vmem:[#allocation5 + $0x1570] sm:$0xff]
    %v1116 = vld [vmem:[#allocation5 + $0x1578] sm:$0xff]
    %v1117 = vld [vmem:[#allocation5 + $0x1580] sm:$0xff]
    %v1118 = vld [vmem:[#allocation5 + $0x1588] sm:$0xff]
    %v1119 = vld [vmem:[#allocation5 + $0x1590] sm:$0xff]
    %v1120 = vld [vmem:[#allocation5 + $0x1598] sm:$0xff]
    %v1121 = vld [vmem:[#allocation5 + $0x15a0] sm:$0xff]
    %v1122 = vld [vmem:[#allocation5 + $0x15a8] sm:$0xff]
    %v1123 = vld [vmem:[#allocation5 + $0x15b0] sm:$0xff]
    %v1124 = vld [vmem:[#allocation5 + $0x15b8] sm:$0xff]
    %v1125 = vld [vmem:[#allocation5 + $0x15c0] sm:$0xff]
    %v1126 = vld [vmem:[#allocation5 + $0x15c8] sm:$0xff]
    %v1127 = vld [vmem:[#allocation5 + $0x15d0] sm:$0xff]
    %v1128 = vld [vmem:[#allocation5 + $0x15d8] sm:$0xff]
    %v1129 = vld [vmem:[#allocation5 + $0x15e0] sm:$0xff]
    %v1130 = vld [vmem:[#allocation5 + $0x15e8] sm:$0xff]
    %v1131 = vld [vmem:[#allocation5 + $0x15f0] sm:$0xff]
    %v1132 = vld [vmem:[#allocation5 + $0x15f8] sm:$0xff]
    %v1133 = vld [vmem:[#allocation5 + $0x1600] sm:$0xff]
    %v1134 = vld [vmem:[#allocation5 + $0x1608] sm:$0xff]
    %v1135 = vld [vmem:[#allocation5 + $0x1610] sm:$0xff]
    %v1136 = vld [vmem:[#allocation5 + $0x1618] sm:$0xff]
    %v1137 = vld [vmem:[#allocation5 + $0x1620] sm:$0xff]
    %v1138 = vld [vmem:[#allocation5 + $0x1628] sm:$0xff]
    %v1139 = vld [vmem:[#allocation5 + $0x1630] sm:$0xff]
    %v1140 = vld [vmem:[#allocation5 + $0x1638] sm:$0xff]
    %v1141 = vld [vmem:[#allocation5 + $0x1640] sm:$0xff]
    %v1142 = vld [vmem:[#allocation5 + $0x1648] sm:$0xff]
    %v1143 = vld [vmem:[#allocation5 + $0x1650] sm:$0xff]
    %v1144 = vld [vmem:[#allocation5 + $0x1658] sm:$0xff]
    %v1145 = vld [vmem:[#allocation5 + $0x1660] sm:$0xff]
    %v1146 = vld [vmem:[#allocation5 + $0x1668] sm:$0xff]
    %v1147 = vld [vmem:[#allocation5 + $0x1670] sm:$0xff]
    %v1148 = vld [vmem:[#allocation5 + $0x1678] sm:$0xff]
    %v1149 = vld [vmem:[#allocation5 + $0x1680] sm:$0xff]
    %v1150 = vld [vmem:[#allocation5 + $0x1688] sm:$0xff]
    %v1151 = vld [vmem:[#allocation5 + $0x1690] sm:$0xff]
    %v1152 = vld [vmem:[#allocation5 + $0x1698] sm:$0xff]
    %v1153 = vld [vmem:[#allocation5 + $0x16a0] sm:$0xff]
    %v1154 = vld [vmem:[#allocation5 + $0x16a8] sm:$0xff]
    %v1155 = vld [vmem:[#allocation5 + $0x16b0] sm:$0xff]
    %v1156 = vld [vmem:[#allocation5 + $0x16b8] sm:$0xff]
    %v1157 = vld [vmem:[#allocation5 + $0x16c0] sm:$0xff]
    %v1158 = vld [vmem:[#allocation5 + $0x16c8] sm:$0xff]
    %v1159 = vld [vmem:[#allocation5 + $0x16d0] sm:$0xff]
    %v1160 = vld [vmem:[#allocation5 + $0x16d8] sm:$0xff]
    %v1161 = vld [vmem:[#allocation5 + $0x16e0] sm:$0xff]
    %v1162 = vld [vmem:[#allocation5 + $0x16e8] sm:$0xff]
    %v1163 = vld [vmem:[#allocation5 + $0x16f0] sm:$0xff]
    %v1164 = vld [vmem:[#allocation5 + $0x16f8] sm:$0xff]
    %v1165 = vld [vmem:[#allocation5 + $0x1700] sm:$0xff]
    %v1166 = vld [vmem:[#allocation5 + $0x1708] sm:$0xff]
    %v1167 = vld [vmem:[#allocation5 + $0x1710] sm:$0xff]
    %v1168 = vld [vmem:[#allocation5 + $0x1718] sm:$0xff]
    %v1169 = vld [vmem:[#allocation5 + $0x1720] sm:$0xff]
    %v1170 = vld [vmem:[#allocation5 + $0x1728] sm:$0xff]
    %v1171 = vld [vmem:[#allocation5 + $0x1730] sm:$0xff]
    %v1172 = vld [vmem:[#allocation5 + $0x1738] sm:$0xff]
    %v1173 = vld [vmem:[#allocation5 + $0x1740] sm:$0xff]
    %v1174 = vld [vmem:[#allocation5 + $0x1748] sm:$0xff]
    %v1175 = vld [vmem:[#allocation5 + $0x1750] sm:$0xff]
    %v1176 = vld [vmem:[#allocation5 + $0x1758] sm:$0xff]
    %v1177 = vld [vmem:[#allocation5 + $0x1760] sm:$0xff]
    %v1178 = vld [vmem:[#allocation5 + $0x1768] sm:$0xff]
    %v1179 = vld [vmem:[#allocation5 + $0x1770] sm:$0xff]
    %v1180 = vld [vmem:[#allocation5 + $0x1778] sm:$0xff]
    %v1181 = vld [vmem:[#allocation5 + $0x1780] sm:$0xff]
    %v1182 = vld [vmem:[#allocation5 + $0x1788] sm:$0xff]
    %v1183 = vld [vmem:[#allocation5 + $0x1790] sm:$0xff]
    %v1184 = vld [vmem:[#allocation5 + $0x1798] sm:$0xff]
    %v1185 = vld [vmem:[#allocation5 + $0x17a0] sm:$0xff]
    %v1186 = vld [vmem:[#allocation5 + $0x17a8] sm:$0xff]
    %v1187 = vld [vmem:[#allocation5 + $0x17b0] sm:$0xff]
    %v1188 = vld [vmem:[#allocation5 + $0x17b8] sm:$0xff]
    %v1189 = vld [vmem:[#allocation5 + $0x17c0] sm:$0xff]
    %v1190 = vld [vmem:[#allocation5 + $0x17c8] sm:$0xff]
    %v1191 = vld [vmem:[#allocation5 + $0x17d0] sm:$0xff]
    %v1192 = vld [vmem:[#allocation5 + $0x17d8] sm:$0xff]
    %v1193 = vld [vmem:[#allocation5 + $0x17e0] sm:$0xff]
    %v1194 = vld [vmem:[#allocation5 + $0x17e8] sm:$0xff]
    %v1195 = vld [vmem:[#allocation5 + $0x17f0] sm:$0xff]
    %v1196 = vld [vmem:[#allocation5 + $0x17f8] sm:$0xff]
    %v1197 = vld [vmem:[#allocation7] sm:$0xf]
    %v1199 = vlaneseq
    %v1200 = vshrl.u32 %v1199, 7
    %v1201 = vsub.s32 0, %v1200
    %v1202 = vrot.slane %v1197, %v1201
    %v1203 = vlaneseq
    %v1204 = vshrl.u32 %v1203, 7
    %v1205 = vsub.s32 1, %v1204
    %v1206 = vrot.slane %v1197, %v1205
    %v1207 = vlaneseq
    %v1208 = vshrl.u32 %v1207, 7
    %v1209 = vsub.s32 2, %v1208
    %v1210 = vrot.slane %v1197, %v1209
    %v1211 = vlaneseq
    %v1212 = vshrl.u32 %v1211, 7
    %v1213 = vsub.s32 3, %v1212
    %v1214 = vrot.slane %v1197, %v1213
    %v1987 = vunpack.c.l.b16 %v429
    %v1988 = vunpack.c.h.b16 %v429
    %v1989 = vunpack.c.l.b16 %v430
    %v1990 = vunpack.c.h.b16 %v430
    %v1991 = vunpack.c.l.b16 %v431
    %v1992 = vunpack.c.h.b16 %v431
    %v1993 = vunpack.c.l.b16 %v432
    %v1994 = vunpack.c.h.b16 %v432
    %v1995 = vunpack.c.l.b16 %v433
    %v1996 = vunpack.c.h.b16 %v433
    %v1997 = vunpack.c.l.b16 %v434
    %v1998 = vunpack.c.h.b16 %v434
    %v1999 = vunpack.c.l.b16 %v435
    %v2000 = vunpack.c.h.b16 %v435
    %v2001 = vunpack.c.l.b16 %v436
    %v2002 = vunpack.c.h.b16 %v436
    %v2003 = vunpack.c.l.b16 %v437
    %v2004 = vunpack.c.h.b16 %v437
    %v2005 = vunpack.c.l.b16 %v438
    %v2006 = vunpack.c.h.b16 %v438
    %v2007 = vunpack.c.l.b16 %v439
    %v2008 = vunpack.c.h.b16 %v439
    %v2009 = vunpack.c.l.b16 %v440
    %v2010 = vunpack.c.h.b16 %v440
    %v2011 = vunpack.c.l.b16 %v441
    %v2012 = vunpack.c.h.b16 %v441
    %v2013 = vunpack.c.l.b16 %v442
    %v2014 = vunpack.c.h.b16 %v442
    %v2015 = vunpack.c.l.b16 %v443
    %v2016 = vunpack.c.h.b16 %v443
    %v2017 = vunpack.c.l.b16 %v444
    %v2018 = vunpack.c.h.b16 %v444
    %v2019 = vunpack.c.l.b16 %v445
    %v2020 = vunpack.c.h.b16 %v445
    %v2021 = vunpack.c.l.b16 %v446
    %v2022 = vunpack.c.h.b16 %v446
    %v2023 = vunpack.c.l.b16 %v447
    %v2024 = vunpack.c.h.b16 %v447
    %v2025 = vunpack.c.l.b16 %v448
    %v2026 = vunpack.c.h.b16 %v448
    %v2027 = vunpack.c.l.b16 %v449
    %v2028 = vunpack.c.h.b16 %v449
    %v2029 = vunpack.c.l.b16 %v450
    %v2030 = vunpack.c.h.b16 %v450
    %v2031 = vunpack.c.l.b16 %v451
    %v2032 = vunpack.c.h.b16 %v451
    %v2033 = vunpack.c.l.b16 %v452
    %v2034 = vunpack.c.h.b16 %v452
    %v2035 = vunpack.c.l.b16 %v453
    %v2036 = vunpack.c.h.b16 %v453
    %v2037 = vunpack.c.l.b16 %v454
    %v2038 = vunpack.c.h.b16 %v454
    %v2039 = vunpack.c.l.b16 %v455
    %v2040 = vunpack.c.h.b16 %v455
    %v2041 = vunpack.c.l.b16 %v456
    %v2042 = vunpack.c.h.b16 %v456
    %v2043 = vunpack.c.l.b16 %v457
    %v2044 = vunpack.c.h.b16 %v457
    %v2045 = vunpack.c.l.b16 %v458
    %v2046 = vunpack.c.h.b16 %v458
    %v2047 = vunpack.c.l.b16 %v459
    %v2048 = vunpack.c.h.b16 %v459
    %v2049 = vunpack.c.l.b16 %v460
    %v2050 = vunpack.c.h.b16 %v460
    %v2051 = vunpack.c.l.b16 %v461
    %v2052 = vunpack.c.h.b16 %v461
    %v2053 = vunpack.c.l.b16 %v462
    %v2054 = vunpack.c.h.b16 %v462
    %v2055 = vunpack.c.l.b16 %v463
    %v2056 = vunpack.c.h.b16 %v463
    %v2057 = vunpack.c.l.b16 %v464
    %v2058 = vunpack.c.h.b16 %v464
    %v2059 = vunpack.c.l.b16 %v465
    %v2060 = vunpack.c.h.b16 %v465
    %v2061 = vunpack.c.l.b16 %v466
    %v2062 = vunpack.c.h.b16 %v466
    %v2063 = vunpack.c.l.b16 %v467
    %v2064 = vunpack.c.h.b16 %v467
    %v2065 = vunpack.c.l.b16 %v468
    %v2066 = vunpack.c.h.b16 %v468
    %v2067 = vunpack.c.l.b16 %v469
    %v2068 = vunpack.c.h.b16 %v469
    %v2069 = vunpack.c.l.b16 %v470
    %v2070 = vunpack.c.h.b16 %v470
    %v2071 = vunpack.c.l.b16 %v471
    %v2072 = vunpack.c.h.b16 %v471
    %v2073 = vunpack.c.l.b16 %v472
    %v2074 = vunpack.c.h.b16 %v472
    %v2075 = vunpack.c.l.b16 %v473
    %v2076 = vunpack.c.h.b16 %v473
    %v2077 = vunpack.c.l.b16 %v474
    %v2078 = vunpack.c.h.b16 %v474
    %v2079 = vunpack.c.l.b16 %v475
    %v2080 = vunpack.c.h.b16 %v475
    %v2081 = vunpack.c.l.b16 %v476
    %v2082 = vunpack.c.h.b16 %v476
    %v2083 = vunpack.c.l.b16 %v477
    %v2084 = vunpack.c.h.b16 %v477
    %v2085 = vunpack.c.l.b16 %v478
    %v2086 = vunpack.c.h.b16 %v478
    %v2087 = vunpack.c.l.b16 %v479
    %v2088 = vunpack.c.h.b16 %v479
    %v2089 = vunpack.c.l.b16 %v480
    %v2090 = vunpack.c.h.b16 %v480
    %v2091 = vunpack.c.l.b16 %v481
    %v2092 = vunpack.c.h.b16 %v481
    %v2093 = vunpack.c.l.b16 %v482
    %v2094 = vunpack.c.h.b16 %v482
    %v2095 = vunpack.c.l.b16 %v483
    %v2096 = vunpack.c.h.b16 %v483
    %v2097 = vunpack.c.l.b16 %v484
    %v2098 = vunpack.c.h.b16 %v484
    %v2099 = vunpack.c.l.b16 %v485
    %v2100 = vunpack.c.h.b16 %v485
    %v2101 = vunpack.c.l.b16 %v486
    %v2102 = vunpack.c.h.b16 %v486
    %v2103 = vunpack.c.l.b16 %v487
    %v2104 = vunpack.c.h.b16 %v487
    %v2105 = vunpack.c.l.b16 %v488
    %v2106 = vunpack.c.h.b16 %v488
    %v2107 = vunpack.c.l.b16 %v489
    %v2108 = vunpack.c.h.b16 %v489
    %v2109 = vunpack.c.l.b16 %v490
    %v2110 = vunpack.c.h.b16 %v490
    %v2111 = vunpack.c.l.b16 %v491
    %v2112 = vunpack.c.h.b16 %v491
    %v2113 = vunpack.c.l.b16 %v492
    %v2114 = vunpack.c.h.b16 %v492
    %v2115 = vunpack.c.l.b16 %v493
    %v2116 = vunpack.c.h.b16 %v493
    %v2117 = vunpack.c.l.b16 %v494
    %v2118 = vunpack.c.h.b16 %v494
    %v2119 = vunpack.c.l.b16 %v495
    %v2120 = vunpack.c.h.b16 %v495
    %v2121 = vunpack.c.l.b16 %v496
    %v2122 = vunpack.c.h.b16 %v496
    %v2123 = vunpack.c.l.b16 %v497
    %v2124 = vunpack.c.h.b16 %v497
    %v2125 = vunpack.c.l.b16 %v498
    %v2126 = vunpack.c.h.b16 %v498
    %v2127 = vunpack.c.l.b16 %v499
    %v2128 = vunpack.c.h.b16 %v499
    %v2129 = vunpack.c.l.b16 %v500
    %v2130 = vunpack.c.h.b16 %v500
    %v2131 = vunpack.c.l.b16 %v501
    %v2132 = vunpack.c.h.b16 %v501
    %v2133 = vunpack.c.l.b16 %v502
    %v2134 = vunpack.c.h.b16 %v502
    %v2135 = vunpack.c.l.b16 %v503
    %v2136 = vunpack.c.h.b16 %v503
    %v2137 = vunpack.c.l.b16 %v504
    %v2138 = vunpack.c.h.b16 %v504
    %v2139 = vunpack.c.l.b16 %v505
    %v2140 = vunpack.c.h.b16 %v505
    %v2141 = vunpack.c.l.b16 %v506
    %v2142 = vunpack.c.h.b16 %v506
    %v2143 = vunpack.c.l.b16 %v507
    %v2144 = vunpack.c.h.b16 %v507
    %v2145 = vunpack.c.l.b16 %v508
    %v2146 = vunpack.c.h.b16 %v508
    %v2147 = vunpack.c.l.b16 %v509
    %v2148 = vunpack.c.h.b16 %v509
    %v2149 = vunpack.c.l.b16 %v510
    %v2150 = vunpack.c.h.b16 %v510
    %v2151 = vunpack.c.l.b16 %v511
    %v2152 = vunpack.c.h.b16 %v511
    %v2153 = vunpack.c.l.b16 %v512
    %v2154 = vunpack.c.h.b16 %v512
    %v2155 = vunpack.c.l.b16 %v513
    %v2156 = vunpack.c.h.b16 %v513
    %v2157 = vunpack.c.l.b16 %v514
    %v2158 = vunpack.c.h.b16 %v514
    %v2159 = vunpack.c.l.b16 %v515
    %v2160 = vunpack.c.h.b16 %v515
    %v2161 = vunpack.c.l.b16 %v516
    %v2162 = vunpack.c.h.b16 %v516
    %v2163 = vunpack.c.l.b16 %v517
    %v2164 = vunpack.c.h.b16 %v517
    %v2165 = vunpack.c.l.b16 %v518
    %v2166 = vunpack.c.h.b16 %v518
    %v2167 = vunpack.c.l.b16 %v519
    %v2168 = vunpack.c.h.b16 %v519
    %v2169 = vunpack.c.l.b16 %v520
    %v2170 = vunpack.c.h.b16 %v520
    %v2171 = vunpack.c.l.b16 %v521
    %v2172 = vunpack.c.h.b16 %v521
    %v2173 = vunpack.c.l.b16 %v522
    %v2174 = vunpack.c.h.b16 %v522
    %v2175 = vunpack.c.l.b16 %v523
    %v2176 = vunpack.c.h.b16 %v523
    %v2177 = vunpack.c.l.b16 %v524
    %v2178 = vunpack.c.h.b16 %v524
    %v2179 = vunpack.c.l.b16 %v525
    %v2180 = vunpack.c.h.b16 %v525
    %v2181 = vunpack.c.l.b16 %v526
    %v2182 = vunpack.c.h.b16 %v526
    %v2183 = vunpack.c.l.b16 %v527
    %v2184 = vunpack.c.h.b16 %v527
    %v2185 = vunpack.c.l.b16 %v528
    %v2186 = vunpack.c.h.b16 %v528
    %v2187 = vunpack.c.l.b16 %v529
    %v2188 = vunpack.c.h.b16 %v529
    %v2189 = vunpack.c.l.b16 %v530
    %v2190 = vunpack.c.h.b16 %v530
    %v2191 = vunpack.c.l.b16 %v531
    %v2192 = vunpack.c.h.b16 %v531
    %v2193 = vunpack.c.l.b16 %v532
    %v2194 = vunpack.c.h.b16 %v532
    %v2195 = vunpack.c.l.b16 %v533
    %v2196 = vunpack.c.h.b16 %v533
    %v2197 = vunpack.c.l.b16 %v534
    %v2198 = vunpack.c.h.b16 %v534
    %v2199 = vunpack.c.l.b16 %v535
    %v2200 = vunpack.c.h.b16 %v535
    %v2201 = vunpack.c.l.b16 %v536
    %v2202 = vunpack.c.h.b16 %v536
    %v2203 = vunpack.c.l.b16 %v537
    %v2204 = vunpack.c.h.b16 %v537
    %v2205 = vunpack.c.l.b16 %v538
    %v2206 = vunpack.c.h.b16 %v538
    %v2207 = vunpack.c.l.b16 %v539
    %v2208 = vunpack.c.h.b16 %v539
    %v2209 = vunpack.c.l.b16 %v540
    %v2210 = vunpack.c.h.b16 %v540
    %v2211 = vunpack.c.l.b16 %v541
    %v2212 = vunpack.c.h.b16 %v541
    %v2213 = vunpack.c.l.b16 %v542
    %v2214 = vunpack.c.h.b16 %v542
    %v2215 = vunpack.c.l.b16 %v543
    %v2216 = vunpack.c.h.b16 %v543
    %v2217 = vunpack.c.l.b16 %v544
    %v2218 = vunpack.c.h.b16 %v544
    %v2219 = vunpack.c.l.b16 %v545
    %v2220 = vunpack.c.h.b16 %v545
    %v2221 = vunpack.c.l.b16 %v546
    %v2222 = vunpack.c.h.b16 %v546
    %v2223 = vunpack.c.l.b16 %v547
    %v2224 = vunpack.c.h.b16 %v547
    %v2225 = vunpack.c.l.b16 %v548
    %v2226 = vunpack.c.h.b16 %v548
    %v2227 = vunpack.c.l.b16 %v549
    %v2228 = vunpack.c.h.b16 %v549
    %v2229 = vunpack.c.l.b16 %v550
    %v2230 = vunpack.c.h.b16 %v550
    %v2231 = vunpack.c.l.b16 %v551
    %v2232 = vunpack.c.h.b16 %v551
    %v2233 = vunpack.c.l.b16 %v552
    %v2234 = vunpack.c.h.b16 %v552
    %v2235 = vunpack.c.l.b16 %v553
    %v2236 = vunpack.c.h.b16 %v553
    %v2237 = vunpack.c.l.b16 %v554
    %v2238 = vunpack.c.h.b16 %v554
    %v2239 = vunpack.c.l.b16 %v555
    %v2240 = vunpack.c.h.b16 %v555
    %v2241 = vunpack.c.l.b16 %v556
    %v2242 = vunpack.c.h.b16 %v556
    %v2243 = vunpack.c.l.b16 %v557
    %v2244 = vunpack.c.h.b16 %v557
    %v2245 = vunpack.c.l.b16 %v558
    %v2246 = vunpack.c.h.b16 %v558
    %v2247 = vunpack.c.l.b16 %v559
    %v2248 = vunpack.c.h.b16 %v559
    %v2249 = vunpack.c.l.b16 %v560
    %v2250 = vunpack.c.h.b16 %v560
    %v2251 = vunpack.c.l.b16 %v561
    %v2252 = vunpack.c.h.b16 %v561
    %v2253 = vunpack.c.l.b16 %v562
    %v2254 = vunpack.c.h.b16 %v562
    %v2255 = vunpack.c.l.b16 %v563
    %v2256 = vunpack.c.h.b16 %v563
    %v2257 = vunpack.c.l.b16 %v564
    %v2258 = vunpack.c.h.b16 %v564
    %v2259 = vunpack.c.l.b16 %v565
    %v2260 = vunpack.c.h.b16 %v565
    %v2261 = vunpack.c.l.b16 %v566
    %v2262 = vunpack.c.h.b16 %v566
    %v2263 = vunpack.c.l.b16 %v567
    %v2264 = vunpack.c.h.b16 %v567
    %v2265 = vunpack.c.l.b16 %v568
    %v2266 = vunpack.c.h.b16 %v568
    %v2267 = vunpack.c.l.b16 %v569
    %v2268 = vunpack.c.h.b16 %v569
    %v2269 = vunpack.c.l.b16 %v570
    %v2270 = vunpack.c.h.b16 %v570
    %v2271 = vunpack.c.l.b16 %v571
    %v2272 = vunpack.c.h.b16 %v571
    %v2273 = vunpack.c.l.b16 %v572
    %v2274 = vunpack.c.h.b16 %v572
    %v2275 = vunpack.c.l.b16 %v573
    %v2276 = vunpack.c.h.b16 %v573
    %v2277 = vunpack.c.l.b16 %v574
    %v2278 = vunpack.c.h.b16 %v574
    %v2279 = vunpack.c.l.b16 %v575
    %v2280 = vunpack.c.h.b16 %v575
    %v2281 = vunpack.c.l.b16 %v576
    %v2282 = vunpack.c.h.b16 %v576
    %v2283 = vunpack.c.l.b16 %v577
    %v2284 = vunpack.c.h.b16 %v577
    %v2285 = vunpack.c.l.b16 %v578
    %v2286 = vunpack.c.h.b16 %v578
    %v2287 = vunpack.c.l.b16 %v579
    %v2288 = vunpack.c.h.b16 %v579
    %v2289 = vunpack.c.l.b16 %v580
    %v2290 = vunpack.c.h.b16 %v580
    %v2291 = vunpack.c.l.b16 %v581
    %v2292 = vunpack.c.h.b16 %v581
    %v2293 = vunpack.c.l.b16 %v582
    %v2294 = vunpack.c.h.b16 %v582
    %v2295 = vunpack.c.l.b16 %v583
    %v2296 = vunpack.c.h.b16 %v583
    %v2297 = vunpack.c.l.b16 %v584
    %v2298 = vunpack.c.h.b16 %v584
    %v2299 = vunpack.c.l.b16 %v585
    %v2300 = vunpack.c.h.b16 %v585
    %v2301 = vunpack.c.l.b16 %v586
    %v2302 = vunpack.c.h.b16 %v586
    %v2303 = vunpack.c.l.b16 %v587
    %v2304 = vunpack.c.h.b16 %v587
    %v2305 = vunpack.c.l.b16 %v588
    %v2306 = vunpack.c.h.b16 %v588
    %v2307 = vunpack.c.l.b16 %v589
    %v2308 = vunpack.c.h.b16 %v589
    %v2309 = vunpack.c.l.b16 %v590
    %v2310 = vunpack.c.h.b16 %v590
    %v2311 = vunpack.c.l.b16 %v591
    %v2312 = vunpack.c.h.b16 %v591
    %v2313 = vunpack.c.l.b16 %v592
    %v2314 = vunpack.c.h.b16 %v592
    %v2315 = vunpack.c.l.b16 %v593
    %v2316 = vunpack.c.h.b16 %v593
    %v2317 = vunpack.c.l.b16 %v594
    %v2318 = vunpack.c.h.b16 %v594
    %v2319 = vunpack.c.l.b16 %v595
    %v2320 = vunpack.c.h.b16 %v595
    %v2321 = vunpack.c.l.b16 %v596
    %v2322 = vunpack.c.h.b16 %v596
    %v2323 = vunpack.c.l.b16 %v597
    %v2324 = vunpack.c.h.b16 %v597
    %v2325 = vunpack.c.l.b16 %v598
    %v2326 = vunpack.c.h.b16 %v598
    %v2327 = vunpack.c.l.b16 %v599
    %v2328 = vunpack.c.h.b16 %v599
    %v2329 = vunpack.c.l.b16 %v600
    %v2330 = vunpack.c.h.b16 %v600
    %v2331 = vunpack.c.l.b16 %v601
    %v2332 = vunpack.c.h.b16 %v601
    %v2333 = vunpack.c.l.b16 %v602
    %v2334 = vunpack.c.h.b16 %v602
    %v2335 = vunpack.c.l.b16 %v603
    %v2336 = vunpack.c.h.b16 %v603
    %v2337 = vunpack.c.l.b16 %v604
    %v2338 = vunpack.c.h.b16 %v604
    %v2339 = vunpack.c.l.b16 %v605
    %v2340 = vunpack.c.h.b16 %v605
    %v2341 = vunpack.c.l.b16 %v606
    %v2342 = vunpack.c.h.b16 %v606
    %v2343 = vunpack.c.l.b16 %v607
    %v2344 = vunpack.c.h.b16 %v607
    %v2345 = vunpack.c.l.b16 %v608
    %v2346 = vunpack.c.h.b16 %v608
    %v2347 = vunpack.c.l.b16 %v609
    %v2348 = vunpack.c.h.b16 %v609
    %v2349 = vunpack.c.l.b16 %v610
    %v2350 = vunpack.c.h.b16 %v610
    %v2351 = vunpack.c.l.b16 %v611
    %v2352 = vunpack.c.h.b16 %v611
    %v2353 = vunpack.c.l.b16 %v612
    %v2354 = vunpack.c.h.b16 %v612
    %v2355 = vunpack.c.l.b16 %v613
    %v2356 = vunpack.c.h.b16 %v613
    %v2357 = vunpack.c.l.b16 %v614
    %v2358 = vunpack.c.h.b16 %v614
    %v2359 = vunpack.c.l.b16 %v615
    %v2360 = vunpack.c.h.b16 %v615
    %v2361 = vunpack.c.l.b16 %v616
    %v2362 = vunpack.c.h.b16 %v616
    %v2363 = vunpack.c.l.b16 %v617
    %v2364 = vunpack.c.h.b16 %v617
    %v2365 = vunpack.c.l.b16 %v618
    %v2366 = vunpack.c.h.b16 %v618
    %v2367 = vunpack.c.l.b16 %v619
    %v2368 = vunpack.c.h.b16 %v619
    %v2369 = vunpack.c.l.b16 %v620
    %v2370 = vunpack.c.h.b16 %v620
    %v2371 = vunpack.c.l.b16 %v621
    %v2372 = vunpack.c.h.b16 %v621
    %v2373 = vunpack.c.l.b16 %v622
    %v2374 = vunpack.c.h.b16 %v622
    %v2375 = vunpack.c.l.b16 %v623
    %v2376 = vunpack.c.h.b16 %v623
    %v2377 = vunpack.c.l.b16 %v624
    %v2378 = vunpack.c.h.b16 %v624
    %v2379 = vunpack.c.l.b16 %v625
    %v2380 = vunpack.c.h.b16 %v625
    %v2381 = vunpack.c.l.b16 %v626
    %v2382 = vunpack.c.h.b16 %v626
    %v2383 = vunpack.c.l.b16 %v627
    %v2384 = vunpack.c.h.b16 %v627
    %v2385 = vunpack.c.l.b16 %v628
    %v2386 = vunpack.c.h.b16 %v628
    %v2387 = vunpack.c.l.b16 %v629
    %v2388 = vunpack.c.h.b16 %v629
    %v2389 = vunpack.c.l.b16 %v630
    %v2390 = vunpack.c.h.b16 %v630
    %v2391 = vunpack.c.l.b16 %v631
    %v2392 = vunpack.c.h.b16 %v631
    %v2393 = vunpack.c.l.b16 %v632
    %v2394 = vunpack.c.h.b16 %v632
    %v2395 = vunpack.c.l.b16 %v633
    %v2396 = vunpack.c.h.b16 %v633
    %v2397 = vunpack.c.l.b16 %v634
    %v2398 = vunpack.c.h.b16 %v634
    %v2399 = vunpack.c.l.b16 %v635
    %v2400 = vunpack.c.h.b16 %v635
    %v2401 = vunpack.c.l.b16 %v636
    %v2402 = vunpack.c.h.b16 %v636
    %v2403 = vunpack.c.l.b16 %v637
    %v2404 = vunpack.c.h.b16 %v637
    %v2405 = vunpack.c.l.b16 %v638
    %v2406 = vunpack.c.h.b16 %v638
    %v2407 = vunpack.c.l.b16 %v639
    %v2408 = vunpack.c.h.b16 %v639
    %v2409 = vunpack.c.l.b16 %v640
    %v2410 = vunpack.c.h.b16 %v640
    %v2411 = vunpack.c.l.b16 %v641
    %v2412 = vunpack.c.h.b16 %v641
    %v2413 = vunpack.c.l.b16 %v642
    %v2414 = vunpack.c.h.b16 %v642
    %v2415 = vunpack.c.l.b16 %v643
    %v2416 = vunpack.c.h.b16 %v643
    %v2417 = vunpack.c.l.b16 %v644
    %v2418 = vunpack.c.h.b16 %v644
    %v2419 = vunpack.c.l.b16 %v645
    %v2420 = vunpack.c.h.b16 %v645
    %v2421 = vunpack.c.l.b16 %v646
    %v2422 = vunpack.c.h.b16 %v646
    %v2423 = vunpack.c.l.b16 %v647
    %v2424 = vunpack.c.h.b16 %v647
    %v2425 = vunpack.c.l.b16 %v648
    %v2426 = vunpack.c.h.b16 %v648
    %v2427 = vunpack.c.l.b16 %v649
    %v2428 = vunpack.c.h.b16 %v649
    %v2429 = vunpack.c.l.b16 %v650
    %v2430 = vunpack.c.h.b16 %v650
    %v2431 = vunpack.c.l.b16 %v651
    %v2432 = vunpack.c.h.b16 %v651
    %v2433 = vunpack.c.l.b16 %v652
    %v2434 = vunpack.c.h.b16 %v652
    %v2435 = vunpack.c.l.b16 %v653
    %v2436 = vunpack.c.h.b16 %v653
    %v2437 = vunpack.c.l.b16 %v654
    %v2438 = vunpack.c.h.b16 %v654
    %v2439 = vunpack.c.l.b16 %v655
    %v2440 = vunpack.c.h.b16 %v655
    %v2441 = vunpack.c.l.b16 %v656
    %v2442 = vunpack.c.h.b16 %v656
    %v2443 = vunpack.c.l.b16 %v657
    %v2444 = vunpack.c.h.b16 %v657
    %v2445 = vunpack.c.l.b16 %v658
    %v2446 = vunpack.c.h.b16 %v658
    %v2447 = vunpack.c.l.b16 %v659
    %v2448 = vunpack.c.h.b16 %v659
    %v2449 = vunpack.c.l.b16 %v660
    %v2450 = vunpack.c.h.b16 %v660
    %v2451 = vunpack.c.l.b16 %v661
    %v2452 = vunpack.c.h.b16 %v661
    %v2453 = vunpack.c.l.b16 %v662
    %v2454 = vunpack.c.h.b16 %v662
    %v2455 = vunpack.c.l.b16 %v663
    %v2456 = vunpack.c.h.b16 %v663
    %v2457 = vunpack.c.l.b16 %v664
    %v2458 = vunpack.c.h.b16 %v664
    %v2459 = vunpack.c.l.b16 %v665
    %v2460 = vunpack.c.h.b16 %v665
    %v2461 = vunpack.c.l.b16 %v666
    %v2462 = vunpack.c.h.b16 %v666
    %v2463 = vunpack.c.l.b16 %v667
    %v2464 = vunpack.c.h.b16 %v667
    %v2465 = vunpack.c.l.b16 %v668
    %v2466 = vunpack.c.h.b16 %v668
    %v2467 = vunpack.c.l.b16 %v669
    %v2468 = vunpack.c.h.b16 %v669
    %v2469 = vunpack.c.l.b16 %v670
    %v2470 = vunpack.c.h.b16 %v670
    %v2471 = vunpack.c.l.b16 %v671
    %v2472 = vunpack.c.h.b16 %v671
    %v2473 = vunpack.c.l.b16 %v672
    %v2474 = vunpack.c.h.b16 %v672
    %v2475 = vunpack.c.l.b16 %v673
    %v2476 = vunpack.c.h.b16 %v673
    %v2477 = vunpack.c.l.b16 %v674
    %v2478 = vunpack.c.h.b16 %v674
    %v2479 = vunpack.c.l.b16 %v675
    %v2480 = vunpack.c.h.b16 %v675
    %v2481 = vunpack.c.l.b16 %v676
    %v2482 = vunpack.c.h.b16 %v676
    %v2483 = vunpack.c.l.b16 %v677
    %v2484 = vunpack.c.h.b16 %v677
    %v2485 = vunpack.c.l.b16 %v678
    %v2486 = vunpack.c.h.b16 %v678
    %v2487 = vunpack.c.l.b16 %v679
    %v2488 = vunpack.c.h.b16 %v679
    %v2489 = vunpack.c.l.b16 %v680
    %v2490 = vunpack.c.h.b16 %v680
    %v2491 = vunpack.c.l.b16 %v681
    %v2492 = vunpack.c.h.b16 %v681
    %v2493 = vunpack.c.l.b16 %v682
    %v2494 = vunpack.c.h.b16 %v682
    %v2495 = vunpack.c.l.b16 %v683
    %v2496 = vunpack.c.h.b16 %v683
    %v2497 = vunpack.c.l.b16 %v684
    %v2498 = vunpack.c.h.b16 %v684
    %v2499 = vunpack.c.l.b16 %v685
    %v2500 = vunpack.c.h.b16 %v685
    %v2501 = vunpack.c.l.b16 %v686
    %v2502 = vunpack.c.h.b16 %v686
    %v2503 = vunpack.c.l.b16 %v687
    %v2504 = vunpack.c.h.b16 %v687
    %v2505 = vunpack.c.l.b16 %v688
    %v2506 = vunpack.c.h.b16 %v688
    %v2507 = vunpack.c.l.b16 %v689
    %v2508 = vunpack.c.h.b16 %v689
    %v2509 = vunpack.c.l.b16 %v690
    %v2510 = vunpack.c.h.b16 %v690
    %v2511 = vunpack.c.l.b16 %v691
    %v2512 = vunpack.c.h.b16 %v691
    %v2513 = vunpack.c.l.b16 %v692
    %v2514 = vunpack.c.h.b16 %v692
    %v2515 = vunpack.c.l.b16 %v693
    %v2516 = vunpack.c.h.b16 %v693
    %v2517 = vunpack.c.l.b16 %v694
    %v2518 = vunpack.c.h.b16 %v694
    %v2519 = vunpack.c.l.b16 %v695
    %v2520 = vunpack.c.h.b16 %v695
    %v2521 = vunpack.c.l.b16 %v696
    %v2522 = vunpack.c.h.b16 %v696
    %v2523 = vunpack.c.l.b16 %v697
    %v2524 = vunpack.c.h.b16 %v697
    %v2525 = vunpack.c.l.b16 %v698
    %v2526 = vunpack.c.h.b16 %v698
    %v2527 = vunpack.c.l.b16 %v699
    %v2528 = vunpack.c.h.b16 %v699
    %v2529 = vunpack.c.l.b16 %v700
    %v2530 = vunpack.c.h.b16 %v700
    %v2531 = vunpack.c.l.b16 %v701
    %v2532 = vunpack.c.h.b16 %v701
    %v2533 = vunpack.c.l.b16 %v702
    %v2534 = vunpack.c.h.b16 %v702
    %v2535 = vunpack.c.l.b16 %v703
    %v2536 = vunpack.c.h.b16 %v703
    %v2537 = vunpack.c.l.b16 %v704
    %v2538 = vunpack.c.h.b16 %v704
    %v2539 = vunpack.c.l.b16 %v705
    %v2540 = vunpack.c.h.b16 %v705
    %v2541 = vunpack.c.l.b16 %v706
    %v2542 = vunpack.c.h.b16 %v706
    %v2543 = vunpack.c.l.b16 %v707
    %v2544 = vunpack.c.h.b16 %v707
    %v2545 = vunpack.c.l.b16 %v708
    %v2546 = vunpack.c.h.b16 %v708
    %v2547 = vunpack.c.l.b16 %v709
    %v2548 = vunpack.c.h.b16 %v709
    %v2549 = vunpack.c.l.b16 %v710
    %v2550 = vunpack.c.h.b16 %v710
    %v2551 = vunpack.c.l.b16 %v711
    %v2552 = vunpack.c.h.b16 %v711
    %v2553 = vunpack.c.l.b16 %v712
    %v2554 = vunpack.c.h.b16 %v712
    %v2555 = vunpack.c.l.b16 %v713
    %v2556 = vunpack.c.h.b16 %v713
    %v2557 = vunpack.c.l.b16 %v714
    %v2558 = vunpack.c.h.b16 %v714
    %v2559 = vunpack.c.l.b16 %v715
    %v2560 = vunpack.c.h.b16 %v715
    %v2561 = vunpack.c.l.b16 %v716
    %v2562 = vunpack.c.h.b16 %v716
    %v2563 = vunpack.c.l.b16 %v717
    %v2564 = vunpack.c.h.b16 %v717
    %v2565 = vunpack.c.l.b16 %v718
    %v2566 = vunpack.c.h.b16 %v718
    %v2567 = vunpack.c.l.b16 %v719
    %v2568 = vunpack.c.h.b16 %v719
    %v2569 = vunpack.c.l.b16 %v720
    %v2570 = vunpack.c.h.b16 %v720
    %v2571 = vunpack.c.l.b16 %v721
    %v2572 = vunpack.c.h.b16 %v721
    %v2573 = vunpack.c.l.b16 %v722
    %v2574 = vunpack.c.h.b16 %v722
    %v2575 = vunpack.c.l.b16 %v723
    %v2576 = vunpack.c.h.b16 %v723
    %v2577 = vunpack.c.l.b16 %v724
    %v2578 = vunpack.c.h.b16 %v724
    %v2579 = vunpack.c.l.b16 %v725
    %v2580 = vunpack.c.h.b16 %v725
    %v2581 = vunpack.c.l.b16 %v726
    %v2582 = vunpack.c.h.b16 %v726
    %v2583 = vunpack.c.l.b16 %v727
    %v2584 = vunpack.c.h.b16 %v727
    %v2585 = vunpack.c.l.b16 %v728
    %v2586 = vunpack.c.h.b16 %v728
    %v2587 = vunpack.c.l.b16 %v729
    %v2588 = vunpack.c.h.b16 %v729
    %v2589 = vunpack.c.l.b16 %v730
    %v2590 = vunpack.c.h.b16 %v730
    %v2591 = vunpack.c.l.b16 %v731
    %v2592 = vunpack.c.h.b16 %v731
    %v2593 = vunpack.c.l.b16 %v732
    %v2594 = vunpack.c.h.b16 %v732
    %v2595 = vunpack.c.l.b16 %v733
    %v2596 = vunpack.c.h.b16 %v733
    %v2597 = vunpack.c.l.b16 %v734
    %v2598 = vunpack.c.h.b16 %v734
    %v2599 = vunpack.c.l.b16 %v735
    %v2600 = vunpack.c.h.b16 %v735
    %v2601 = vunpack.c.l.b16 %v736
    %v2602 = vunpack.c.h.b16 %v736
    %v2603 = vunpack.c.l.b16 %v737
    %v2604 = vunpack.c.h.b16 %v737
    %v2605 = vunpack.c.l.b16 %v738
    %v2606 = vunpack.c.h.b16 %v738
    %v2607 = vunpack.c.l.b16 %v739
    %v2608 = vunpack.c.h.b16 %v739
    %v2609 = vunpack.c.l.b16 %v740
    %v2610 = vunpack.c.h.b16 %v740
    %v2611 = vunpack.c.l.b16 %v741
    %v2612 = vunpack.c.h.b16 %v741
    %v2613 = vunpack.c.l.b16 %v742
    %v2614 = vunpack.c.h.b16 %v742
    %v2615 = vunpack.c.l.b16 %v743
    %v2616 = vunpack.c.h.b16 %v743
    %v2617 = vunpack.c.l.b16 %v744
    %v2618 = vunpack.c.h.b16 %v744
    %v2619 = vunpack.c.l.b16 %v745
    %v2620 = vunpack.c.h.b16 %v745
    %v2621 = vunpack.c.l.b16 %v746
    %v2622 = vunpack.c.h.b16 %v746
    %v2623 = vunpack.c.l.b16 %v747
    %v2624 = vunpack.c.h.b16 %v747
    %v2625 = vunpack.c.l.b16 %v748
    %v2626 = vunpack.c.h.b16 %v748
    %v2627 = vunpack.c.l.b16 %v749
    %v2628 = vunpack.c.h.b16 %v749
    %v2629 = vunpack.c.l.b16 %v750
    %v2630 = vunpack.c.h.b16 %v750
    %v2631 = vunpack.c.l.b16 %v751
    %v2632 = vunpack.c.h.b16 %v751
    %v2633 = vunpack.c.l.b16 %v752
    %v2634 = vunpack.c.h.b16 %v752
    %v2635 = vunpack.c.l.b16 %v753
    %v2636 = vunpack.c.h.b16 %v753
    %v2637 = vunpack.c.l.b16 %v754
    %v2638 = vunpack.c.h.b16 %v754
    %v2639 = vunpack.c.l.b16 %v755
    %v2640 = vunpack.c.h.b16 %v755
    %v2641 = vunpack.c.l.b16 %v756
    %v2642 = vunpack.c.h.b16 %v756
    %v2643 = vunpack.c.l.b16 %v757
    %v2644 = vunpack.c.h.b16 %v757
    %v2645 = vunpack.c.l.b16 %v758
    %v2646 = vunpack.c.h.b16 %v758
    %v2647 = vunpack.c.l.b16 %v759
    %v2648 = vunpack.c.h.b16 %v759
    %v2649 = vunpack.c.l.b16 %v760
    %v2650 = vunpack.c.h.b16 %v760
    %v2651 = vunpack.c.l.b16 %v761
    %v2652 = vunpack.c.h.b16 %v761
    %v2653 = vunpack.c.l.b16 %v762
    %v2654 = vunpack.c.h.b16 %v762
    %v2655 = vunpack.c.l.b16 %v763
    %v2656 = vunpack.c.h.b16 %v763
    %v2657 = vunpack.c.l.b16 %v764
    %v2658 = vunpack.c.h.b16 %v764
    %v2659 = vunpack.c.l.b16 %v765
    %v2660 = vunpack.c.h.b16 %v765
    %v2661 = vunpack.c.l.b16 %v766
    %v2662 = vunpack.c.h.b16 %v766
    %v2663 = vunpack.c.l.b16 %v767
    %v2664 = vunpack.c.h.b16 %v767
    %v2665 = vunpack.c.l.b16 %v768
    %v2666 = vunpack.c.h.b16 %v768
    %v2667 = vunpack.c.l.b16 %v769
    %v2668 = vunpack.c.h.b16 %v769
    %v2669 = vunpack.c.l.b16 %v770
    %v2670 = vunpack.c.h.b16 %v770
    %v2671 = vunpack.c.l.b16 %v771
    %v2672 = vunpack.c.h.b16 %v771
    %v2673 = vunpack.c.l.b16 %v772
    %v2674 = vunpack.c.h.b16 %v772
    %v2675 = vunpack.c.l.b16 %v773
    %v2676 = vunpack.c.h.b16 %v773
    %v2677 = vunpack.c.l.b16 %v774
    %v2678 = vunpack.c.h.b16 %v774
    %v2679 = vunpack.c.l.b16 %v775
    %v2680 = vunpack.c.h.b16 %v775
    %v2681 = vunpack.c.l.b16 %v776
    %v2682 = vunpack.c.h.b16 %v776
    %v2683 = vunpack.c.l.b16 %v777
    %v2684 = vunpack.c.h.b16 %v777
    %v2685 = vunpack.c.l.b16 %v778
    %v2686 = vunpack.c.h.b16 %v778
    %v2687 = vunpack.c.l.b16 %v779
    %v2688 = vunpack.c.h.b16 %v779
    %v2689 = vunpack.c.l.b16 %v780
    %v2690 = vunpack.c.h.b16 %v780
    %v2691 = vunpack.c.l.b16 %v781
    %v2692 = vunpack.c.h.b16 %v781
    %v2693 = vunpack.c.l.b16 %v782
    %v2694 = vunpack.c.h.b16 %v782
    %v2695 = vunpack.c.l.b16 %v783
    %v2696 = vunpack.c.h.b16 %v783
    %v2697 = vunpack.c.l.b16 %v784
    %v2698 = vunpack.c.h.b16 %v784
    %v2699 = vunpack.c.l.b16 %v785
    %v2700 = vunpack.c.h.b16 %v785
    %v2701 = vunpack.c.l.b16 %v786
    %v2702 = vunpack.c.h.b16 %v786
    %v2703 = vunpack.c.l.b16 %v787
    %v2704 = vunpack.c.h.b16 %v787
    %v2705 = vunpack.c.l.b16 %v788
    %v2706 = vunpack.c.h.b16 %v788
    %v2707 = vunpack.c.l.b16 %v789
    %v2708 = vunpack.c.h.b16 %v789
    %v2709 = vunpack.c.l.b16 %v790
    %v2710 = vunpack.c.h.b16 %v790
    %v2711 = vunpack.c.l.b16 %v791
    %v2712 = vunpack.c.h.b16 %v791
    %v2713 = vunpack.c.l.b16 %v792
    %v2714 = vunpack.c.h.b16 %v792
    %v2715 = vunpack.c.l.b16 %v793
    %v2716 = vunpack.c.h.b16 %v793
    %v2717 = vunpack.c.l.b16 %v794
    %v2718 = vunpack.c.h.b16 %v794
    %v2719 = vunpack.c.l.b16 %v795
    %v2720 = vunpack.c.h.b16 %v795
    %v2721 = vunpack.c.l.b16 %v796
    %v2722 = vunpack.c.h.b16 %v796
    %v2723 = vunpack.c.l.b16 %v797
    %v2724 = vunpack.c.h.b16 %v797
    %v2725 = vunpack.c.l.b16 %v798
    %v2726 = vunpack.c.h.b16 %v798
    %v2727 = vunpack.c.l.b16 %v799
    %v2728 = vunpack.c.h.b16 %v799
    %v2729 = vunpack.c.l.b16 %v800
    %v2730 = vunpack.c.h.b16 %v800
    %v2731 = vunpack.c.l.b16 %v801
    %v2732 = vunpack.c.h.b16 %v801
    %v2733 = vunpack.c.l.b16 %v802
    %v2734 = vunpack.c.h.b16 %v802
    %v2735 = vunpack.c.l.b16 %v803
    %v2736 = vunpack.c.h.b16 %v803
    %v2737 = vunpack.c.l.b16 %v804
    %v2738 = vunpack.c.h.b16 %v804
    %v2739 = vunpack.c.l.b16 %v805
    %v2740 = vunpack.c.h.b16 %v805
    %v2741 = vunpack.c.l.b16 %v806
    %v2742 = vunpack.c.h.b16 %v806
    %v2743 = vunpack.c.l.b16 %v807
    %v2744 = vunpack.c.h.b16 %v807
    %v2745 = vunpack.c.l.b16 %v808
    %v2746 = vunpack.c.h.b16 %v808
    %v2747 = vunpack.c.l.b16 %v809
    %v2748 = vunpack.c.h.b16 %v809
    %v2749 = vunpack.c.l.b16 %v810
    %v2750 = vunpack.c.h.b16 %v810
    %v2751 = vunpack.c.l.b16 %v811
    %v2752 = vunpack.c.h.b16 %v811
    %v2753 = vunpack.c.l.b16 %v812
    %v2754 = vunpack.c.h.b16 %v812
    %v2755 = vunpack.c.l.b16 %v813
    %v2756 = vunpack.c.h.b16 %v813
    %v2757 = vunpack.c.l.b16 %v814
    %v2758 = vunpack.c.h.b16 %v814
    %v2759 = vunpack.c.l.b16 %v815
    %v2760 = vunpack.c.h.b16 %v815
    %v2761 = vunpack.c.l.b16 %v816
    %v2762 = vunpack.c.h.b16 %v816
    %v2763 = vunpack.c.l.b16 %v817
    %v2764 = vunpack.c.h.b16 %v817
    %v2765 = vunpack.c.l.b16 %v818
    %v2766 = vunpack.c.h.b16 %v818
    %v2767 = vunpack.c.l.b16 %v819
    %v2768 = vunpack.c.h.b16 %v819
    %v2769 = vunpack.c.l.b16 %v820
    %v2770 = vunpack.c.h.b16 %v820
    %v2771 = vunpack.c.l.b16 %v821
    %v2772 = vunpack.c.h.b16 %v821
    %v2773 = vunpack.c.l.b16 %v822
    %v2774 = vunpack.c.h.b16 %v822
    %v2775 = vunpack.c.l.b16 %v823
    %v2776 = vunpack.c.h.b16 %v823
    %v2777 = vunpack.c.l.b16 %v824
    %v2778 = vunpack.c.h.b16 %v824
    %v2779 = vunpack.c.l.b16 %v825
    %v2780 = vunpack.c.h.b16 %v825
    %v2781 = vunpack.c.l.b16 %v826
    %v2782 = vunpack.c.h.b16 %v826
    %v2783 = vunpack.c.l.b16 %v827
    %v2784 = vunpack.c.h.b16 %v827
    %v2785 = vunpack.c.l.b16 %v828
    %v2786 = vunpack.c.h.b16 %v828
    %v2787 = vunpack.c.l.b16 %v829
    %v2788 = vunpack.c.h.b16 %v829
    %v2789 = vunpack.c.l.b16 %v830
    %v2790 = vunpack.c.h.b16 %v830
    %v2791 = vunpack.c.l.b16 %v831
    %v2792 = vunpack.c.h.b16 %v831
    %v2793 = vunpack.c.l.b16 %v832
    %v2794 = vunpack.c.h.b16 %v832
    %v2795 = vunpack.c.l.b16 %v833
    %v2796 = vunpack.c.h.b16 %v833
    %v2797 = vunpack.c.l.b16 %v834
    %v2798 = vunpack.c.h.b16 %v834
    %v2799 = vunpack.c.l.b16 %v835
    %v2800 = vunpack.c.h.b16 %v835
    %v2801 = vunpack.c.l.b16 %v836
    %v2802 = vunpack.c.h.b16 %v836
    %v2803 = vunpack.c.l.b16 %v837
    %v2804 = vunpack.c.h.b16 %v837
    %v2805 = vunpack.c.l.b16 %v838
    %v2806 = vunpack.c.h.b16 %v838
    %v2807 = vunpack.c.l.b16 %v839
    %v2808 = vunpack.c.h.b16 %v839
    %v2809 = vunpack.c.l.b16 %v840
    %v2810 = vunpack.c.h.b16 %v840
    %v2811 = vunpack.c.l.b16 %v841
    %v2812 = vunpack.c.h.b16 %v841
    %v2813 = vunpack.c.l.b16 %v842
    %v2814 = vunpack.c.h.b16 %v842
    %v2815 = vunpack.c.l.b16 %v843
    %v2816 = vunpack.c.h.b16 %v843
    %v2817 = vunpack.c.l.b16 %v844
    %v2818 = vunpack.c.h.b16 %v844
    %v2819 = vunpack.c.l.b16 %v845
    %v2820 = vunpack.c.h.b16 %v845
    %v2821 = vunpack.c.l.b16 %v846
    %v2822 = vunpack.c.h.b16 %v846
    %v2823 = vunpack.c.l.b16 %v847
    %v2824 = vunpack.c.h.b16 %v847
    %v2825 = vunpack.c.l.b16 %v848
    %v2826 = vunpack.c.h.b16 %v848
    %v2827 = vunpack.c.l.b16 %v849
    %v2828 = vunpack.c.h.b16 %v849
    %v2829 = vunpack.c.l.b16 %v850
    %v2830 = vunpack.c.h.b16 %v850
    %v2831 = vunpack.c.l.b16 %v851
    %v2832 = vunpack.c.h.b16 %v851
    %v2833 = vunpack.c.l.b16 %v852
    %v2834 = vunpack.c.h.b16 %v852
    %v2835 = vunpack.c.l.b16 %v853
    %v2836 = vunpack.c.h.b16 %v853
    %v2837 = vunpack.c.l.b16 %v854
    %v2838 = vunpack.c.h.b16 %v854
    %v2839 = vunpack.c.l.b16 %v855
    %v2840 = vunpack.c.h.b16 %v855
    %v2841 = vunpack.c.l.b16 %v856
    %v2842 = vunpack.c.h.b16 %v856
    %v2843 = vunpack.c.l.b16 %v857
    %v2844 = vunpack.c.h.b16 %v857
    %v2845 = vunpack.c.l.b16 %v858
    %v2846 = vunpack.c.h.b16 %v858
    %v2847 = vunpack.c.l.b16 %v859
    %v2848 = vunpack.c.h.b16 %v859
    %v2849 = vunpack.c.l.b16 %v860
    %v2850 = vunpack.c.h.b16 %v860
    %v2851 = vunpack.c.l.b16 %v861
    %v2852 = vunpack.c.h.b16 %v861
    %v2853 = vunpack.c.l.b16 %v862
    %v2854 = vunpack.c.h.b16 %v862
    %v2855 = vunpack.c.l.b16 %v863
    %v2856 = vunpack.c.h.b16 %v863
    %v2857 = vunpack.c.l.b16 %v864
    %v2858 = vunpack.c.h.b16 %v864
    %v2859 = vunpack.c.l.b16 %v865
    %v2860 = vunpack.c.h.b16 %v865
    %v2861 = vunpack.c.l.b16 %v866
    %v2862 = vunpack.c.h.b16 %v866
    %v2863 = vunpack.c.l.b16 %v867
    %v2864 = vunpack.c.h.b16 %v867
    %v2865 = vunpack.c.l.b16 %v868
    %v2866 = vunpack.c.h.b16 %v868
    %v2867 = vunpack.c.l.b16 %v869
    %v2868 = vunpack.c.h.b16 %v869
    %v2869 = vunpack.c.l.b16 %v870
    %v2870 = vunpack.c.h.b16 %v870
    %v2871 = vunpack.c.l.b16 %v871
    %v2872 = vunpack.c.h.b16 %v871
    %v2873 = vunpack.c.l.b16 %v872
    %v2874 = vunpack.c.h.b16 %v872
    %v2875 = vunpack.c.l.b16 %v873
    %v2876 = vunpack.c.h.b16 %v873
    %v2877 = vunpack.c.l.b16 %v874
    %v2878 = vunpack.c.h.b16 %v874
    %v2879 = vunpack.c.l.b16 %v875
    %v2880 = vunpack.c.h.b16 %v875
    %v2881 = vunpack.c.l.b16 %v876
    %v2882 = vunpack.c.h.b16 %v876
    %v2883 = vunpack.c.l.b16 %v877
    %v2884 = vunpack.c.h.b16 %v877
    %v2885 = vunpack.c.l.b16 %v878
    %v2886 = vunpack.c.h.b16 %v878
    %v2887 = vunpack.c.l.b16 %v879
    %v2888 = vunpack.c.h.b16 %v879
    %v2889 = vunpack.c.l.b16 %v880
    %v2890 = vunpack.c.h.b16 %v880
    %v2891 = vunpack.c.l.b16 %v881
    %v2892 = vunpack.c.h.b16 %v881
    %v2893 = vunpack.c.l.b16 %v882
    %v2894 = vunpack.c.h.b16 %v882
    %v2895 = vunpack.c.l.b16 %v883
    %v2896 = vunpack.c.h.b16 %v883
    %v2897 = vunpack.c.l.b16 %v884
    %v2898 = vunpack.c.h.b16 %v884
    %v2899 = vunpack.c.l.b16 %v885
    %v2900 = vunpack.c.h.b16 %v885
    %v2901 = vunpack.c.l.b16 %v886
    %v2902 = vunpack.c.h.b16 %v886
    %v2903 = vunpack.c.l.b16 %v887
    %v2904 = vunpack.c.h.b16 %v887
    %v2905 = vunpack.c.l.b16 %v888
    %v2906 = vunpack.c.h.b16 %v888
    %v2907 = vunpack.c.l.b16 %v889
    %v2908 = vunpack.c.h.b16 %v889
    %v2909 = vunpack.c.l.b16 %v890
    %v2910 = vunpack.c.h.b16 %v890
    %v2911 = vunpack.c.l.b16 %v891
    %v2912 = vunpack.c.h.b16 %v891
    %v2913 = vunpack.c.l.b16 %v892
    %v2914 = vunpack.c.h.b16 %v892
    %v2915 = vunpack.c.l.b16 %v893
    %v2916 = vunpack.c.h.b16 %v893
    %v2917 = vunpack.c.l.b16 %v894
    %v2918 = vunpack.c.h.b16 %v894
    %v2919 = vunpack.c.l.b16 %v895
    %v2920 = vunpack.c.h.b16 %v895
    %v2921 = vunpack.c.l.b16 %v896
    %v2922 = vunpack.c.h.b16 %v896
    %v2923 = vunpack.c.l.b16 %v897
    %v2924 = vunpack.c.h.b16 %v897
    %v2925 = vunpack.c.l.b16 %v898
    %v2926 = vunpack.c.h.b16 %v898
    %v2927 = vunpack.c.l.b16 %v899
    %v2928 = vunpack.c.h.b16 %v899
    %v2929 = vunpack.c.l.b16 %v900
    %v2930 = vunpack.c.h.b16 %v900
    %v2931 = vunpack.c.l.b16 %v901
    %v2932 = vunpack.c.h.b16 %v901
    %v2933 = vunpack.c.l.b16 %v902
    %v2934 = vunpack.c.h.b16 %v902
    %v2935 = vunpack.c.l.b16 %v903
    %v2936 = vunpack.c.h.b16 %v903
    %v2937 = vunpack.c.l.b16 %v904
    %v2938 = vunpack.c.h.b16 %v904
    %v2939 = vunpack.c.l.b16 %v905
    %v2940 = vunpack.c.h.b16 %v905
    %v2941 = vunpack.c.l.b16 %v906
    %v2942 = vunpack.c.h.b16 %v906
    %v2943 = vunpack.c.l.b16 %v907
    %v2944 = vunpack.c.h.b16 %v907
    %v2945 = vunpack.c.l.b16 %v908
    %v2946 = vunpack.c.h.b16 %v908
    %v2947 = vunpack.c.l.b16 %v909
    %v2948 = vunpack.c.h.b16 %v909
    %v2949 = vunpack.c.l.b16 %v910
    %v2950 = vunpack.c.h.b16 %v910
    %v2951 = vunpack.c.l.b16 %v911
    %v2952 = vunpack.c.h.b16 %v911
    %v2953 = vunpack.c.l.b16 %v912
    %v2954 = vunpack.c.h.b16 %v912
    %v2955 = vunpack.c.l.b16 %v913
    %v2956 = vunpack.c.h.b16 %v913
    %v2957 = vunpack.c.l.b16 %v914
    %v2958 = vunpack.c.h.b16 %v914
    %v2959 = vunpack.c.l.b16 %v915
    %v2960 = vunpack.c.h.b16 %v915
    %v2961 = vunpack.c.l.b16 %v916
    %v2962 = vunpack.c.h.b16 %v916
    %v2963 = vunpack.c.l.b16 %v917
    %v2964 = vunpack.c.h.b16 %v917
    %v2965 = vunpack.c.l.b16 %v918
    %v2966 = vunpack.c.h.b16 %v918
    %v2967 = vunpack.c.l.b16 %v919
    %v2968 = vunpack.c.h.b16 %v919
    %v2969 = vunpack.c.l.b16 %v920
    %v2970 = vunpack.c.h.b16 %v920
    %v2971 = vunpack.c.l.b16 %v921
    %v2972 = vunpack.c.h.b16 %v921
    %v2973 = vunpack.c.l.b16 %v922
    %v2974 = vunpack.c.h.b16 %v922
    %v2975 = vunpack.c.l.b16 %v923
    %v2976 = vunpack.c.h.b16 %v923
    %v2977 = vunpack.c.l.b16 %v924
    %v2978 = vunpack.c.h.b16 %v924
    %v2979 = vunpack.c.l.b16 %v925
    %v2980 = vunpack.c.h.b16 %v925
    %v2981 = vunpack.c.l.b16 %v926
    %v2982 = vunpack.c.h.b16 %v926
    %v2983 = vunpack.c.l.b16 %v927
    %v2984 = vunpack.c.h.b16 %v927
    %v2985 = vunpack.c.l.b16 %v928
    %v2986 = vunpack.c.h.b16 %v928
    %v2987 = vunpack.c.l.b16 %v929
    %v2988 = vunpack.c.h.b16 %v929
    %v2989 = vunpack.c.l.b16 %v930
    %v2990 = vunpack.c.h.b16 %v930
    %v2991 = vunpack.c.l.b16 %v931
    %v2992 = vunpack.c.h.b16 %v931
    %v2993 = vunpack.c.l.b16 %v932
    %v2994 = vunpack.c.h.b16 %v932
    %v2995 = vunpack.c.l.b16 %v933
    %v2996 = vunpack.c.h.b16 %v933
    %v2997 = vunpack.c.l.b16 %v934
    %v2998 = vunpack.c.h.b16 %v934
    %v2999 = vunpack.c.l.b16 %v935
    %v3000 = vunpack.c.h.b16 %v935
    %v3001 = vunpack.c.l.b16 %v936
    %v3002 = vunpack.c.h.b16 %v936
    %v3003 = vunpack.c.l.b16 %v937
    %v3004 = vunpack.c.h.b16 %v937
    %v3005 = vunpack.c.l.b16 %v938
    %v3006 = vunpack.c.h.b16 %v938
    %v3007 = vunpack.c.l.b16 %v939
    %v3008 = vunpack.c.h.b16 %v939
    %v3009 = vunpack.c.l.b16 %v940
    %v3010 = vunpack.c.h.b16 %v940
    %v3011 = vunpack.c.l.b16 %v941
    %v3012 = vunpack.c.h.b16 %v941
    %v3013 = vunpack.c.l.b16 %v942
    %v3014 = vunpack.c.h.b16 %v942
    %v3015 = vunpack.c.l.b16 %v943
    %v3016 = vunpack.c.h.b16 %v943
    %v3017 = vunpack.c.l.b16 %v944
    %v3018 = vunpack.c.h.b16 %v944
    %v3019 = vunpack.c.l.b16 %v945
    %v3020 = vunpack.c.h.b16 %v945
    %v3021 = vunpack.c.l.b16 %v946
    %v3022 = vunpack.c.h.b16 %v946
    %v3023 = vunpack.c.l.b16 %v947
    %v3024 = vunpack.c.h.b16 %v947
    %v3025 = vunpack.c.l.b16 %v948
    %v3026 = vunpack.c.h.b16 %v948
    %v3027 = vunpack.c.l.b16 %v949
    %v3028 = vunpack.c.h.b16 %v949
    %v3029 = vunpack.c.l.b16 %v950
    %v3030 = vunpack.c.h.b16 %v950
    %v3031 = vunpack.c.l.b16 %v951
    %v3032 = vunpack.c.h.b16 %v951
    %v3033 = vunpack.c.l.b16 %v952
    %v3034 = vunpack.c.h.b16 %v952
    %v3035 = vunpack.c.l.b16 %v953
    %v3036 = vunpack.c.h.b16 %v953
    %v3037 = vunpack.c.l.b16 %v954
    %v3038 = vunpack.c.h.b16 %v954
    %v3039 = vunpack.c.l.b16 %v955
    %v3040 = vunpack.c.h.b16 %v955
    %v3041 = vunpack.c.l.b16 %v956
    %v3042 = vunpack.c.h.b16 %v956
    %v3043 = vunpack.c.l.b16 %v957
    %v3044 = vunpack.c.h.b16 %v957
    %v3045 = vunpack.c.l.b16 %v958
    %v3046 = vunpack.c.h.b16 %v958
    %v3047 = vunpack.c.l.b16 %v959
    %v3048 = vunpack.c.h.b16 %v959
    %v3049 = vunpack.c.l.b16 %v960
    %v3050 = vunpack.c.h.b16 %v960
    %v3051 = vunpack.c.l.b16 %v961
    %v3052 = vunpack.c.h.b16 %v961
    %v3053 = vunpack.c.l.b16 %v962
    %v3054 = vunpack.c.h.b16 %v962
    %v3055 = vunpack.c.l.b16 %v963
    %v3056 = vunpack.c.h.b16 %v963
    %v3057 = vunpack.c.l.b16 %v964
    %v3058 = vunpack.c.h.b16 %v964
    %v3059 = vunpack.c.l.b16 %v965
    %v3060 = vunpack.c.h.b16 %v965
    %v3061 = vunpack.c.l.b16 %v966
    %v3062 = vunpack.c.h.b16 %v966
    %v3063 = vunpack.c.l.b16 %v967
    %v3064 = vunpack.c.h.b16 %v967
    %v3065 = vunpack.c.l.b16 %v968
    %v3066 = vunpack.c.h.b16 %v968
    %v3067 = vunpack.c.l.b16 %v969
    %v3068 = vunpack.c.h.b16 %v969
    %v3069 = vunpack.c.l.b16 %v970
    %v3070 = vunpack.c.h.b16 %v970
    %v3071 = vunpack.c.l.b16 %v971
    %v3072 = vunpack.c.h.b16 %v971
    %v3073 = vunpack.c.l.b16 %v972
    %v3074 = vunpack.c.h.b16 %v972
    %v3075 = vunpack.c.l.b16 %v973
    %v3076 = vunpack.c.h.b16 %v973
    %v3077 = vunpack.c.l.b16 %v974
    %v3078 = vunpack.c.h.b16 %v974
    %v3079 = vunpack.c.l.b16 %v975
    %v3080 = vunpack.c.h.b16 %v975
    %v3081 = vunpack.c.l.b16 %v976
    %v3082 = vunpack.c.h.b16 %v976
    %v3083 = vunpack.c.l.b16 %v977
    %v3084 = vunpack.c.h.b16 %v977
    %v3085 = vunpack.c.l.b16 %v978
    %v3086 = vunpack.c.h.b16 %v978
    %v3087 = vunpack.c.l.b16 %v979
    %v3088 = vunpack.c.h.b16 %v979
    %v3089 = vunpack.c.l.b16 %v980
    %v3090 = vunpack.c.h.b16 %v980
    %v3091 = vunpack.c.l.b16 %v981
    %v3092 = vunpack.c.h.b16 %v981
    %v3093 = vunpack.c.l.b16 %v982
    %v3094 = vunpack.c.h.b16 %v982
    %v3095 = vunpack.c.l.b16 %v983
    %v3096 = vunpack.c.h.b16 %v983
    %v3097 = vunpack.c.l.b16 %v984
    %v3098 = vunpack.c.h.b16 %v984
    %v3099 = vunpack.c.l.b16 %v985
    %v3100 = vunpack.c.h.b16 %v985
    %v3101 = vunpack.c.l.b16 %v986
    %v3102 = vunpack.c.h.b16 %v986
    %v3103 = vunpack.c.l.b16 %v987
    %v3104 = vunpack.c.h.b16 %v987
    %v3105 = vunpack.c.l.b16 %v988
    %v3106 = vunpack.c.h.b16 %v988
    %v3107 = vunpack.c.l.b16 %v989
    %v3108 = vunpack.c.h.b16 %v989
    %v3109 = vunpack.c.l.b16 %v990
    %v3110 = vunpack.c.h.b16 %v990
    %v3111 = vunpack.c.l.b16 %v991
    %v3112 = vunpack.c.h.b16 %v991
    %v3113 = vunpack.c.l.b16 %v992
    %v3114 = vunpack.c.h.b16 %v992
    %v3115 = vunpack.c.l.b16 %v993
    %v3116 = vunpack.c.h.b16 %v993
    %v3117 = vunpack.c.l.b16 %v994
    %v3118 = vunpack.c.h.b16 %v994
    %v3119 = vunpack.c.l.b16 %v995
    %v3120 = vunpack.c.h.b16 %v995
    %v3121 = vunpack.c.l.b16 %v996
    %v3122 = vunpack.c.h.b16 %v996
    %v3123 = vunpack.c.l.b16 %v997
    %v3124 = vunpack.c.h.b16 %v997
    %v3125 = vunpack.c.l.b16 %v998
    %v3126 = vunpack.c.h.b16 %v998
    %v3127 = vunpack.c.l.b16 %v999
    %v3128 = vunpack.c.h.b16 %v999
    %v3129 = vunpack.c.l.b16 %v1000
    %v3130 = vunpack.c.h.b16 %v1000
    %v3131 = vunpack.c.l.b16 %v1001
    %v3132 = vunpack.c.h.b16 %v1001
    %v3133 = vunpack.c.l.b16 %v1002
    %v3134 = vunpack.c.h.b16 %v1002
    %v3135 = vunpack.c.l.b16 %v1003
    %v3136 = vunpack.c.h.b16 %v1003
    %v3137 = vunpack.c.l.b16 %v1004
    %v3138 = vunpack.c.h.b16 %v1004
    %v3139 = vunpack.c.l.b16 %v1005
    %v3140 = vunpack.c.h.b16 %v1005
    %v3141 = vunpack.c.l.b16 %v1006
    %v3142 = vunpack.c.h.b16 %v1006
    %v3143 = vunpack.c.l.b16 %v1007
    %v3144 = vunpack.c.h.b16 %v1007
    %v3145 = vunpack.c.l.b16 %v1008
    %v3146 = vunpack.c.h.b16 %v1008
    %v3147 = vunpack.c.l.b16 %v1009
    %v3148 = vunpack.c.h.b16 %v1009
    %v3149 = vunpack.c.l.b16 %v1010
    %v3150 = vunpack.c.h.b16 %v1010
    %v3151 = vunpack.c.l.b16 %v1011
    %v3152 = vunpack.c.h.b16 %v1011
    %v3153 = vunpack.c.l.b16 %v1012
    %v3154 = vunpack.c.h.b16 %v1012
    %v3155 = vunpack.c.l.b16 %v1013
    %v3156 = vunpack.c.h.b16 %v1013
    %v3157 = vunpack.c.l.b16 %v1014
    %v3158 = vunpack.c.h.b16 %v1014
    %v3159 = vunpack.c.l.b16 %v1015
    %v3160 = vunpack.c.h.b16 %v1015
    %v3161 = vunpack.c.l.b16 %v1016
    %v3162 = vunpack.c.h.b16 %v1016
    %v3163 = vunpack.c.l.b16 %v1017
    %v3164 = vunpack.c.h.b16 %v1017
    %v3165 = vunpack.c.l.b16 %v1018
    %v3166 = vunpack.c.h.b16 %v1018
    %v3167 = vunpack.c.l.b16 %v1019
    %v3168 = vunpack.c.h.b16 %v1019
    %v3169 = vunpack.c.l.b16 %v1020
    %v3170 = vunpack.c.h.b16 %v1020
    %v3171 = vunpack.c.l.b16 %v1021
    %v3172 = vunpack.c.h.b16 %v1021
    %v3173 = vunpack.c.l.b16 %v1022
    %v3174 = vunpack.c.h.b16 %v1022
    %v3175 = vunpack.c.l.b16 %v1023
    %v3176 = vunpack.c.h.b16 %v1023
    %v3177 = vunpack.c.l.b16 %v1024
    %v3178 = vunpack.c.h.b16 %v1024
    %v3179 = vunpack.c.l.b16 %v1025
    %v3180 = vunpack.c.h.b16 %v1025
    %v3181 = vunpack.c.l.b16 %v1026
    %v3182 = vunpack.c.h.b16 %v1026
    %v3183 = vunpack.c.l.b16 %v1027
    %v3184 = vunpack.c.h.b16 %v1027
    %v3185 = vunpack.c.l.b16 %v1028
    %v3186 = vunpack.c.h.b16 %v1028
    %v3187 = vunpack.c.l.b16 %v1029
    %v3188 = vunpack.c.h.b16 %v1029
    %v3189 = vunpack.c.l.b16 %v1030
    %v3190 = vunpack.c.h.b16 %v1030
    %v3191 = vunpack.c.l.b16 %v1031
    %v3192 = vunpack.c.h.b16 %v1031
    %v3193 = vunpack.c.l.b16 %v1032
    %v3194 = vunpack.c.h.b16 %v1032
    %v3195 = vunpack.c.l.b16 %v1033
    %v3196 = vunpack.c.h.b16 %v1033
    %v3197 = vunpack.c.l.b16 %v1034
    %v3198 = vunpack.c.h.b16 %v1034
    %v3199 = vunpack.c.l.b16 %v1035
    %v3200 = vunpack.c.h.b16 %v1035
    %v3201 = vunpack.c.l.b16 %v1036
    %v3202 = vunpack.c.h.b16 %v1036
    %v3203 = vunpack.c.l.b16 %v1037
    %v3204 = vunpack.c.h.b16 %v1037
    %v3205 = vunpack.c.l.b16 %v1038
    %v3206 = vunpack.c.h.b16 %v1038
    %v3207 = vunpack.c.l.b16 %v1039
    %v3208 = vunpack.c.h.b16 %v1039
    %v3209 = vunpack.c.l.b16 %v1040
    %v3210 = vunpack.c.h.b16 %v1040
    %v3211 = vunpack.c.l.b16 %v1041
    %v3212 = vunpack.c.h.b16 %v1041
    %v3213 = vunpack.c.l.b16 %v1042
    %v3214 = vunpack.c.h.b16 %v1042
    %v3215 = vunpack.c.l.b16 %v1043
    %v3216 = vunpack.c.h.b16 %v1043
    %v3217 = vunpack.c.l.b16 %v1044
    %v3218 = vunpack.c.h.b16 %v1044
    %v3219 = vunpack.c.l.b16 %v1045
    %v3220 = vunpack.c.h.b16 %v1045
    %v3221 = vunpack.c.l.b16 %v1046
    %v3222 = vunpack.c.h.b16 %v1046
    %v3223 = vunpack.c.l.b16 %v1047
    %v3224 = vunpack.c.h.b16 %v1047
    %v3225 = vunpack.c.l.b16 %v1048
    %v3226 = vunpack.c.h.b16 %v1048
    %v3227 = vunpack.c.l.b16 %v1049
    %v3228 = vunpack.c.h.b16 %v1049
    %v3229 = vunpack.c.l.b16 %v1050
    %v3230 = vunpack.c.h.b16 %v1050
    %v3231 = vunpack.c.l.b16 %v1051
    %v3232 = vunpack.c.h.b16 %v1051
    %v3233 = vunpack.c.l.b16 %v1052
    %v3234 = vunpack.c.h.b16 %v1052
    %v3235 = vunpack.c.l.b16 %v1053
    %v3236 = vunpack.c.h.b16 %v1053
    %v3237 = vunpack.c.l.b16 %v1054
    %v3238 = vunpack.c.h.b16 %v1054
    %v3239 = vunpack.c.l.b16 %v1055
    %v3240 = vunpack.c.h.b16 %v1055
    %v3241 = vunpack.c.l.b16 %v1056
    %v3242 = vunpack.c.h.b16 %v1056
    %v3243 = vunpack.c.l.b16 %v1057
    %v3244 = vunpack.c.h.b16 %v1057
    %v3245 = vunpack.c.l.b16 %v1058
    %v3246 = vunpack.c.h.b16 %v1058
    %v3247 = vunpack.c.l.b16 %v1059
    %v3248 = vunpack.c.h.b16 %v1059
    %v3249 = vunpack.c.l.b16 %v1060
    %v3250 = vunpack.c.h.b16 %v1060
    %v3251 = vunpack.c.l.b16 %v1061
    %v3252 = vunpack.c.h.b16 %v1061
    %v3253 = vunpack.c.l.b16 %v1062
    %v3254 = vunpack.c.h.b16 %v1062
    %v3255 = vunpack.c.l.b16 %v1063
    %v3256 = vunpack.c.h.b16 %v1063
    %v3257 = vunpack.c.l.b16 %v1064
    %v3258 = vunpack.c.h.b16 %v1064
    %v3259 = vunpack.c.l.b16 %v1065
    %v3260 = vunpack.c.h.b16 %v1065
    %v3261 = vunpack.c.l.b16 %v1066
    %v3262 = vunpack.c.h.b16 %v1066
    %v3263 = vunpack.c.l.b16 %v1067
    %v3264 = vunpack.c.h.b16 %v1067
    %v3265 = vunpack.c.l.b16 %v1068
    %v3266 = vunpack.c.h.b16 %v1068
    %v3267 = vunpack.c.l.b16 %v1069
    %v3268 = vunpack.c.h.b16 %v1069
    %v3269 = vunpack.c.l.b16 %v1070
    %v3270 = vunpack.c.h.b16 %v1070
    %v3271 = vunpack.c.l.b16 %v1071
    %v3272 = vunpack.c.h.b16 %v1071
    %v3273 = vunpack.c.l.b16 %v1072
    %v3274 = vunpack.c.h.b16 %v1072
    %v3275 = vunpack.c.l.b16 %v1073
    %v3276 = vunpack.c.h.b16 %v1073
    %v3277 = vunpack.c.l.b16 %v1074
    %v3278 = vunpack.c.h.b16 %v1074
    %v3279 = vunpack.c.l.b16 %v1075
    %v3280 = vunpack.c.h.b16 %v1075
    %v3281 = vunpack.c.l.b16 %v1076
    %v3282 = vunpack.c.h.b16 %v1076
    %v3283 = vunpack.c.l.b16 %v1077
    %v3284 = vunpack.c.h.b16 %v1077
    %v3285 = vunpack.c.l.b16 %v1078
    %v3286 = vunpack.c.h.b16 %v1078
    %v3287 = vunpack.c.l.b16 %v1079
    %v3288 = vunpack.c.h.b16 %v1079
    %v3289 = vunpack.c.l.b16 %v1080
    %v3290 = vunpack.c.h.b16 %v1080
    %v3291 = vunpack.c.l.b16 %v1081
    %v3292 = vunpack.c.h.b16 %v1081
    %v3293 = vunpack.c.l.b16 %v1082
    %v3294 = vunpack.c.h.b16 %v1082
    %v3295 = vunpack.c.l.b16 %v1083
    %v3296 = vunpack.c.h.b16 %v1083
    %v3297 = vunpack.c.l.b16 %v1084
    %v3298 = vunpack.c.h.b16 %v1084
    %v3299 = vunpack.c.l.b16 %v1085
    %v3300 = vunpack.c.h.b16 %v1085
    %v3301 = vunpack.c.l.b16 %v1086
    %v3302 = vunpack.c.h.b16 %v1086
    %v3303 = vunpack.c.l.b16 %v1087
    %v3304 = vunpack.c.h.b16 %v1087
    %v3305 = vunpack.c.l.b16 %v1088
    %v3306 = vunpack.c.h.b16 %v1088
    %v3307 = vunpack.c.l.b16 %v1089
    %v3308 = vunpack.c.h.b16 %v1089
    %v3309 = vunpack.c.l.b16 %v1090
    %v3310 = vunpack.c.h.b16 %v1090
    %v3311 = vunpack.c.l.b16 %v1091
    %v3312 = vunpack.c.h.b16 %v1091
    %v3313 = vunpack.c.l.b16 %v1092
    %v3314 = vunpack.c.h.b16 %v1092
    %v3315 = vunpack.c.l.b16 %v1093
    %v3316 = vunpack.c.h.b16 %v1093
    %v3317 = vunpack.c.l.b16 %v1094
    %v3318 = vunpack.c.h.b16 %v1094
    %v3319 = vunpack.c.l.b16 %v1095
    %v3320 = vunpack.c.h.b16 %v1095
    %v3321 = vunpack.c.l.b16 %v1096
    %v3322 = vunpack.c.h.b16 %v1096
    %v3323 = vunpack.c.l.b16 %v1097
    %v3324 = vunpack.c.h.b16 %v1097
    %v3325 = vunpack.c.l.b16 %v1098
    %v3326 = vunpack.c.h.b16 %v1098
    %v3327 = vunpack.c.l.b16 %v1099
    %v3328 = vunpack.c.h.b16 %v1099
    %v3329 = vunpack.c.l.b16 %v1100
    %v3330 = vunpack.c.h.b16 %v1100
    %v3331 = vunpack.c.l.b16 %v1101
    %v3332 = vunpack.c.h.b16 %v1101
    %v3333 = vunpack.c.l.b16 %v1102
    %v3334 = vunpack.c.h.b16 %v1102
    %v3335 = vunpack.c.l.b16 %v1103
    %v3336 = vunpack.c.h.b16 %v1103
    %v3337 = vunpack.c.l.b16 %v1104
    %v3338 = vunpack.c.h.b16 %v1104
    %v3339 = vunpack.c.l.b16 %v1105
    %v3340 = vunpack.c.h.b16 %v1105
    %v3341 = vunpack.c.l.b16 %v1106
    %v3342 = vunpack.c.h.b16 %v1106
    %v3343 = vunpack.c.l.b16 %v1107
    %v3344 = vunpack.c.h.b16 %v1107
    %v3345 = vunpack.c.l.b16 %v1108
    %v3346 = vunpack.c.h.b16 %v1108
    %v3347 = vunpack.c.l.b16 %v1109
    %v3348 = vunpack.c.h.b16 %v1109
    %v3349 = vunpack.c.l.b16 %v1110
    %v3350 = vunpack.c.h.b16 %v1110
    %v3351 = vunpack.c.l.b16 %v1111
    %v3352 = vunpack.c.h.b16 %v1111
    %v3353 = vunpack.c.l.b16 %v1112
    %v3354 = vunpack.c.h.b16 %v1112
    %v3355 = vunpack.c.l.b16 %v1113
    %v3356 = vunpack.c.h.b16 %v1113
    %v3357 = vunpack.c.l.b16 %v1114
    %v3358 = vunpack.c.h.b16 %v1114
    %v3359 = vunpack.c.l.b16 %v1115
    %v3360 = vunpack.c.h.b16 %v1115
    %v3361 = vunpack.c.l.b16 %v1116
    %v3362 = vunpack.c.h.b16 %v1116
    %v3363 = vunpack.c.l.b16 %v1117
    %v3364 = vunpack.c.h.b16 %v1117
    %v3365 = vunpack.c.l.b16 %v1118
    %v3366 = vunpack.c.h.b16 %v1118
    %v3367 = vunpack.c.l.b16 %v1119
    %v3368 = vunpack.c.h.b16 %v1119
    %v3369 = vunpack.c.l.b16 %v1120
    %v3370 = vunpack.c.h.b16 %v1120
    %v3371 = vunpack.c.l.b16 %v1121
    %v3372 = vunpack.c.h.b16 %v1121
    %v3373 = vunpack.c.l.b16 %v1122
    %v3374 = vunpack.c.h.b16 %v1122
    %v3375 = vunpack.c.l.b16 %v1123
    %v3376 = vunpack.c.h.b16 %v1123
    %v3377 = vunpack.c.l.b16 %v1124
    %v3378 = vunpack.c.h.b16 %v1124
    %v3379 = vunpack.c.l.b16 %v1125
    %v3380 = vunpack.c.h.b16 %v1125
    %v3381 = vunpack.c.l.b16 %v1126
    %v3382 = vunpack.c.h.b16 %v1126
    %v3383 = vunpack.c.l.b16 %v1127
    %v3384 = vunpack.c.h.b16 %v1127
    %v3385 = vunpack.c.l.b16 %v1128
    %v3386 = vunpack.c.h.b16 %v1128
    %v3387 = vunpack.c.l.b16 %v1129
    %v3388 = vunpack.c.h.b16 %v1129
    %v3389 = vunpack.c.l.b16 %v1130
    %v3390 = vunpack.c.h.b16 %v1130
    %v3391 = vunpack.c.l.b16 %v1131
    %v3392 = vunpack.c.h.b16 %v1131
    %v3393 = vunpack.c.l.b16 %v1132
    %v3394 = vunpack.c.h.b16 %v1132
    %v3395 = vunpack.c.l.b16 %v1133
    %v3396 = vunpack.c.h.b16 %v1133
    %v3397 = vunpack.c.l.b16 %v1134
    %v3398 = vunpack.c.h.b16 %v1134
    %v3399 = vunpack.c.l.b16 %v1135
    %v3400 = vunpack.c.h.b16 %v1135
    %v3401 = vunpack.c.l.b16 %v1136
    %v3402 = vunpack.c.h.b16 %v1136
    %v3403 = vunpack.c.l.b16 %v1137
    %v3404 = vunpack.c.h.b16 %v1137
    %v3405 = vunpack.c.l.b16 %v1138
    %v3406 = vunpack.c.h.b16 %v1138
    %v3407 = vunpack.c.l.b16 %v1139
    %v3408 = vunpack.c.h.b16 %v1139
    %v3409 = vunpack.c.l.b16 %v1140
    %v3410 = vunpack.c.h.b16 %v1140
    %v3411 = vunpack.c.l.b16 %v1141
    %v3412 = vunpack.c.h.b16 %v1141
    %v3413 = vunpack.c.l.b16 %v1142
    %v3414 = vunpack.c.h.b16 %v1142
    %v3415 = vunpack.c.l.b16 %v1143
    %v3416 = vunpack.c.h.b16 %v1143
    %v3417 = vunpack.c.l.b16 %v1144
    %v3418 = vunpack.c.h.b16 %v1144
    %v3419 = vunpack.c.l.b16 %v1145
    %v3420 = vunpack.c.h.b16 %v1145
    %v3421 = vunpack.c.l.b16 %v1146
    %v3422 = vunpack.c.h.b16 %v1146
    %v3423 = vunpack.c.l.b16 %v1147
    %v3424 = vunpack.c.h.b16 %v1147
    %v3425 = vunpack.c.l.b16 %v1148
    %v3426 = vunpack.c.h.b16 %v1148
    %v3427 = vunpack.c.l.b16 %v1149
    %v3428 = vunpack.c.h.b16 %v1149
    %v3429 = vunpack.c.l.b16 %v1150
    %v3430 = vunpack.c.h.b16 %v1150
    %v3431 = vunpack.c.l.b16 %v1151
    %v3432 = vunpack.c.h.b16 %v1151
    %v3433 = vunpack.c.l.b16 %v1152
    %v3434 = vunpack.c.h.b16 %v1152
    %v3435 = vunpack.c.l.b16 %v1153
    %v3436 = vunpack.c.h.b16 %v1153
    %v3437 = vunpack.c.l.b16 %v1154
    %v3438 = vunpack.c.h.b16 %v1154
    %v3439 = vunpack.c.l.b16 %v1155
    %v3440 = vunpack.c.h.b16 %v1155
    %v3441 = vunpack.c.l.b16 %v1156
    %v3442 = vunpack.c.h.b16 %v1156
    %v3443 = vunpack.c.l.b16 %v1157
    %v3444 = vunpack.c.h.b16 %v1157
    %v3445 = vunpack.c.l.b16 %v1158
    %v3446 = vunpack.c.h.b16 %v1158
    %v3447 = vunpack.c.l.b16 %v1159
    %v3448 = vunpack.c.h.b16 %v1159
    %v3449 = vunpack.c.l.b16 %v1160
    %v3450 = vunpack.c.h.b16 %v1160
    %v3451 = vunpack.c.l.b16 %v1161
    %v3452 = vunpack.c.h.b16 %v1161
    %v3453 = vunpack.c.l.b16 %v1162
    %v3454 = vunpack.c.h.b16 %v1162
    %v3455 = vunpack.c.l.b16 %v1163
    %v3456 = vunpack.c.h.b16 %v1163
    %v3457 = vunpack.c.l.b16 %v1164
    %v3458 = vunpack.c.h.b16 %v1164
    %v3459 = vunpack.c.l.b16 %v1165
    %v3460 = vunpack.c.h.b16 %v1165
    %v3461 = vunpack.c.l.b16 %v1166
    %v3462 = vunpack.c.h.b16 %v1166
    %v3463 = vunpack.c.l.b16 %v1167
    %v3464 = vunpack.c.h.b16 %v1167
    %v3465 = vunpack.c.l.b16 %v1168
    %v3466 = vunpack.c.h.b16 %v1168
    %v3467 = vunpack.c.l.b16 %v1169
    %v3468 = vunpack.c.h.b16 %v1169
    %v3469 = vunpack.c.l.b16 %v1170
    %v3470 = vunpack.c.h.b16 %v1170
    %v3471 = vunpack.c.l.b16 %v1171
    %v3472 = vunpack.c.h.b16 %v1171
    %v3473 = vunpack.c.l.b16 %v1172
    %v3474 = vunpack.c.h.b16 %v1172
    %v3475 = vunpack.c.l.b16 %v1173
    %v3476 = vunpack.c.h.b16 %v1173
    %v3477 = vunpack.c.l.b16 %v1174
    %v3478 = vunpack.c.h.b16 %v1174
    %v3479 = vunpack.c.l.b16 %v1175
    %v3480 = vunpack.c.h.b16 %v1175
    %v3481 = vunpack.c.l.b16 %v1176
    %v3482 = vunpack.c.h.b16 %v1176
    %v3483 = vunpack.c.l.b16 %v1177
    %v3484 = vunpack.c.h.b16 %v1177
    %v3485 = vunpack.c.l.b16 %v1178
    %v3486 = vunpack.c.h.b16 %v1178
    %v3487 = vunpack.c.l.b16 %v1179
    %v3488 = vunpack.c.h.b16 %v1179
    %v3489 = vunpack.c.l.b16 %v1180
    %v3490 = vunpack.c.h.b16 %v1180
    %v3491 = vunpack.c.l.b16 %v1181
    %v3492 = vunpack.c.h.b16 %v1181
    %v3493 = vunpack.c.l.b16 %v1182
    %v3494 = vunpack.c.h.b16 %v1182
    %v3495 = vunpack.c.l.b16 %v1183
    %v3496 = vunpack.c.h.b16 %v1183
    %v3497 = vunpack.c.l.b16 %v1184
    %v3498 = vunpack.c.h.b16 %v1184
    %v3499 = vunpack.c.l.b16 %v1185
    %v3500 = vunpack.c.h.b16 %v1185
    %v3501 = vunpack.c.l.b16 %v1186
    %v3502 = vunpack.c.h.b16 %v1186
    %v3503 = vunpack.c.l.b16 %v1187
    %v3504 = vunpack.c.h.b16 %v1187
    %v3505 = vunpack.c.l.b16 %v1188
    %v3506 = vunpack.c.h.b16 %v1188
    %v3507 = vunpack.c.l.b16 %v1189
    %v3508 = vunpack.c.h.b16 %v1189
    %v3509 = vunpack.c.l.b16 %v1190
    %v3510 = vunpack.c.h.b16 %v1190
    %v3511 = vunpack.c.l.b16 %v1191
    %v3512 = vunpack.c.h.b16 %v1191
    %v3513 = vunpack.c.l.b16 %v1192
    %v3514 = vunpack.c.h.b16 %v1192
    %v3515 = vunpack.c.l.b16 %v1193
    %v3516 = vunpack.c.h.b16 %v1193
    %v3517 = vunpack.c.l.b16 %v1194
    %v3518 = vunpack.c.h.b16 %v1194
    %v3519 = vunpack.c.l.b16 %v1195
    %v3520 = vunpack.c.h.b16 %v1195
    %v3521 = vunpack.c.l.b16 %v1196
    %v3522 = vunpack.c.h.b16 %v1196
    %v3523 = vpack.c.b16 %v1991, %v1987
    %v3524 = vpack.c.b16 %v1992, %v1988
    %v3525 = vpack.c.b16 %v1993, %v1989
    %v3526 = vpack.c.b16 %v1994, %v1990
    %v3527 = vpack.c.b16 %v1999, %v1995
    %v3528 = vpack.c.b16 %v2000, %v1996
    %v3529 = vpack.c.b16 %v2001, %v1997
    %v3530 = vpack.c.b16 %v2002, %v1998
    %v3531 = vpack.c.b16 %v2007, %v2003
    %v3532 = vpack.c.b16 %v2008, %v2004
    %v3533 = vpack.c.b16 %v2009, %v2005
    %v3534 = vpack.c.b16 %v2010, %v2006
    %v3535 = vpack.c.b16 %v2015, %v2011
    %v3536 = vpack.c.b16 %v2016, %v2012
    %v3537 = vpack.c.b16 %v2017, %v2013
    %v3538 = vpack.c.b16 %v2018, %v2014
    %v3539 = vpack.c.b16 %v2023, %v2019
    %v3540 = vpack.c.b16 %v2024, %v2020
    %v3541 = vpack.c.b16 %v2025, %v2021
    %v3542 = vpack.c.b16 %v2026, %v2022
    %v3543 = vpack.c.b16 %v2031, %v2027
    %v3544 = vpack.c.b16 %v2032, %v2028
    %v3545 = vpack.c.b16 %v2033, %v2029
    %v3546 = vpack.c.b16 %v2034, %v2030
    %v3547 = vpack.c.b16 %v2039, %v2035
    %v3548 = vpack.c.b16 %v2040, %v2036
    %v3549 = vpack.c.b16 %v2041, %v2037
    %v3550 = vpack.c.b16 %v2042, %v2038
    %v3551 = vpack.c.b16 %v2047, %v2043
    %v3552 = vpack.c.b16 %v2048, %v2044
    %v3553 = vpack.c.b16 %v2049, %v2045
    %v3554 = vpack.c.b16 %v2050, %v2046
    %v3555 = vpack.c.b16 %v2055, %v2051
    %v3556 = vpack.c.b16 %v2056, %v2052
    %v3557 = vpack.c.b16 %v2057, %v2053
    %v3558 = vpack.c.b16 %v2058, %v2054
    %v3559 = vpack.c.b16 %v2063, %v2059
    %v3560 = vpack.c.b16 %v2064, %v2060
    %v3561 = vpack.c.b16 %v2065, %v2061
    %v3562 = vpack.c.b16 %v2066, %v2062
    %v3563 = vpack.c.b16 %v2071, %v2067
    %v3564 = vpack.c.b16 %v2072, %v2068
    %v3565 = vpack.c.b16 %v2073, %v2069
    %v3566 = vpack.c.b16 %v2074, %v2070
    %v3567 = vpack.c.b16 %v2079, %v2075
    %v3568 = vpack.c.b16 %v2080, %v2076
    %v3569 = vpack.c.b16 %v2081, %v2077
    %v3570 = vpack.c.b16 %v2082, %v2078
    %v3571 = vpack.c.b16 %v2087, %v2083
    %v3572 = vpack.c.b16 %v2088, %v2084
    %v3573 = vpack.c.b16 %v2089, %v2085
    %v3574 = vpack.c.b16 %v2090, %v2086
    %v3575 = vpack.c.b16 %v2095, %v2091
    %v3576 = vpack.c.b16 %v2096, %v2092
    %v3577 = vpack.c.b16 %v2097, %v2093
    %v3578 = vpack.c.b16 %v2098, %v2094
    %v3579 = vpack.c.b16 %v2103, %v2099
    %v3580 = vpack.c.b16 %v2104, %v2100
    %v3581 = vpack.c.b16 %v2105, %v2101
    %v3582 = vpack.c.b16 %v2106, %v2102
    %v3583 = vpack.c.b16 %v2111, %v2107
    %v3584 = vpack.c.b16 %v2112, %v2108
    %v3585 = vpack.c.b16 %v2113, %v2109
    %v3586 = vpack.c.b16 %v2114, %v2110
    %v3587 = vpack.c.b16 %v2119, %v2115
    %v3588 = vpack.c.b16 %v2120, %v2116
    %v3589 = vpack.c.b16 %v2121, %v2117
    %v3590 = vpack.c.b16 %v2122, %v2118
    %v3591 = vpack.c.b16 %v2127, %v2123
    %v3592 = vpack.c.b16 %v2128, %v2124
    %v3593 = vpack.c.b16 %v2129, %v2125
    %v3594 = vpack.c.b16 %v2130, %v2126
    %v3595 = vpack.c.b16 %v2135, %v2131
    %v3596 = vpack.c.b16 %v2136, %v2132
    %v3597 = vpack.c.b16 %v2137, %v2133
    %v3598 = vpack.c.b16 %v2138, %v2134
    %v3599 = vpack.c.b16 %v2143, %v2139
    %v3600 = vpack.c.b16 %v2144, %v2140
    %v3601 = vpack.c.b16 %v2145, %v2141
    %v3602 = vpack.c.b16 %v2146, %v2142
    %v3603 = vpack.c.b16 %v2151, %v2147
    %v3604 = vpack.c.b16 %v2152, %v2148
    %v3605 = vpack.c.b16 %v2153, %v2149
    %v3606 = vpack.c.b16 %v2154, %v2150
    %v3607 = vpack.c.b16 %v2159, %v2155
    %v3608 = vpack.c.b16 %v2160, %v2156
    %v3609 = vpack.c.b16 %v2161, %v2157
    %v3610 = vpack.c.b16 %v2162, %v2158
    %v3611 = vpack.c.b16 %v2167, %v2163
    %v3612 = vpack.c.b16 %v2168, %v2164
    %v3613 = vpack.c.b16 %v2169, %v2165
    %v3614 = vpack.c.b16 %v2170, %v2166
    %v3615 = vpack.c.b16 %v2175, %v2171
    %v3616 = vpack.c.b16 %v2176, %v2172
    %v3617 = vpack.c.b16 %v2177, %v2173
    %v3618 = vpack.c.b16 %v2178, %v2174
    %v3619 = vpack.c.b16 %v2183, %v2179
    %v3620 = vpack.c.b16 %v2184, %v2180
    %v3621 = vpack.c.b16 %v2185, %v2181
    %v3622 = vpack.c.b16 %v2186, %v2182
    %v3623 = vpack.c.b16 %v2191, %v2187
    %v3624 = vpack.c.b16 %v2192, %v2188
    %v3625 = vpack.c.b16 %v2193, %v2189
    %v3626 = vpack.c.b16 %v2194, %v2190
    %v3627 = vpack.c.b16 %v2199, %v2195
    %v3628 = vpack.c.b16 %v2200, %v2196
    %v3629 = vpack.c.b16 %v2201, %v2197
    %v3630 = vpack.c.b16 %v2202, %v2198
    %v3631 = vpack.c.b16 %v2207, %v2203
    %v3632 = vpack.c.b16 %v2208, %v2204
    %v3633 = vpack.c.b16 %v2209, %v2205
    %v3634 = vpack.c.b16 %v2210, %v2206
    %v3635 = vpack.c.b16 %v2215, %v2211
    %v3636 = vpack.c.b16 %v2216, %v2212
    %v3637 = vpack.c.b16 %v2217, %v2213
    %v3638 = vpack.c.b16 %v2218, %v2214
    %v3639 = vpack.c.b16 %v2223, %v2219
    %v3640 = vpack.c.b16 %v2224, %v2220
    %v3641 = vpack.c.b16 %v2225, %v2221
    %v3642 = vpack.c.b16 %v2226, %v2222
    %v3643 = vpack.c.b16 %v2231, %v2227
    %v3644 = vpack.c.b16 %v2232, %v2228
    %v3645 = vpack.c.b16 %v2233, %v2229
    %v3646 = vpack.c.b16 %v2234, %v2230
    %v3647 = vpack.c.b16 %v2239, %v2235
    %v3648 = vpack.c.b16 %v2240, %v2236
    %v3649 = vpack.c.b16 %v2241, %v2237
    %v3650 = vpack.c.b16 %v2242, %v2238
    %v3651 = vpack.c.b16 %v2247, %v2243
    %v3652 = vpack.c.b16 %v2248, %v2244
    %v3653 = vpack.c.b16 %v2249, %v2245
    %v3654 = vpack.c.b16 %v2250, %v2246
    %v3655 = vpack.c.b16 %v2255, %v2251
    %v3656 = vpack.c.b16 %v2256, %v2252
    %v3657 = vpack.c.b16 %v2257, %v2253
    %v3658 = vpack.c.b16 %v2258, %v2254
    %v3659 = vpack.c.b16 %v2263, %v2259
    %v3660 = vpack.c.b16 %v2264, %v2260
    %v3661 = vpack.c.b16 %v2265, %v2261
    %v3662 = vpack.c.b16 %v2266, %v2262
    %v3663 = vpack.c.b16 %v2271, %v2267
    %v3664 = vpack.c.b16 %v2272, %v2268
    %v3665 = vpack.c.b16 %v2273, %v2269
    %v3666 = vpack.c.b16 %v2274, %v2270
    %v3667 = vpack.c.b16 %v2279, %v2275
    %v3668 = vpack.c.b16 %v2280, %v2276
    %v3669 = vpack.c.b16 %v2281, %v2277
    %v3670 = vpack.c.b16 %v2282, %v2278
    %v3671 = vpack.c.b16 %v2287, %v2283
    %v3672 = vpack.c.b16 %v2288, %v2284
    %v3673 = vpack.c.b16 %v2289, %v2285
    %v3674 = vpack.c.b16 %v2290, %v2286
    %v3675 = vpack.c.b16 %v2295, %v2291
    %v3676 = vpack.c.b16 %v2296, %v2292
    %v3677 = vpack.c.b16 %v2297, %v2293
    %v3678 = vpack.c.b16 %v2298, %v2294
    %v3679 = vpack.c.b16 %v2303, %v2299
    %v3680 = vpack.c.b16 %v2304, %v2300
    %v3681 = vpack.c.b16 %v2305, %v2301
    %v3682 = vpack.c.b16 %v2306, %v2302
    %v3683 = vpack.c.b16 %v2311, %v2307
    %v3684 = vpack.c.b16 %v2312, %v2308
    %v3685 = vpack.c.b16 %v2313, %v2309
    %v3686 = vpack.c.b16 %v2314, %v2310
    %v3687 = vpack.c.b16 %v2319, %v2315
    %v3688 = vpack.c.b16 %v2320, %v2316
    %v3689 = vpack.c.b16 %v2321, %v2317
    %v3690 = vpack.c.b16 %v2322, %v2318
    %v3691 = vpack.c.b16 %v2327, %v2323
    %v3692 = vpack.c.b16 %v2328, %v2324
    %v3693 = vpack.c.b16 %v2329, %v2325
    %v3694 = vpack.c.b16 %v2330, %v2326
    %v3695 = vpack.c.b16 %v2335, %v2331
    %v3696 = vpack.c.b16 %v2336, %v2332
    %v3697 = vpack.c.b16 %v2337, %v2333
    %v3698 = vpack.c.b16 %v2338, %v2334
    %v3699 = vpack.c.b16 %v2343, %v2339
    %v3700 = vpack.c.b16 %v2344, %v2340
    %v3701 = vpack.c.b16 %v2345, %v2341
    %v3702 = vpack.c.b16 %v2346, %v2342
    %v3703 = vpack.c.b16 %v2351, %v2347
    %v3704 = vpack.c.b16 %v2352, %v2348
    %v3705 = vpack.c.b16 %v2353, %v2349
    %v3706 = vpack.c.b16 %v2354, %v2350
    %v3707 = vpack.c.b16 %v2359, %v2355
    %v3708 = vpack.c.b16 %v2360, %v2356
    %v3709 = vpack.c.b16 %v2361, %v2357
    %v3710 = vpack.c.b16 %v2362, %v2358
    %v3711 = vpack.c.b16 %v2367, %v2363
    %v3712 = vpack.c.b16 %v2368, %v2364
    %v3713 = vpack.c.b16 %v2369, %v2365
    %v3714 = vpack.c.b16 %v2370, %v2366
    %v3715 = vpack.c.b16 %v2375, %v2371
    %v3716 = vpack.c.b16 %v2376, %v2372
    %v3717 = vpack.c.b16 %v2377, %v2373
    %v3718 = vpack.c.b16 %v2378, %v2374
    %v3719 = vpack.c.b16 %v2383, %v2379
    %v3720 = vpack.c.b16 %v2384, %v2380
    %v3721 = vpack.c.b16 %v2385, %v2381
    %v3722 = vpack.c.b16 %v2386, %v2382
    %v3723 = vpack.c.b16 %v2391, %v2387
    %v3724 = vpack.c.b16 %v2392, %v2388
    %v3725 = vpack.c.b16 %v2393, %v2389
    %v3726 = vpack.c.b16 %v2394, %v2390
    %v3727 = vpack.c.b16 %v2399, %v2395
    %v3728 = vpack.c.b16 %v2400, %v2396
    %v3729 = vpack.c.b16 %v2401, %v2397
    %v3730 = vpack.c.b16 %v2402, %v2398
    %v3731 = vpack.c.b16 %v2407, %v2403
    %v3732 = vpack.c.b16 %v2408, %v2404
    %v3733 = vpack.c.b16 %v2409, %v2405
    %v3734 = vpack.c.b16 %v2410, %v2406
    %v3735 = vpack.c.b16 %v2415, %v2411
    %v3736 = vpack.c.b16 %v2416, %v2412
    %v3737 = vpack.c.b16 %v2417, %v2413
    %v3738 = vpack.c.b16 %v2418, %v2414
    %v3739 = vpack.c.b16 %v2423, %v2419
    %v3740 = vpack.c.b16 %v2424, %v2420
    %v3741 = vpack.c.b16 %v2425, %v2421
    %v3742 = vpack.c.b16 %v2426, %v2422
    %v3743 = vpack.c.b16 %v2431, %v2427
    %v3744 = vpack.c.b16 %v2432, %v2428
    %v3745 = vpack.c.b16 %v2433, %v2429
    %v3746 = vpack.c.b16 %v2434, %v2430
    %v3747 = vpack.c.b16 %v2439, %v2435
    %v3748 = vpack.c.b16 %v2440, %v2436
    %v3749 = vpack.c.b16 %v2441, %v2437
    %v3750 = vpack.c.b16 %v2442, %v2438
    %v3751 = vpack.c.b16 %v2447, %v2443
    %v3752 = vpack.c.b16 %v2448, %v2444
    %v3753 = vpack.c.b16 %v2449, %v2445
    %v3754 = vpack.c.b16 %v2450, %v2446
    %v3755 = vpack.c.b16 %v2455, %v2451
    %v3756 = vpack.c.b16 %v2456, %v2452
    %v3757 = vpack.c.b16 %v2457, %v2453
    %v3758 = vpack.c.b16 %v2458, %v2454
    %v3759 = vpack.c.b16 %v2463, %v2459
    %v3760 = vpack.c.b16 %v2464, %v2460
    %v3761 = vpack.c.b16 %v2465, %v2461
    %v3762 = vpack.c.b16 %v2466, %v2462
    %v3763 = vpack.c.b16 %v2471, %v2467
    %v3764 = vpack.c.b16 %v2472, %v2468
    %v3765 = vpack.c.b16 %v2473, %v2469
    %v3766 = vpack.c.b16 %v2474, %v2470
    %v3767 = vpack.c.b16 %v2479, %v2475
    %v3768 = vpack.c.b16 %v2480, %v2476
    %v3769 = vpack.c.b16 %v2481, %v2477
    %v3770 = vpack.c.b16 %v2482, %v2478
    %v3771 = vpack.c.b16 %v2487, %v2483
    %v3772 = vpack.c.b16 %v2488, %v2484
    %v3773 = vpack.c.b16 %v2489, %v2485
    %v3774 = vpack.c.b16 %v2490, %v2486
    %v3775 = vpack.c.b16 %v2495, %v2491
    %v3776 = vpack.c.b16 %v2496, %v2492
    %v3777 = vpack.c.b16 %v2497, %v2493
    %v3778 = vpack.c.b16 %v2498, %v2494
    %v3779 = vpack.c.b16 %v2503, %v2499
    %v3780 = vpack.c.b16 %v2504, %v2500
    %v3781 = vpack.c.b16 %v2505, %v2501
    %v3782 = vpack.c.b16 %v2506, %v2502
    %v3783 = vpack.c.b16 %v2511, %v2507
    %v3784 = vpack.c.b16 %v2512, %v2508
    %v3785 = vpack.c.b16 %v2513, %v2509
    %v3786 = vpack.c.b16 %v2514, %v2510
    %v3787 = vpack.c.b16 %v2519, %v2515
    %v3788 = vpack.c.b16 %v2520, %v2516
    %v3789 = vpack.c.b16 %v2521, %v2517
    %v3790 = vpack.c.b16 %v2522, %v2518
    %v3791 = vpack.c.b16 %v2527, %v2523
    %v3792 = vpack.c.b16 %v2528, %v2524
    %v3793 = vpack.c.b16 %v2529, %v2525
    %v3794 = vpack.c.b16 %v2530, %v2526
    %v3795 = vpack.c.b16 %v2535, %v2531
    %v3796 = vpack.c.b16 %v2536, %v2532
    %v3797 = vpack.c.b16 %v2537, %v2533
    %v3798 = vpack.c.b16 %v2538, %v2534
    %v3799 = vpack.c.b16 %v2543, %v2539
    %v3800 = vpack.c.b16 %v2544, %v2540
    %v3801 = vpack.c.b16 %v2545, %v2541
    %v3802 = vpack.c.b16 %v2546, %v2542
    %v3803 = vpack.c.b16 %v2551, %v2547
    %v3804 = vpack.c.b16 %v2552, %v2548
    %v3805 = vpack.c.b16 %v2553, %v2549
    %v3806 = vpack.c.b16 %v2554, %v2550
    %v3807 = vpack.c.b16 %v2559, %v2555
    %v3808 = vpack.c.b16 %v2560, %v2556
    %v3809 = vpack.c.b16 %v2561, %v2557
    %v3810 = vpack.c.b16 %v2562, %v2558
    %v3811 = vpack.c.b16 %v2567, %v2563
    %v3812 = vpack.c.b16 %v2568, %v2564
    %v3813 = vpack.c.b16 %v2569, %v2565
    %v3814 = vpack.c.b16 %v2570, %v2566
    %v3815 = vpack.c.b16 %v2575, %v2571
    %v3816 = vpack.c.b16 %v2576, %v2572
    %v3817 = vpack.c.b16 %v2577, %v2573
    %v3818 = vpack.c.b16 %v2578, %v2574
    %v3819 = vpack.c.b16 %v2583, %v2579
    %v3820 = vpack.c.b16 %v2584, %v2580
    %v3821 = vpack.c.b16 %v2585, %v2581
    %v3822 = vpack.c.b16 %v2586, %v2582
    %v3823 = vpack.c.b16 %v2591, %v2587
    %v3824 = vpack.c.b16 %v2592, %v2588
    %v3825 = vpack.c.b16 %v2593, %v2589
    %v3826 = vpack.c.b16 %v2594, %v2590
    %v3827 = vpack.c.b16 %v2599, %v2595
    %v3828 = vpack.c.b16 %v2600, %v2596
    %v3829 = vpack.c.b16 %v2601, %v2597
    %v3830 = vpack.c.b16 %v2602, %v2598
    %v3831 = vpack.c.b16 %v2607, %v2603
    %v3832 = vpack.c.b16 %v2608, %v2604
    %v3833 = vpack.c.b16 %v2609, %v2605
    %v3834 = vpack.c.b16 %v2610, %v2606
    %v3835 = vpack.c.b16 %v2615, %v2611
    %v3836 = vpack.c.b16 %v2616, %v2612
    %v3837 = vpack.c.b16 %v2617, %v2613
    %v3838 = vpack.c.b16 %v2618, %v2614
    %v3839 = vpack.c.b16 %v2623, %v2619
    %v3840 = vpack.c.b16 %v2624, %v2620
    %v3841 = vpack.c.b16 %v2625, %v2621
    %v3842 = vpack.c.b16 %v2626, %v2622
    %v3843 = vpack.c.b16 %v2631, %v2627
    %v3844 = vpack.c.b16 %v2632, %v2628
    %v3845 = vpack.c.b16 %v2633, %v2629
    %v3846 = vpack.c.b16 %v2634, %v2630
    %v3847 = vpack.c.b16 %v2639, %v2635
    %v3848 = vpack.c.b16 %v2640, %v2636
    %v3849 = vpack.c.b16 %v2641, %v2637
    %v3850 = vpack.c.b16 %v2642, %v2638
    %v3851 = vpack.c.b16 %v2647, %v2643
    %v3852 = vpack.c.b16 %v2648, %v2644
    %v3853 = vpack.c.b16 %v2649, %v2645
    %v3854 = vpack.c.b16 %v2650, %v2646
    %v3855 = vpack.c.b16 %v2655, %v2651
    %v3856 = vpack.c.b16 %v2656, %v2652
    %v3857 = vpack.c.b16 %v2657, %v2653
    %v3858 = vpack.c.b16 %v2658, %v2654
    %v3859 = vpack.c.b16 %v2663, %v2659
    %v3860 = vpack.c.b16 %v2664, %v2660
    %v3861 = vpack.c.b16 %v2665, %v2661
    %v3862 = vpack.c.b16 %v2666, %v2662
    %v3863 = vpack.c.b16 %v2671, %v2667
    %v3864 = vpack.c.b16 %v2672, %v2668
    %v3865 = vpack.c.b16 %v2673, %v2669
    %v3866 = vpack.c.b16 %v2674, %v2670
    %v3867 = vpack.c.b16 %v2679, %v2675
    %v3868 = vpack.c.b16 %v2680, %v2676
    %v3869 = vpack.c.b16 %v2681, %v2677
    %v3870 = vpack.c.b16 %v2682, %v2678
    %v3871 = vpack.c.b16 %v2687, %v2683
    %v3872 = vpack.c.b16 %v2688, %v2684
    %v3873 = vpack.c.b16 %v2689, %v2685
    %v3874 = vpack.c.b16 %v2690, %v2686
    %v3875 = vpack.c.b16 %v2695, %v2691
    %v3876 = vpack.c.b16 %v2696, %v2692
    %v3877 = vpack.c.b16 %v2697, %v2693
    %v3878 = vpack.c.b16 %v2698, %v2694
    %v3879 = vpack.c.b16 %v2703, %v2699
    %v3880 = vpack.c.b16 %v2704, %v2700
    %v3881 = vpack.c.b16 %v2705, %v2701
    %v3882 = vpack.c.b16 %v2706, %v2702
    %v3883 = vpack.c.b16 %v2711, %v2707
    %v3884 = vpack.c.b16 %v2712, %v2708
    %v3885 = vpack.c.b16 %v2713, %v2709
    %v3886 = vpack.c.b16 %v2714, %v2710
    %v3887 = vpack.c.b16 %v2719, %v2715
    %v3888 = vpack.c.b16 %v2720, %v2716
    %v3889 = vpack.c.b16 %v2721, %v2717
    %v3890 = vpack.c.b16 %v2722, %v2718
    %v3891 = vpack.c.b16 %v2727, %v2723
    %v3892 = vpack.c.b16 %v2728, %v2724
    %v3893 = vpack.c.b16 %v2729, %v2725
    %v3894 = vpack.c.b16 %v2730, %v2726
    %v3895 = vpack.c.b16 %v2735, %v2731
    %v3896 = vpack.c.b16 %v2736, %v2732
    %v3897 = vpack.c.b16 %v2737, %v2733
    %v3898 = vpack.c.b16 %v2738, %v2734
    %v3899 = vpack.c.b16 %v2743, %v2739
    %v3900 = vpack.c.b16 %v2744, %v2740
    %v3901 = vpack.c.b16 %v2745, %v2741
    %v3902 = vpack.c.b16 %v2746, %v2742
    %v3903 = vpack.c.b16 %v2751, %v2747
    %v3904 = vpack.c.b16 %v2752, %v2748
    %v3905 = vpack.c.b16 %v2753, %v2749
    %v3906 = vpack.c.b16 %v2754, %v2750
    %v3907 = vpack.c.b16 %v2759, %v2755
    %v3908 = vpack.c.b16 %v2760, %v2756
    %v3909 = vpack.c.b16 %v2761, %v2757
    %v3910 = vpack.c.b16 %v2762, %v2758
    %v3911 = vpack.c.b16 %v2767, %v2763
    %v3912 = vpack.c.b16 %v2768, %v2764
    %v3913 = vpack.c.b16 %v2769, %v2765
    %v3914 = vpack.c.b16 %v2770, %v2766
    %v3915 = vpack.c.b16 %v2775, %v2771
    %v3916 = vpack.c.b16 %v2776, %v2772
    %v3917 = vpack.c.b16 %v2777, %v2773
    %v3918 = vpack.c.b16 %v2778, %v2774
    %v3919 = vpack.c.b16 %v2783, %v2779
    %v3920 = vpack.c.b16 %v2784, %v2780
    %v3921 = vpack.c.b16 %v2785, %v2781
    %v3922 = vpack.c.b16 %v2786, %v2782
    %v3923 = vpack.c.b16 %v2791, %v2787
    %v3924 = vpack.c.b16 %v2792, %v2788
    %v3925 = vpack.c.b16 %v2793, %v2789
    %v3926 = vpack.c.b16 %v2794, %v2790
    %v3927 = vpack.c.b16 %v2799, %v2795
    %v3928 = vpack.c.b16 %v2800, %v2796
    %v3929 = vpack.c.b16 %v2801, %v2797
    %v3930 = vpack.c.b16 %v2802, %v2798
    %v3931 = vpack.c.b16 %v2807, %v2803
    %v3932 = vpack.c.b16 %v2808, %v2804
    %v3933 = vpack.c.b16 %v2809, %v2805
    %v3934 = vpack.c.b16 %v2810, %v2806
    %v3935 = vpack.c.b16 %v2815, %v2811
    %v3936 = vpack.c.b16 %v2816, %v2812
    %v3937 = vpack.c.b16 %v2817, %v2813
    %v3938 = vpack.c.b16 %v2818, %v2814
    %v3939 = vpack.c.b16 %v2823, %v2819
    %v3940 = vpack.c.b16 %v2824, %v2820
    %v3941 = vpack.c.b16 %v2825, %v2821
    %v3942 = vpack.c.b16 %v2826, %v2822
    %v3943 = vpack.c.b16 %v2831, %v2827
    %v3944 = vpack.c.b16 %v2832, %v2828
    %v3945 = vpack.c.b16 %v2833, %v2829
    %v3946 = vpack.c.b16 %v2834, %v2830
    %v3947 = vpack.c.b16 %v2839, %v2835
    %v3948 = vpack.c.b16 %v2840, %v2836
    %v3949 = vpack.c.b16 %v2841, %v2837
    %v3950 = vpack.c.b16 %v2842, %v2838
    %v3951 = vpack.c.b16 %v2847, %v2843
    %v3952 = vpack.c.b16 %v2848, %v2844
    %v3953 = vpack.c.b16 %v2849, %v2845
    %v3954 = vpack.c.b16 %v2850, %v2846
    %v3955 = vpack.c.b16 %v2855, %v2851
    %v3956 = vpack.c.b16 %v2856, %v2852
    %v3957 = vpack.c.b16 %v2857, %v2853
    %v3958 = vpack.c.b16 %v2858, %v2854
    %v3959 = vpack.c.b16 %v2863, %v2859
    %v3960 = vpack.c.b16 %v2864, %v2860
    %v3961 = vpack.c.b16 %v2865, %v2861
    %v3962 = vpack.c.b16 %v2866, %v2862
    %v3963 = vpack.c.b16 %v2871, %v2867
    %v3964 = vpack.c.b16 %v2872, %v2868
    %v3965 = vpack.c.b16 %v2873, %v2869
    %v3966 = vpack.c.b16 %v2874, %v2870
    %v3967 = vpack.c.b16 %v2879, %v2875
    %v3968 = vpack.c.b16 %v2880, %v2876
    %v3969 = vpack.c.b16 %v2881, %v2877
    %v3970 = vpack.c.b16 %v2882, %v2878
    %v3971 = vpack.c.b16 %v2887, %v2883
    %v3972 = vpack.c.b16 %v2888, %v2884
    %v3973 = vpack.c.b16 %v2889, %v2885
    %v3974 = vpack.c.b16 %v2890, %v2886
    %v3975 = vpack.c.b16 %v2895, %v2891
    %v3976 = vpack.c.b16 %v2896, %v2892
    %v3977 = vpack.c.b16 %v2897, %v2893
    %v3978 = vpack.c.b16 %v2898, %v2894
    %v3979 = vpack.c.b16 %v2903, %v2899
    %v3980 = vpack.c.b16 %v2904, %v2900
    %v3981 = vpack.c.b16 %v2905, %v2901
    %v3982 = vpack.c.b16 %v2906, %v2902
    %v3983 = vpack.c.b16 %v2911, %v2907
    %v3984 = vpack.c.b16 %v2912, %v2908
    %v3985 = vpack.c.b16 %v2913, %v2909
    %v3986 = vpack.c.b16 %v2914, %v2910
    %v3987 = vpack.c.b16 %v2919, %v2915
    %v3988 = vpack.c.b16 %v2920, %v2916
    %v3989 = vpack.c.b16 %v2921, %v2917
    %v3990 = vpack.c.b16 %v2922, %v2918
    %v3991 = vpack.c.b16 %v2927, %v2923
    %v3992 = vpack.c.b16 %v2928, %v2924
    %v3993 = vpack.c.b16 %v2929, %v2925
    %v3994 = vpack.c.b16 %v2930, %v2926
    %v3995 = vpack.c.b16 %v2935, %v2931
    %v3996 = vpack.c.b16 %v2936, %v2932
    %v3997 = vpack.c.b16 %v2937, %v2933
    %v3998 = vpack.c.b16 %v2938, %v2934
    %v3999 = vpack.c.b16 %v2943, %v2939
    %v4000 = vpack.c.b16 %v2944, %v2940
    %v4001 = vpack.c.b16 %v2945, %v2941
    %v4002 = vpack.c.b16 %v2946, %v2942
    %v4003 = vpack.c.b16 %v2951, %v2947
    %v4004 = vpack.c.b16 %v2952, %v2948
    %v4005 = vpack.c.b16 %v2953, %v2949
    %v4006 = vpack.c.b16 %v2954, %v2950
    %v4007 = vpack.c.b16 %v2959, %v2955
    %v4008 = vpack.c.b16 %v2960, %v2956
    %v4009 = vpack.c.b16 %v2961, %v2957
    %v4010 = vpack.c.b16 %v2962, %v2958
    %v4011 = vpack.c.b16 %v2967, %v2963
    %v4012 = vpack.c.b16 %v2968, %v2964
    %v4013 = vpack.c.b16 %v2969, %v2965
    %v4014 = vpack.c.b16 %v2970, %v2966
    %v4015 = vpack.c.b16 %v2975, %v2971
    %v4016 = vpack.c.b16 %v2976, %v2972
    %v4017 = vpack.c.b16 %v2977, %v2973
    %v4018 = vpack.c.b16 %v2978, %v2974
    %v4019 = vpack.c.b16 %v2983, %v2979
    %v4020 = vpack.c.b16 %v2984, %v2980
    %v4021 = vpack.c.b16 %v2985, %v2981
    %v4022 = vpack.c.b16 %v2986, %v2982
    %v4023 = vpack.c.b16 %v2991, %v2987
    %v4024 = vpack.c.b16 %v2992, %v2988
    %v4025 = vpack.c.b16 %v2993, %v2989
    %v4026 = vpack.c.b16 %v2994, %v2990
    %v4027 = vpack.c.b16 %v2999, %v2995
    %v4028 = vpack.c.b16 %v3000, %v2996
    %v4029 = vpack.c.b16 %v3001, %v2997
    %v4030 = vpack.c.b16 %v3002, %v2998
    %v4031 = vpack.c.b16 %v3007, %v3003
    %v4032 = vpack.c.b16 %v3008, %v3004
    %v4033 = vpack.c.b16 %v3009, %v3005
    %v4034 = vpack.c.b16 %v3010, %v3006
    %v4035 = vpack.c.b16 %v3015, %v3011
    %v4036 = vpack.c.b16 %v3016, %v3012
    %v4037 = vpack.c.b16 %v3017, %v3013
    %v4038 = vpack.c.b16 %v3018, %v3014
    %v4039 = vpack.c.b16 %v3023, %v3019
    %v4040 = vpack.c.b16 %v3024, %v3020
    %v4041 = vpack.c.b16 %v3025, %v3021
    %v4042 = vpack.c.b16 %v3026, %v3022
    %v4043 = vpack.c.b16 %v3031, %v3027
    %v4044 = vpack.c.b16 %v3032, %v3028
    %v4045 = vpack.c.b16 %v3033, %v3029
    %v4046 = vpack.c.b16 %v3034, %v3030
    %v4047 = vpack.c.b16 %v3039, %v3035
    %v4048 = vpack.c.b16 %v3040, %v3036
    %v4049 = vpack.c.b16 %v3041, %v3037
    %v4050 = vpack.c.b16 %v3042, %v3038
    %v4051 = vpack.c.b16 %v3047, %v3043
    %v4052 = vpack.c.b16 %v3048, %v3044
    %v4053 = vpack.c.b16 %v3049, %v3045
    %v4054 = vpack.c.b16 %v3050, %v3046
    %v4055 = vpack.c.b16 %v3055, %v3051
    %v4056 = vpack.c.b16 %v3056, %v3052
    %v4057 = vpack.c.b16 %v3057, %v3053
    %v4058 = vpack.c.b16 %v3058, %v3054
    %v4059 = vpack.c.b16 %v3063, %v3059
    %v4060 = vpack.c.b16 %v3064, %v3060
    %v4061 = vpack.c.b16 %v3065, %v3061
    %v4062 = vpack.c.b16 %v3066, %v3062
    %v4063 = vpack.c.b16 %v3071, %v3067
    %v4064 = vpack.c.b16 %v3072, %v3068
    %v4065 = vpack.c.b16 %v3073, %v3069
    %v4066 = vpack.c.b16 %v3074, %v3070
    %v4067 = vpack.c.b16 %v3079, %v3075
    %v4068 = vpack.c.b16 %v3080, %v3076
    %v4069 = vpack.c.b16 %v3081, %v3077
    %v4070 = vpack.c.b16 %v3082, %v3078
    %v4071 = vpack.c.b16 %v3087, %v3083
    %v4072 = vpack.c.b16 %v3088, %v3084
    %v4073 = vpack.c.b16 %v3089, %v3085
    %v4074 = vpack.c.b16 %v3090, %v3086
    %v4075 = vpack.c.b16 %v3095, %v3091
    %v4076 = vpack.c.b16 %v3096, %v3092
    %v4077 = vpack.c.b16 %v3097, %v3093
    %v4078 = vpack.c.b16 %v3098, %v3094
    %v4079 = vpack.c.b16 %v3103, %v3099
    %v4080 = vpack.c.b16 %v3104, %v3100
    %v4081 = vpack.c.b16 %v3105, %v3101
    %v4082 = vpack.c.b16 %v3106, %v3102
    %v4083 = vpack.c.b16 %v3111, %v3107
    %v4084 = vpack.c.b16 %v3112, %v3108
    %v4085 = vpack.c.b16 %v3113, %v3109
    %v4086 = vpack.c.b16 %v3114, %v3110
    %v4087 = vpack.c.b16 %v3119, %v3115
    %v4088 = vpack.c.b16 %v3120, %v3116
    %v4089 = vpack.c.b16 %v3121, %v3117
    %v4090 = vpack.c.b16 %v3122, %v3118
    %v4091 = vpack.c.b16 %v3127, %v3123
    %v4092 = vpack.c.b16 %v3128, %v3124
    %v4093 = vpack.c.b16 %v3129, %v3125
    %v4094 = vpack.c.b16 %v3130, %v3126
    %v4095 = vpack.c.b16 %v3135, %v3131
    %v4096 = vpack.c.b16 %v3136, %v3132
    %v4097 = vpack.c.b16 %v3137, %v3133
    %v4098 = vpack.c.b16 %v3138, %v3134
    %v4099 = vpack.c.b16 %v3143, %v3139
    %v4100 = vpack.c.b16 %v3144, %v3140
    %v4101 = vpack.c.b16 %v3145, %v3141
    %v4102 = vpack.c.b16 %v3146, %v3142
    %v4103 = vpack.c.b16 %v3151, %v3147
    %v4104 = vpack.c.b16 %v3152, %v3148
    %v4105 = vpack.c.b16 %v3153, %v3149
    %v4106 = vpack.c.b16 %v3154, %v3150
    %v4107 = vpack.c.b16 %v3159, %v3155
    %v4108 = vpack.c.b16 %v3160, %v3156
    %v4109 = vpack.c.b16 %v3161, %v3157
    %v4110 = vpack.c.b16 %v3162, %v3158
    %v4111 = vpack.c.b16 %v3167, %v3163
    %v4112 = vpack.c.b16 %v3168, %v3164
    %v4113 = vpack.c.b16 %v3169, %v3165
    %v4114 = vpack.c.b16 %v3170, %v3166
    %v4115 = vpack.c.b16 %v3175, %v3171
    %v4116 = vpack.c.b16 %v3176, %v3172
    %v4117 = vpack.c.b16 %v3177, %v3173
    %v4118 = vpack.c.b16 %v3178, %v3174
    %v4119 = vpack.c.b16 %v3183, %v3179
    %v4120 = vpack.c.b16 %v3184, %v3180
    %v4121 = vpack.c.b16 %v3185, %v3181
    %v4122 = vpack.c.b16 %v3186, %v3182
    %v4123 = vpack.c.b16 %v3191, %v3187
    %v4124 = vpack.c.b16 %v3192, %v3188
    %v4125 = vpack.c.b16 %v3193, %v3189
    %v4126 = vpack.c.b16 %v3194, %v3190
    %v4127 = vpack.c.b16 %v3199, %v3195
    %v4128 = vpack.c.b16 %v3200, %v3196
    %v4129 = vpack.c.b16 %v3201, %v3197
    %v4130 = vpack.c.b16 %v3202, %v3198
    %v4131 = vpack.c.b16 %v3207, %v3203
    %v4132 = vpack.c.b16 %v3208, %v3204
    %v4133 = vpack.c.b16 %v3209, %v3205
    %v4134 = vpack.c.b16 %v3210, %v3206
    %v4135 = vpack.c.b16 %v3215, %v3211
    %v4136 = vpack.c.b16 %v3216, %v3212
    %v4137 = vpack.c.b16 %v3217, %v3213
    %v4138 = vpack.c.b16 %v3218, %v3214
    %v4139 = vpack.c.b16 %v3223, %v3219
    %v4140 = vpack.c.b16 %v3224, %v3220
    %v4141 = vpack.c.b16 %v3225, %v3221
    %v4142 = vpack.c.b16 %v3226, %v3222
    %v4143 = vpack.c.b16 %v3231, %v3227
    %v4144 = vpack.c.b16 %v3232, %v3228
    %v4145 = vpack.c.b16 %v3233, %v3229
    %v4146 = vpack.c.b16 %v3234, %v3230
    %v4147 = vpack.c.b16 %v3239, %v3235
    %v4148 = vpack.c.b16 %v3240, %v3236
    %v4149 = vpack.c.b16 %v3241, %v3237
    %v4150 = vpack.c.b16 %v3242, %v3238
    %v4151 = vpack.c.b16 %v3247, %v3243
    %v4152 = vpack.c.b16 %v3248, %v3244
    %v4153 = vpack.c.b16 %v3249, %v3245
    %v4154 = vpack.c.b16 %v3250, %v3246
    %v4155 = vpack.c.b16 %v3255, %v3251
    %v4156 = vpack.c.b16 %v3256, %v3252
    %v4157 = vpack.c.b16 %v3257, %v3253
    %v4158 = vpack.c.b16 %v3258, %v3254
    %v4159 = vpack.c.b16 %v3263, %v3259
    %v4160 = vpack.c.b16 %v3264, %v3260
    %v4161 = vpack.c.b16 %v3265, %v3261
    %v4162 = vpack.c.b16 %v3266, %v3262
    %v4163 = vpack.c.b16 %v3271, %v3267
    %v4164 = vpack.c.b16 %v3272, %v3268
    %v4165 = vpack.c.b16 %v3273, %v3269
    %v4166 = vpack.c.b16 %v3274, %v3270
    %v4167 = vpack.c.b16 %v3279, %v3275
    %v4168 = vpack.c.b16 %v3280, %v3276
    %v4169 = vpack.c.b16 %v3281, %v3277
    %v4170 = vpack.c.b16 %v3282, %v3278
    %v4171 = vpack.c.b16 %v3287, %v3283
    %v4172 = vpack.c.b16 %v3288, %v3284
    %v4173 = vpack.c.b16 %v3289, %v3285
    %v4174 = vpack.c.b16 %v3290, %v3286
    %v4175 = vpack.c.b16 %v3295, %v3291
    %v4176 = vpack.c.b16 %v3296, %v3292
    %v4177 = vpack.c.b16 %v3297, %v3293
    %v4178 = vpack.c.b16 %v3298, %v3294
    %v4179 = vpack.c.b16 %v3303, %v3299
    %v4180 = vpack.c.b16 %v3304, %v3300
    %v4181 = vpack.c.b16 %v3305, %v3301
    %v4182 = vpack.c.b16 %v3306, %v3302
    %v4183 = vpack.c.b16 %v3311, %v3307
    %v4184 = vpack.c.b16 %v3312, %v3308
    %v4185 = vpack.c.b16 %v3313, %v3309
    %v4186 = vpack.c.b16 %v3314, %v3310
    %v4187 = vpack.c.b16 %v3319, %v3315
    %v4188 = vpack.c.b16 %v3320, %v3316
    %v4189 = vpack.c.b16 %v3321, %v3317
    %v4190 = vpack.c.b16 %v3322, %v3318
    %v4191 = vpack.c.b16 %v3327, %v3323
    %v4192 = vpack.c.b16 %v3328, %v3324
    %v4193 = vpack.c.b16 %v3329, %v3325
    %v4194 = vpack.c.b16 %v3330, %v3326
    %v4195 = vpack.c.b16 %v3335, %v3331
    %v4196 = vpack.c.b16 %v3336, %v3332
    %v4197 = vpack.c.b16 %v3337, %v3333
    %v4198 = vpack.c.b16 %v3338, %v3334
    %v4199 = vpack.c.b16 %v3343, %v3339
    %v4200 = vpack.c.b16 %v3344, %v3340
    %v4201 = vpack.c.b16 %v3345, %v3341
    %v4202 = vpack.c.b16 %v3346, %v3342
    %v4203 = vpack.c.b16 %v3351, %v3347
    %v4204 = vpack.c.b16 %v3352, %v3348
    %v4205 = vpack.c.b16 %v3353, %v3349
    %v4206 = vpack.c.b16 %v3354, %v3350
    %v4207 = vpack.c.b16 %v3359, %v3355
    %v4208 = vpack.c.b16 %v3360, %v3356
    %v4209 = vpack.c.b16 %v3361, %v3357
    %v4210 = vpack.c.b16 %v3362, %v3358
    %v4211 = vpack.c.b16 %v3367, %v3363
    %v4212 = vpack.c.b16 %v3368, %v3364
    %v4213 = vpack.c.b16 %v3369, %v3365
    %v4214 = vpack.c.b16 %v3370, %v3366
    %v4215 = vpack.c.b16 %v3375, %v3371
    %v4216 = vpack.c.b16 %v3376, %v3372
    %v4217 = vpack.c.b16 %v3377, %v3373
    %v4218 = vpack.c.b16 %v3378, %v3374
    %v4219 = vpack.c.b16 %v3383, %v3379
    %v4220 = vpack.c.b16 %v3384, %v3380
    %v4221 = vpack.c.b16 %v3385, %v3381
    %v4222 = vpack.c.b16 %v3386, %v3382
    %v4223 = vpack.c.b16 %v3391, %v3387
    %v4224 = vpack.c.b16 %v3392, %v3388
    %v4225 = vpack.c.b16 %v3393, %v3389
    %v4226 = vpack.c.b16 %v3394, %v3390
    %v4227 = vpack.c.b16 %v3399, %v3395
    %v4228 = vpack.c.b16 %v3400, %v3396
    %v4229 = vpack.c.b16 %v3401, %v3397
    %v4230 = vpack.c.b16 %v3402, %v3398
    %v4231 = vpack.c.b16 %v3407, %v3403
    %v4232 = vpack.c.b16 %v3408, %v3404
    %v4233 = vpack.c.b16 %v3409, %v3405
    %v4234 = vpack.c.b16 %v3410, %v3406
    %v4235 = vpack.c.b16 %v3415, %v3411
    %v4236 = vpack.c.b16 %v3416, %v3412
    %v4237 = vpack.c.b16 %v3417, %v3413
    %v4238 = vpack.c.b16 %v3418, %v3414
    %v4239 = vpack.c.b16 %v3423, %v3419
    %v4240 = vpack.c.b16 %v3424, %v3420
    %v4241 = vpack.c.b16 %v3425, %v3421
    %v4242 = vpack.c.b16 %v3426, %v3422
    %v4243 = vpack.c.b16 %v3431, %v3427
    %v4244 = vpack.c.b16 %v3432, %v3428
    %v4245 = vpack.c.b16 %v3433, %v3429
    %v4246 = vpack.c.b16 %v3434, %v3430
    %v4247 = vpack.c.b16 %v3439, %v3435
    %v4248 = vpack.c.b16 %v3440, %v3436
    %v4249 = vpack.c.b16 %v3441, %v3437
    %v4250 = vpack.c.b16 %v3442, %v3438
    %v4251 = vpack.c.b16 %v3447, %v3443
    %v4252 = vpack.c.b16 %v3448, %v3444
    %v4253 = vpack.c.b16 %v3449, %v3445
    %v4254 = vpack.c.b16 %v3450, %v3446
    %v4255 = vpack.c.b16 %v3455, %v3451
    %v4256 = vpack.c.b16 %v3456, %v3452
    %v4257 = vpack.c.b16 %v3457, %v3453
    %v4258 = vpack.c.b16 %v3458, %v3454
    %v4259 = vpack.c.b16 %v3463, %v3459
    %v4260 = vpack.c.b16 %v3464, %v3460
    %v4261 = vpack.c.b16 %v3465, %v3461
    %v4262 = vpack.c.b16 %v3466, %v3462
    %v4263 = vpack.c.b16 %v3471, %v3467
    %v4264 = vpack.c.b16 %v3472, %v3468
    %v4265 = vpack.c.b16 %v3473, %v3469
    %v4266 = vpack.c.b16 %v3474, %v3470
    %v4267 = vpack.c.b16 %v3479, %v3475
    %v4268 = vpack.c.b16 %v3480, %v3476
    %v4269 = vpack.c.b16 %v3481, %v3477
    %v4270 = vpack.c.b16 %v3482, %v3478
    %v4271 = vpack.c.b16 %v3487, %v3483
    %v4272 = vpack.c.b16 %v3488, %v3484
    %v4273 = vpack.c.b16 %v3489, %v3485
    %v4274 = vpack.c.b16 %v3490, %v3486
    %v4275 = vpack.c.b16 %v3495, %v3491
    %v4276 = vpack.c.b16 %v3496, %v3492
    %v4277 = vpack.c.b16 %v3497, %v3493
    %v4278 = vpack.c.b16 %v3498, %v3494
    %v4279 = vpack.c.b16 %v3503, %v3499
    %v4280 = vpack.c.b16 %v3504, %v3500
    %v4281 = vpack.c.b16 %v3505, %v3501
    %v4282 = vpack.c.b16 %v3506, %v3502
    %v4283 = vpack.c.b16 %v3511, %v3507
    %v4284 = vpack.c.b16 %v3512, %v3508
    %v4285 = vpack.c.b16 %v3513, %v3509
    %v4286 = vpack.c.b16 %v3514, %v3510
    %v4287 = vpack.c.b16 %v3519, %v3515
    %v4288 = vpack.c.b16 %v3520, %v3516
    %v4289 = vpack.c.b16 %v3521, %v3517
    %v4290 = vpack.c.b16 %v3522, %v3518
    %5059 = vmatprep.subr.bf16.mxu0 %v3524
    %5060 = vmatpush1.bf16.msra.mxu0 %v3523
    %5061 = vmatprep.subr.bf16.mxu0 %v3528
    %5062 = vmatpush1.bf16.msra.mxu0 %v3527
    %5063 = vmatprep.subr.bf16.mxu0 %v3532
    %5064 = vmatpush1.bf16.msra.mxu0 %v3531
    %5065 = vmatprep.subr.bf16.mxu0 %v3536
    %5066 = vmatpush1.bf16.msra.mxu0 %v3535
    %5067 = vmatprep.subr.bf16.mxu0 %v3540
    %5068 = vmatpush1.bf16.msra.mxu0 %v3539
    %5069 = vmatprep.subr.bf16.mxu0 %v3544
    %5070 = vmatpush1.bf16.msra.mxu0 %v3543
    %5071 = vmatprep.subr.bf16.mxu0 %v3548
    %5072 = vmatpush1.bf16.msra.mxu0 %v3547
    %5073 = vmatprep.subr.bf16.mxu0 %v3552
    %5074 = vmatpush1.bf16.msra.mxu0 %v3551
    %5075 = vmatprep.subr.bf16.mxu0 %v3556
    %5076 = vmatpush1.bf16.msra.mxu0 %v3555
    %5077 = vmatprep.subr.bf16.mxu0 %v3560
    %5078 = vmatpush1.bf16.msra.mxu0 %v3559
    %5079 = vmatprep.subr.bf16.mxu0 %v3564
    %5080 = vmatpush1.bf16.msra.mxu0 %v3563
    %5081 = vmatprep.subr.bf16.mxu0 %v3568
    %5082 = vmatpush1.bf16.msra.mxu0 %v3567
    %5083 = vmatprep.subr.bf16.mxu0 %v3572
    %5084 = vmatpush1.bf16.msra.mxu0 %v3571
    %5085 = vmatprep.subr.bf16.mxu0 %v3576
    %5086 = vmatpush1.bf16.msra.mxu0 %v3575
    %5087 = vmatprep.subr.bf16.mxu0 %v3580
    %5088 = vmatpush1.bf16.msra.mxu0 %v3579
    %5089 = vmatprep.subr.bf16.mxu0 %v3584
    %5090 = vmatpush1.bf16.msra.mxu0 %v3583
    %5091 = vmatprep.mubr.bf16.mxu0 %v406
    %5092 = vmatmul.mubr.bf16.gmra.mrb[0].mxu0 %v405
    %v5093 = vpop.f32.mrb[0].mxu0
    %v5094 = vadd.f32 %v1202, %v5093
    %v5095 = vpop.f32.mrb[0].mxu0
    %v5096 = vadd.f32 %v1206, %v5095
    %v5097 = vpop.f32.mrb[0].mxu0
    %v5098 = vpop.f32.mrb[0].mxu0
    %5099 = vdwg.mxu0
    %5100 = vmatprep.subr.bf16.mxu0 %v3588
    %5101 = vmatpush1.bf16.msra.mxu0 %v3587
    %5102 = vmatprep.subr.bf16.mxu0 %v3592
    %5103 = vmatpush1.bf16.msra.mxu0 %v3591
    %5104 = vmatprep.subr.bf16.mxu0 %v3596
    %5105 = vmatpush1.bf16.msra.mxu0 %v3595
    %5106 = vmatprep.subr.bf16.mxu0 %v3600
    %5107 = vmatpush1.bf16.msra.mxu0 %v3599
    %5108 = vmatprep.subr.bf16.mxu0 %v3604
    %5109 = vmatpush1.bf16.msra.mxu0 %v3603
    %5110 = vmatprep.subr.bf16.mxu0 %v3608
    %5111 = vmatpush1.bf16.msra.mxu0 %v3607
    %5112 = vmatprep.subr.bf16.mxu0 %v3612
    %5113 = vmatpush1.bf16.msra.mxu0 %v3611
    %5114 = vmatprep.subr.bf16.mxu0 %v3616
    %5115 = vmatpush1.bf16.msra.mxu0 %v3615
    %5116 = vmatprep.subr.bf16.mxu0 %v3620
    %5117 = vmatpush1.bf16.msra.mxu0 %v3619
    %5118 = vmatprep.subr.bf16.mxu0 %v3624
    %5119 = vmatpush1.bf16.msra.mxu0 %v3623
    %5120 = vmatprep.subr.bf16.mxu0 %v3628
    %5121 = vmatpush1.bf16.msra.mxu0 %v3627
    %5122 = vmatprep.subr.bf16.mxu0 %v3632
    %5123 = vmatpush1.bf16.msra.mxu0 %v3631
    %5124 = vmatprep.subr.bf16.mxu0 %v3636
    %5125 = vmatpush1.bf16.msra.mxu0 %v3635
    %5126 = vmatprep.subr.bf16.mxu0 %v3640
    %5127 = vmatpush1.bf16.msra.mxu0 %v3639
    %5128 = vmatprep.subr.bf16.mxu0 %v3644
    %5129 = vmatpush1.bf16.msra.mxu0 %v3643
    %5130 = vmatprep.subr.bf16.mxu0 %v3648
    %5131 = vmatpush1.bf16.msra.mxu0 %v3647
    %5132 = vmatprep.mubr.bf16.mxu0 %v408
    %5133 = vmatmul.mubr.bf16.gmra.mrb[0].mxu0 %v407
    %v5134 = vpop.f32.mrb[0].mxu0
    %v5135 = vadd.f32 %v5094, %v5134
    %v5136 = vpop.f32.mrb[0].mxu0
    %v5137 = vadd.f32 %v5096, %v5136
    %v5138 = vpop.f32.mrb[0].mxu0
    %v5139 = vpop.f32.mrb[0].mxu0
    %5140 = vdwg.mxu0
    %5141 = vmatprep.subr.bf16.mxu0 %v3652
    %5142 = vmatpush1.bf16.msra.mxu0 %v3651
    %5143 = vmatprep.subr.bf16.mxu0 %v3656
    %5144 = vmatpush1.bf16.msra.mxu0 %v3655
    %5145 = vmatprep.subr.bf16.mxu0 %v3660
    %5146 = vmatpush1.bf16.msra.mxu0 %v3659
    %5147 = vmatprep.subr.bf16.mxu0 %v3664
    %5148 = vmatpush1.bf16.msra.mxu0 %v3663
    %5149 = vmatprep.subr.bf16.mxu0 %v3668
    %5150 = vmatpush1.bf16.msra.mxu0 %v3667
    %5151 = vmatprep.subr.bf16.mxu0 %v3672
    %5152 = vmatpush1.bf16.msra.mxu0 %v3671
    %5153 = vmatprep.subr.bf16.mxu0 %v3676
    %5154 = vmatpush1.bf16.msra.mxu0 %v3675
    %5155 = vmatprep.subr.bf16.mxu0 %v3680
    %5156 = vmatpush1.bf16.msra.mxu0 %v3679
    %5157 = vmatprep.subr.bf16.mxu0 %v3684
    %5158 = vmatpush1.bf16.msra.mxu0 %v3683
    %5159 = vmatprep.subr.bf16.mxu0 %v3688
    %5160 = vmatpush1.bf16.msra.mxu0 %v3687
    %5161 = vmatprep.subr.bf16.mxu0 %v3692
    %5162 = vmatpush1.bf16.msra.mxu0 %v3691
    %5163 = vmatprep.subr.bf16.mxu0 %v3696
    %5164 = vmatpush1.bf16.msra.mxu0 %v3695
    %5165 = vmatprep.subr.bf16.mxu0 %v3700
    %5166 = vmatpush1.bf16.msra.mxu0 %v3699
    %5167 = vmatprep.subr.bf16.mxu0 %v3704
    %5168 = vmatpush1.bf16.msra.mxu0 %v3703
    %5169 = vmatprep.subr.bf16.mxu0 %v3708
    %5170 = vmatpush1.bf16.msra.mxu0 %v3707
    %5171 = vmatprep.subr.bf16.mxu0 %v3712
    %5172 = vmatpush1.bf16.msra.mxu0 %v3711
    %5173 = vmatprep.mubr.bf16.mxu0 %v410
    %5174 = vmatmul.mubr.bf16.gmra.mrb[0].mxu0 %v409
    %v5175 = vpop.f32.mrb[0].mxu0
    %v5176 = vadd.f32 %v5135, %v5175
    %v5177 = vpop.f32.mrb[0].mxu0
    %v5178 = vadd.f32 %v5137, %v5177
    %v5179 = vpop.f32.mrb[0].mxu0
    %v5180 = vpop.f32.mrb[0].mxu0
    %5181 = vdwg.mxu0
    %5182 = vmatprep.subr.bf16.mxu0 %v3716
    %5183 = vmatpush1.bf16.msra.mxu0 %v3715
    %5184 = vmatprep.subr.bf16.mxu0 %v3720
    %5185 = vmatpush1.bf16.msra.mxu0 %v3719
    %5186 = vmatprep.subr.bf16.mxu0 %v3724
    %5187 = vmatpush1.bf16.msra.mxu0 %v3723
    %5188 = vmatprep.subr.bf16.mxu0 %v3728
    %5189 = vmatpush1.bf16.msra.mxu0 %v3727
    %5190 = vmatprep.subr.bf16.mxu0 %v3732
    %5191 = vmatpush1.bf16.msra.mxu0 %v3731
    %5192 = vmatprep.subr.bf16.mxu0 %v3736
    %5193 = vmatpush1.bf16.msra.mxu0 %v3735
    %5194 = vmatprep.subr.bf16.mxu0 %v3740
    %5195 = vmatpush1.bf16.msra.mxu0 %v3739
    %5196 = vmatprep.subr.bf16.mxu0 %v3744
    %5197 = vmatpush1.bf16.msra.mxu0 %v3743
    %5198 = vmatprep.subr.bf16.mxu0 %v3748
    %5199 = vmatpush1.bf16.msra.mxu0 %v3747
    %5200 = vmatprep.subr.bf16.mxu0 %v3752
    %5201 = vmatpush1.bf16.msra.mxu0 %v3751
    %5202 = vmatprep.subr.bf16.mxu0 %v3756
    %5203 = vmatpush1.bf16.msra.mxu0 %v3755
    %5204 = vmatprep.subr.bf16.mxu0 %v3760
    %5205 = vmatpush1.bf16.msra.mxu0 %v3759
    %5206 = vmatprep.subr.bf16.mxu0 %v3764
    %5207 = vmatpush1.bf16.msra.mxu0 %v3763
    %5208 = vmatprep.subr.bf16.mxu0 %v3768
    %5209 = vmatpush1.bf16.msra.mxu0 %v3767
    %5210 = vmatprep.subr.bf16.mxu0 %v3772
    %5211 = vmatpush1.bf16.msra.mxu0 %v3771
    %5212 = vmatprep.subr.bf16.mxu0 %v3776
    %5213 = vmatpush1.bf16.msra.mxu0 %v3775
    %5214 = vmatprep.mubr.bf16.mxu0 %v412
    %5215 = vmatmul.mubr.bf16.gmra.mrb[0].mxu0 %v411
    %v5216 = vpop.f32.mrb[0].mxu0
    %v5217 = vadd.f32 %v5176, %v5216
    %v5218 = vpop.f32.mrb[0].mxu0
    %v5219 = vadd.f32 %v5178, %v5218
    %v5220 = vpop.f32.mrb[0].mxu0
    %v5221 = vpop.f32.mrb[0].mxu0
    %5222 = vdwg.mxu0
    %5223 = vmatprep.subr.bf16.mxu0 %v3780
    %5224 = vmatpush1.bf16.msra.mxu0 %v3779
    %5225 = vmatprep.subr.bf16.mxu0 %v3784
    %5226 = vmatpush1.bf16.msra.mxu0 %v3783
    %5227 = vmatprep.subr.bf16.mxu0 %v3788
    %5228 = vmatpush1.bf16.msra.mxu0 %v3787
    %5229 = vmatprep.subr.bf16.mxu0 %v3792
    %5230 = vmatpush1.bf16.msra.mxu0 %v3791
    %5231 = vmatprep.subr.bf16.mxu0 %v3796
    %5232 = vmatpush1.bf16.msra.mxu0 %v3795
    %5233 = vmatprep.subr.bf16.mxu0 %v3800
    %5234 = vmatpush1.bf16.msra.mxu0 %v3799
    %5235 = vmatprep.subr.bf16.mxu0 %v3804
    %5236 = vmatpush1.bf16.msra.mxu0 %v3803
    %5237 = vmatprep.subr.bf16.mxu0 %v3808
    %5238 = vmatpush1.bf16.msra.mxu0 %v3807
    %5239 = vmatprep.subr.bf16.mxu0 %v3812
    %5240 = vmatpush1.bf16.msra.mxu0 %v3811
    %5241 = vmatprep.subr.bf16.mxu0 %v3816
    %5242 = vmatpush1.bf16.msra.mxu0 %v3815
    %5243 = vmatprep.subr.bf16.mxu0 %v3820
    %5244 = vmatpush1.bf16.msra.mxu0 %v3819
    %5245 = vmatprep.subr.bf16.mxu0 %v3824
    %5246 = vmatpush1.bf16.msra.mxu0 %v3823
    %5247 = vmatprep.subr.bf16.mxu0 %v3828
    %5248 = vmatpush1.bf16.msra.mxu0 %v3827
    %5249 = vmatprep.subr.bf16.mxu0 %v3832
    %5250 = vmatpush1.bf16.msra.mxu0 %v3831
    %5251 = vmatprep.subr.bf16.mxu0 %v3836
    %5252 = vmatpush1.bf16.msra.mxu0 %v3835
    %5253 = vmatprep.subr.bf16.mxu0 %v3840
    %5254 = vmatpush1.bf16.msra.mxu0 %v3839
    %5255 = vmatprep.mubr.bf16.mxu0 %v414
    %5256 = vmatmul.mubr.bf16.gmra.mrb[0].mxu0 %v413
    %v5257 = vpop.f32.mrb[0].mxu0
    %v5258 = vadd.f32 %v5217, %v5257
    %v5259 = vpop.f32.mrb[0].mxu0
    %v5260 = vadd.f32 %v5219, %v5259
    %v5261 = vpop.f32.mrb[0].mxu0
    %v5262 = vpop.f32.mrb[0].mxu0
    %5263 = vdwg.mxu0
    %5264 = vmatprep.subr.bf16.mxu0 %v3844
    %5265 = vmatpush1.bf16.msra.mxu0 %v3843
    %5266 = vmatprep.subr.bf16.mxu0 %v3848
    %5267 = vmatpush1.bf16.msra.mxu0 %v3847
    %5268 = vmatprep.subr.bf16.mxu0 %v3852
    %5269 = vmatpush1.bf16.msra.mxu0 %v3851
    %5270 = vmatprep.subr.bf16.mxu0 %v3856
    %5271 = vmatpush1.bf16.msra.mxu0 %v3855
    %5272 = vmatprep.subr.bf16.mxu0 %v3860
    %5273 = vmatpush1.bf16.msra.mxu0 %v3859
    %5274 = vmatprep.subr.bf16.mxu0 %v3864
    %5275 = vmatpush1.bf16.msra.mxu0 %v3863
    %5276 = vmatprep.subr.bf16.mxu0 %v3868
    %5277 = vmatpush1.bf16.msra.mxu0 %v3867
    %5278 = vmatprep.subr.bf16.mxu0 %v3872
    %5279 = vmatpush1.bf16.msra.mxu0 %v3871
    %5280 = vmatprep.subr.bf16.mxu0 %v3876
    %5281 = vmatpush1.bf16.msra.mxu0 %v3875
    %5282 = vmatprep.subr.bf16.mxu0 %v3880
    %5283 = vmatpush1.bf16.msra.mxu0 %v3879
    %5284 = vmatprep.subr.bf16.mxu0 %v3884
    %5285 = vmatpush1.bf16.msra.mxu0 %v3883
    %5286 = vmatprep.subr.bf16.mxu0 %v3888
    %5287 = vmatpush1.bf16.msra.mxu0 %v3887
    %5288 = vmatprep.subr.bf16.mxu0 %v3892
    %5289 = vmatpush1.bf16.msra.mxu0 %v3891
    %5290 = vmatprep.subr.bf16.mxu0 %v3896
    %5291 = vmatpush1.bf16.msra.mxu0 %v3895
    %5292 = vmatprep.subr.bf16.mxu0 %v3900
    %5293 = vmatpush1.bf16.msra.mxu0 %v3899
    %5294 = vmatprep.subr.bf16.mxu0 %v3904
    %5295 = vmatpush1.bf16.msra.mxu0 %v3903
    %5296 = vmatprep.mubr.bf16.mxu0 %v416
    %5297 = vmatmul.mubr.bf16.gmra.mrb[0].mxu0 %v415
    %v5298 = vpop.f32.mrb[0].mxu0
    %v5299 = vadd.f32 %v5258, %v5298
    %v5300 = vpop.f32.mrb[0].mxu0
    %v5301 = vadd.f32 %v5260, %v5300
    %v5302 = vpop.f32.mrb[0].mxu0
    %v5303 = vpop.f32.mrb[0].mxu0
    %5304 = vdwg.mxu0
    %5305 = vmatprep.subr.bf16.mxu0 %v3908
    %5306 = vmatpush1.bf16.msra.mxu0 %v3907
    %5307 = vmatprep.subr.bf16.mxu0 %v3912
    %5308 = vmatpush1.bf16.msra.mxu0 %v3911
    %5309 = vmatprep.subr.bf16.mxu0 %v3916
    %5310 = vmatpush1.bf16.msra.mxu0 %v3915
    %5311 = vmatprep.subr.bf16.mxu0 %v3920
    %5312 = vmatpush1.bf16.msra.mxu0 %v3919
    %5313 = vmatprep.subr.bf16.mxu0 %v3924
    %5314 = vmatpush1.bf16.msra.mxu0 %v3923
    %5315 = vmatprep.subr.bf16.mxu0 %v3928
    %5316 = vmatpush1.bf16.msra.mxu0 %v3927
    %5317 = vmatprep.subr.bf16.mxu0 %v3932
    %5318 = vmatpush1.bf16.msra.mxu0 %v3931
    %5319 = vmatprep.subr.bf16.mxu0 %v3936
    %5320 = vmatpush1.bf16.msra.mxu0 %v3935
    %5321 = vmatprep.subr.bf16.mxu0 %v3940
    %5322 = vmatpush1.bf16.msra.mxu0 %v3939
    %5323 = vmatprep.subr.bf16.mxu0 %v3944
    %5324 = vmatpush1.bf16.msra.mxu0 %v3943
    %5325 = vmatprep.subr.bf16.mxu0 %v3948
    %5326 = vmatpush1.bf16.msra.mxu0 %v3947
    %5327 = vmatprep.subr.bf16.mxu0 %v3952
    %5328 = vmatpush1.bf16.msra.mxu0 %v3951
    %5329 = vmatprep.subr.bf16.mxu0 %v3956
    %5330 = vmatpush1.bf16.msra.mxu0 %v3955
    %5331 = vmatprep.subr.bf16.mxu0 %v3960
    %5332 = vmatpush1.bf16.msra.mxu0 %v3959
    %5333 = vmatprep.subr.bf16.mxu0 %v3964
    %5334 = vmatpush1.bf16.msra.mxu0 %v3963
    %5335 = vmatprep.subr.bf16.mxu0 %v3968
    %5336 = vmatpush1.bf16.msra.mxu0 %v3967
    %5337 = vmatprep.mubr.bf16.mxu0 %v418
    %5338 = vmatmul.mubr.bf16.gmra.mrb[0].mxu0 %v417
    %v5339 = vpop.f32.mrb[0].mxu0
    %v5340 = vadd.f32 %v5299, %v5339
    %v5341 = vpop.f32.mrb[0].mxu0
    %v5342 = vadd.f32 %v5301, %v5341
    %v5343 = vpop.f32.mrb[0].mxu0
    %v5344 = vpop.f32.mrb[0].mxu0
    %5345 = vdwg.mxu0
    %5346 = vmatprep.subr.bf16.mxu0 %v3972
    %5347 = vmatpush1.bf16.msra.mxu0 %v3971
    %5348 = vmatprep.subr.bf16.mxu0 %v3976
    %5349 = vmatpush1.bf16.msra.mxu0 %v3975
    %5350 = vmatprep.subr.bf16.mxu0 %v3980
    %5351 = vmatpush1.bf16.msra.mxu0 %v3979
    %5352 = vmatprep.subr.bf16.mxu0 %v3984
    %5353 = vmatpush1.bf16.msra.mxu0 %v3983
    %5354 = vmatprep.subr.bf16.mxu0 %v3988
    %5355 = vmatpush1.bf16.msra.mxu0 %v3987
    %5356 = vmatprep.subr.bf16.mxu0 %v3992
    %5357 = vmatpush1.bf16.msra.mxu0 %v3991
    %5358 = vmatprep.subr.bf16.mxu0 %v3996
    %5359 = vmatpush1.bf16.msra.mxu0 %v3995
    %5360 = vmatprep.subr.bf16.mxu0 %v4000
    %5361 = vmatpush1.bf16.msra.mxu0 %v3999
    %5362 = vmatprep.subr.bf16.mxu0 %v4004
    %5363 = vmatpush1.bf16.msra.mxu0 %v4003
    %5364 = vmatprep.subr.bf16.mxu0 %v4008
    %5365 = vmatpush1.bf16.msra.mxu0 %v4007
    %5366 = vmatprep.subr.bf16.mxu0 %v4012
    %5367 = vmatpush1.bf16.msra.mxu0 %v4011
    %5368 = vmatprep.subr.bf16.mxu0 %v4016
    %5369 = vmatpush1.bf16.msra.mxu0 %v4015
    %5370 = vmatprep.subr.bf16.mxu0 %v4020
    %5371 = vmatpush1.bf16.msra.mxu0 %v4019
    %5372 = vmatprep.subr.bf16.mxu0 %v4024
    %5373 = vmatpush1.bf16.msra.mxu0 %v4023
    %5374 = vmatprep.subr.bf16.mxu0 %v4028
    %5375 = vmatpush1.bf16.msra.mxu0 %v4027
    %5376 = vmatprep.subr.bf16.mxu0 %v4032
    %5377 = vmatpush1.bf16.msra.mxu0 %v4031
    %5378 = vmatprep.mubr.bf16.mxu0 %v420
    %5379 = vmatmul.mubr.bf16.gmra.mrb[0].mxu0 %v419
    %v5380 = vpop.f32.mrb[0].mxu0
    %v5381 = vadd.f32 %v5340, %v5380
    %v5382 = vpop.f32.mrb[0].mxu0
    %v5383 = vadd.f32 %v5342, %v5382
    %v5384 = vpop.f32.mrb[0].mxu0
    %v5385 = vpop.f32.mrb[0].mxu0
    %5386 = vdwg.mxu0
    %5387 = vmatprep.subr.bf16.mxu0 %v4036
    %5388 = vmatpush1.bf16.msra.mxu0 %v4035
    %5389 = vmatprep.subr.bf16.mxu0 %v4040
    %5390 = vmatpush1.bf16.msra.mxu0 %v4039
    %5391 = vmatprep.subr.bf16.mxu0 %v4044
    %5392 = vmatpush1.bf16.msra.mxu0 %v4043
    %5393 = vmatprep.subr.bf16.mxu0 %v4048
    %5394 = vmatpush1.bf16.msra.mxu0 %v4047
    %5395 = vmatprep.subr.bf16.mxu0 %v4052
    %5396 = vmatpush1.bf16.msra.mxu0 %v4051
    %5397 = vmatprep.subr.bf16.mxu0 %v4056
    %5398 = vmatpush1.bf16.msra.mxu0 %v4055
    %5399 = vmatprep.subr.bf16.mxu0 %v4060
    %5400 = vmatpush1.bf16.msra.mxu0 %v4059
    %5401 = vmatprep.subr.bf16.mxu0 %v4064
    %5402 = vmatpush1.bf16.msra.mxu0 %v4063
    %5403 = vmatprep.subr.bf16.mxu0 %v4068
    %5404 = vmatpush1.bf16.msra.mxu0 %v4067
    %5405 = vmatprep.subr.bf16.mxu0 %v4072
    %5406 = vmatpush1.bf16.msra.mxu0 %v4071
    %5407 = vmatprep.subr.bf16.mxu0 %v4076
    %5408 = vmatpush1.bf16.msra.mxu0 %v4075
    %5409 = vmatprep.subr.bf16.mxu0 %v4080
    %5410 = vmatpush1.bf16.msra.mxu0 %v4079
    %5411 = vmatprep.subr.bf16.mxu0 %v4084
    %5412 = vmatpush1.bf16.msra.mxu0 %v4083
    %5413 = vmatprep.subr.bf16.mxu0 %v4088
    %5414 = vmatpush1.bf16.msra.mxu0 %v4087
    %5415 = vmatprep.subr.bf16.mxu0 %v4092
    %5416 = vmatpush1.bf16.msra.mxu0 %v4091
    %5417 = vmatprep.subr.bf16.mxu0 %v4096
    %5418 = vmatpush1.bf16.msra.mxu0 %v4095
    %5419 = vmatprep.mubr.bf16.mxu0 %v422
    %5420 = vmatmul.mubr.bf16.gmra.mrb[0].mxu0 %v421
    %v5421 = vpop.f32.mrb[0].mxu0
    %v5422 = vadd.f32 %v5381, %v5421
    %v5423 = vpop.f32.mrb[0].mxu0
    %v5424 = vadd.f32 %v5383, %v5423
    %v5425 = vpop.f32.mrb[0].mxu0
    %v5426 = vpop.f32.mrb[0].mxu0
    %5427 = vdwg.mxu0
    %5428 = vmatprep.subr.bf16.mxu0 %v4100
    %5429 = vmatpush1.bf16.msra.mxu0 %v4099
    %5430 = vmatprep.subr.bf16.mxu0 %v4104
    %5431 = vmatpush1.bf16.msra.mxu0 %v4103
    %5432 = vmatprep.subr.bf16.mxu0 %v4108
    %5433 = vmatpush1.bf16.msra.mxu0 %v4107
    %5434 = vmatprep.subr.bf16.mxu0 %v4112
    %5435 = vmatpush1.bf16.msra.mxu0 %v4111
    %5436 = vmatprep.subr.bf16.mxu0 %v4116
    %5437 = vmatpush1.bf16.msra.mxu0 %v4115
    %5438 = vmatprep.subr.bf16.mxu0 %v4120
    %5439 = vmatpush1.bf16.msra.mxu0 %v4119
    %5440 = vmatprep.subr.bf16.mxu0 %v4124
    %5441 = vmatpush1.bf16.msra.mxu0 %v4123
    %5442 = vmatprep.subr.bf16.mxu0 %v4128
    %5443 = vmatpush1.bf16.msra.mxu0 %v4127
    %5444 = vmatprep.subr.bf16.mxu0 %v4132
    %5445 = vmatpush1.bf16.msra.mxu0 %v4131
    %5446 = vmatprep.subr.bf16.mxu0 %v4136
    %5447 = vmatpush1.bf16.msra.mxu0 %v4135
    %5448 = vmatprep.subr.bf16.mxu0 %v4140
    %5449 = vmatpush1.bf16.msra.mxu0 %v4139
    %5450 = vmatprep.subr.bf16.mxu0 %v4144
    %5451 = vmatpush1.bf16.msra.mxu0 %v4143
    %5452 = vmatprep.subr.bf16.mxu0 %v4148
    %5453 = vmatpush1.bf16.msra.mxu0 %v4147
    %5454 = vmatprep.subr.bf16.mxu0 %v4152
    %5455 = vmatpush1.bf16.msra.mxu0 %v4151
    %5456 = vmatprep.subr.bf16.mxu0 %v4156
    %5457 = vmatpush1.bf16.msra.mxu0 %v4155
    %5458 = vmatprep.subr.bf16.mxu0 %v4160
    %5459 = vmatpush1.bf16.msra.mxu0 %v4159
    %5460 = vmatprep.mubr.bf16.mxu0 %v424
    %5461 = vmatmul.mubr.bf16.gmra.mrb[0].mxu0 %v423
    %v5462 = vpop.f32.mrb[0].mxu0
    %v5463 = vadd.f32 %v5422, %v5462
    %v5464 = vpop.f32.mrb[0].mxu0
    %v5465 = vadd.f32 %v5424, %v5464
    %v5466 = vpop.f32.mrb[0].mxu0
    %v5467 = vpop.f32.mrb[0].mxu0
    %5468 = vdwg.mxu0
    %5469 = vmatprep.subr.bf16.mxu0 %v4164
    %5470 = vmatpush1.bf16.msra.mxu0 %v4163
    %5471 = vmatprep.subr.bf16.mxu0 %v4168
    %5472 = vmatpush1.bf16.msra.mxu0 %v4167
    %5473 = vmatprep.subr.bf16.mxu0 %v4172
    %5474 = vmatpush1.bf16.msra.mxu0 %v4171
    %5475 = vmatprep.subr.bf16.mxu0 %v4176
    %5476 = vmatpush1.bf16.msra.mxu0 %v4175
    %5477 = vmatprep.subr.bf16.mxu0 %v4180
    %5478 = vmatpush1.bf16.msra.mxu0 %v4179
    %5479 = vmatprep.subr.bf16.mxu0 %v4184
    %5480 = vmatpush1.bf16.msra.mxu0 %v4183
    %5481 = vmatprep.subr.bf16.mxu0 %v4188
    %5482 = vmatpush1.bf16.msra.mxu0 %v4187
    %5483 = vmatprep.subr.bf16.mxu0 %v4192
    %5484 = vmatpush1.bf16.msra.mxu0 %v4191
    %5485 = vmatprep.subr.bf16.mxu0 %v4196
    %5486 = vmatpush1.bf16.msra.mxu0 %v4195
    %5487 = vmatprep.subr.bf16.mxu0 %v4200
    %5488 = vmatpush1.bf16.msra.mxu0 %v4199
    %5489 = vmatprep.subr.bf16.mxu0 %v4204
    %5490 = vmatpush1.bf16.msra.mxu0 %v4203
    %5491 = vmatprep.subr.bf16.mxu0 %v4208
    %5492 = vmatpush1.bf16.msra.mxu0 %v4207
    %5493 = vmatprep.subr.bf16.mxu0 %v4212
    %5494 = vmatpush1.bf16.msra.mxu0 %v4211
    %5495 = vmatprep.subr.bf16.mxu0 %v4216
    %5496 = vmatpush1.bf16.msra.mxu0 %v4215
    %5497 = vmatprep.subr.bf16.mxu0 %v4220
    %5498 = vmatpush1.bf16.msra.mxu0 %v4219
    %5499 = vmatprep.subr.bf16.mxu0 %v4224
    %5500 = vmatpush1.bf16.msra.mxu0 %v4223
    %5501 = vmatprep.mubr.bf16.mxu0 %v426
    %5502 = vmatmul.mubr.bf16.gmra.mrb[0].mxu0 %v425
    %v5503 = vpop.f32.mrb[0].mxu0
    %v5504 = vadd.f32 %v5463, %v5503
    %v5505 = vpop.f32.mrb[0].mxu0
    %v5506 = vadd.f32 %v5465, %v5505
    %v5507 = vpop.f32.mrb[0].mxu0
    %v5508 = vpop.f32.mrb[0].mxu0
    %5509 = vdwg.mxu0
    %5510 = vmatprep.subr.bf16.mxu0 %v4228
    %5511 = vmatpush1.bf16.msra.mxu0 %v4227
    %5512 = vmatprep.subr.bf16.mxu0 %v4232
    %5513 = vmatpush1.bf16.msra.mxu0 %v4231
    %5514 = vmatprep.subr.bf16.mxu0 %v4236
    %5515 = vmatpush1.bf16.msra.mxu0 %v4235
    %5516 = vmatprep.subr.bf16.mxu0 %v4240
    %5517 = vmatpush1.bf16.msra.mxu0 %v4239
    %5518 = vmatprep.subr.bf16.mxu0 %v4244
    %5519 = vmatpush1.bf16.msra.mxu0 %v4243
    %5520 = vmatprep.subr.bf16.mxu0 %v4248
    %5521 = vmatpush1.bf16.msra.mxu0 %v4247
    %5522 = vmatprep.subr.bf16.mxu0 %v4252
    %5523 = vmatpush1.bf16.msra.mxu0 %v4251
    %5524 = vmatprep.subr.bf16.mxu0 %v4256
    %5525 = vmatpush1.bf16.msra.mxu0 %v4255
    %5526 = vmatprep.subr.bf16.mxu0 %v4260
    %5527 = vmatpush1.bf16.msra.mxu0 %v4259
    %5528 = vmatprep.subr.bf16.mxu0 %v4264
    %5529 = vmatpush1.bf16.msra.mxu0 %v4263
    %5530 = vmatprep.subr.bf16.mxu0 %v4268
    %5531 = vmatpush1.bf16.msra.mxu0 %v4267
    %5532 = vmatprep.subr.bf16.mxu0 %v4272
    %5533 = vmatpush1.bf16.msra.mxu0 %v4271
    %5534 = vmatprep.subr.bf16.mxu0 %v4276
    %5535 = vmatpush1.bf16.msra.mxu0 %v4275
    %5536 = vmatprep.subr.bf16.mxu0 %v4280
    %5537 = vmatpush1.bf16.msra.mxu0 %v4279
    %5538 = vmatprep.subr.bf16.mxu0 %v4284
    %5539 = vmatpush1.bf16.msra.mxu0 %v4283
    %5540 = vmatprep.subr.bf16.mxu0 %v4288
    %5541 = vmatpush1.bf16.msra.mxu0 %v4287
    %5542 = vmatprep.mubr.bf16.mxu0 %v428
    %5543 = vmatmul.mubr.bf16.gmra.mrb[0].mxu0 %v427
    %v5544 = vpop.f32.mrb[0].mxu0
    %v5545 = vadd.f32 %v5504, %v5544
    %v5546 = vpop.f32.mrb[0].mxu0
    %v5547 = vadd.f32 %v5506, %v5546
    %v5548 = vpop.f32.mrb[0].mxu0
    %v5549 = vpop.f32.mrb[0].mxu0
    %5550 = vdwg.mxu0
    %5551 = vmatprep.subr.bf16.mxu0 %v3526
    %5552 = vmatpush1.bf16.msra.mxu0 %v3525
    %5553 = vmatprep.subr.bf16.mxu0 %v3530
    %5554 = vmatpush1.bf16.msra.mxu0 %v3529
    %5555 = vmatprep.subr.bf16.mxu0 %v3534
    %5556 = vmatpush1.bf16.msra.mxu0 %v3533
    %5557 = vmatprep.subr.bf16.mxu0 %v3538
    %5558 = vmatpush1.bf16.msra.mxu0 %v3537
    %5559 = vmatprep.subr.bf16.mxu0 %v3542
    %5560 = vmatpush1.bf16.msra.mxu0 %v3541
    %5561 = vmatprep.subr.bf16.mxu0 %v3546
    %5562 = vmatpush1.bf16.msra.mxu0 %v3545
    %5563 = vmatprep.subr.bf16.mxu0 %v3550
    %5564 = vmatpush1.bf16.msra.mxu0 %v3549
    %5565 = vmatprep.subr.bf16.mxu0 %v3554
    %5566 = vmatpush1.bf16.msra.mxu0 %v3553
    %5567 = vmatprep.subr.bf16.mxu0 %v3558
    %5568 = vmatpush1.bf16.msra.mxu0 %v3557
    %5569 = vmatprep.subr.bf16.mxu0 %v3562
    %5570 = vmatpush1.bf16.msra.mxu0 %v3561
    %5571 = vmatprep.subr.bf16.mxu0 %v3566
    %5572 = vmatpush1.bf16.msra.mxu0 %v3565
    %5573 = vmatprep.subr.bf16.mxu0 %v3570
    %5574 = vmatpush1.bf16.msra.mxu0 %v3569
    %5575 = vmatprep.subr.bf16.mxu0 %v3574
    %5576 = vmatpush1.bf16.msra.mxu0 %v3573
    %5577 = vmatprep.subr.bf16.mxu0 %v3578
    %5578 = vmatpush1.bf16.msra.mxu0 %v3577
    %5579 = vmatprep.subr.bf16.mxu0 %v3582
    %5580 = vmatpush1.bf16.msra.mxu0 %v3581
    %5581 = vmatprep.subr.bf16.mxu0 %v3586
    %5582 = vmatpush1.bf16.msra.mxu0 %v3585
    %5583 = vmatprep.mubr.bf16.mxu0 %v406
    %5584 = vmatmul.mubr.bf16.gmra.mrb[0].mxu0 %v405
    %v5585 = vpop.f32.mrb[0].mxu0
    %v5586 = vadd.f32 %v1210, %v5585
    %v5587 = vpop.f32.mrb[0].mxu0
    %v5588 = vadd.f32 %v1214, %v5587
    %v5589 = vpop.f32.mrb[0].mxu0
    %v5590 = vpop.f32.mrb[0].mxu0
    %5591 = vdwg.mxu0
    %5592 = vmatprep.subr.bf16.mxu0 %v3590
    %5593 = vmatpush1.bf16.msra.mxu0 %v3589
    %5594 = vmatprep.subr.bf16.mxu0 %v3594
    %5595 = vmatpush1.bf16.msra.mxu0 %v3593
    %5596 = vmatprep.subr.bf16.mxu0 %v3598
    %5597 = vmatpush1.bf16.msra.mxu0 %v3597
    %5598 = vmatprep.subr.bf16.mxu0 %v3602
    %5599 = vmatpush1.bf16.msra.mxu0 %v3601
    %5600 = vmatprep.subr.bf16.mxu0 %v3606
    %5601 = vmatpush1.bf16.msra.mxu0 %v3605
    %5602 = vmatprep.subr.bf16.mxu0 %v3610
    %5603 = vmatpush1.bf16.msra.mxu0 %v3609
    %5604 = vmatprep.subr.bf16.mxu0 %v3614
    %5605 = vmatpush1.bf16.msra.mxu0 %v3613
    %5606 = vmatprep.subr.bf16.mxu0 %v3618
    %5607 = vmatpush1.bf16.msra.mxu0 %v3617
    %5608 = vmatprep.subr.bf16.mxu0 %v3622
    %5609 = vmatpush1.bf16.msra.mxu0 %v3621
    %5610 = vmatprep.subr.bf16.mxu0 %v3626
    %5611 = vmatpush1.bf16.msra.mxu0 %v3625
    %5612 = vmatprep.subr.bf16.mxu0 %v3630
    %5613 = vmatpush1.bf16.msra.mxu0 %v3629
    %5614 = vmatprep.subr.bf16.mxu0 %v3634
    %5615 = vmatpush1.bf16.msra.mxu0 %v3633
    %5616 = vmatprep.subr.bf16.mxu0 %v3638
    %5617 = vmatpush1.bf16.msra.mxu0 %v3637
    %5618 = vmatprep.subr.bf16.mxu0 %v3642
    %5619 = vmatpush1.bf16.msra.mxu0 %v3641
    %5620 = vmatprep.subr.bf16.mxu0 %v3646
    %5621 = vmatpush1.bf16.msra.mxu0 %v3645
    %5622 = vmatprep.subr.bf16.mxu0 %v3650
    %5623 = vmatpush1.bf16.msra.mxu0 %v3649
    %5624 = vmatprep.mubr.bf16.mxu0 %v408
    %5625 = vmatmul.mubr.bf16.gmra.mrb[0].mxu0 %v407
    %v5626 = vpop.f32.mrb[0].mxu0
    %v5627 = vadd.f32 %v5586, %v5626
    %v5628 = vpop.f32.mrb[0].mxu0
    %v5629 = vadd.f32 %v5588, %v5628
    %v5630 = vpop.f32.mrb[0].mxu0
    %v5631 = vpop.f32.mrb[0].mxu0
    %5632 = vdwg.mxu0
    %5633 = vmatprep.subr.bf16.mxu0 %v3654
    %5634 = vmatpush1.bf16.msra.mxu0 %v3653
    %5635 = vmatprep.subr.bf16.mxu0 %v3658
    %5636 = vmatpush1.bf16.msra.mxu0 %v3657
    %5637 = vmatprep.subr.bf16.mxu0 %v3662
    %5638 = vmatpush1.bf16.msra.mxu0 %v3661
    %5639 = vmatprep.subr.bf16.mxu0 %v3666
    %5640 = vmatpush1.bf16.msra.mxu0 %v3665
    %5641 = vmatprep.subr.bf16.mxu0 %v3670
    %5642 = vmatpush1.bf16.msra.mxu0 %v3669
    %5643 = vmatprep.subr.bf16.mxu0 %v3674
    %5644 = vmatpush1.bf16.msra.mxu0 %v3673
    %5645 = vmatprep.subr.bf16.mxu0 %v3678
    %5646 = vmatpush1.bf16.msra.mxu0 %v3677
    %5647 = vmatprep.subr.bf16.mxu0 %v3682
    %5648 = vmatpush1.bf16.msra.mxu0 %v3681
    %5649 = vmatprep.subr.bf16.mxu0 %v3686
    %5650 = vmatpush1.bf16.msra.mxu0 %v3685
    %5651 = vmatprep.subr.bf16.mxu0 %v3690
    %5652 = vmatpush1.bf16.msra.mxu0 %v3689
    %5653 = vmatprep.subr.bf16.mxu0 %v3694
    %5654 = vmatpush1.bf16.msra.mxu0 %v3693
    %5655 = vmatprep.subr.bf16.mxu0 %v3698
    %5656 = vmatpush1.bf16.msra.mxu0 %v3697
    %5657 = vmatprep.subr.bf16.mxu0 %v3702
    %5658 = vmatpush1.bf16.msra.mxu0 %v3701
    %5659 = vmatprep.subr.bf16.mxu0 %v3706
    %5660 = vmatpush1.bf16.msra.mxu0 %v3705
    %5661 = vmatprep.subr.bf16.mxu0 %v3710
    %5662 = vmatpush1.bf16.msra.mxu0 %v3709
    %5663 = vmatprep.subr.bf16.mxu0 %v3714
    %5664 = vmatpush1.bf16.msra.mxu0 %v3713
    %5665 = vmatprep.mubr.bf16.mxu0 %v410
    %5666 = vmatmul.mubr.bf16.gmra.mrb[0].mxu0 %v409
    %v5667 = vpop.f32.mrb[0].mxu0
    %v5668 = vadd.f32 %v5627, %v5667
    %v5669 = vpop.f32.mrb[0].mxu0
    %v5670 = vadd.f32 %v5629, %v5669
    %v5671 = vpop.f32.mrb[0].mxu0
    %v5672 = vpop.f32.mrb[0].mxu0
    %5673 = vdwg.mxu0
    %5674 = vmatprep.subr.bf16.mxu0 %v3718
    %5675 = vmatpush1.bf16.msra.mxu0 %v3717
    %5676 = vmatprep.subr.bf16.mxu0 %v3722
    %5677 = vmatpush1.bf16.msra.mxu0 %v3721
    %5678 = vmatprep.subr.bf16.mxu0 %v3726
    %5679 = vmatpush1.bf16.msra.mxu0 %v3725
    %5680 = vmatprep.subr.bf16.mxu0 %v3730
    %5681 = vmatpush1.bf16.msra.mxu0 %v3729
    %5682 = vmatprep.subr.bf16.mxu0 %v3734
    %5683 = vmatpush1.bf16.msra.mxu0 %v3733
    %5684 = vmatprep.subr.bf16.mxu0 %v3738
    %5685 = vmatpush1.bf16.msra.mxu0 %v3737
    %5686 = vmatprep.subr.bf16.mxu0 %v3742
    %5687 = vmatpush1.bf16.msra.mxu0 %v3741
    %5688 = vmatprep.subr.bf16.mxu0 %v3746
    %5689 = vmatpush1.bf16.msra.mxu0 %v3745
    %5690 = vmatprep.subr.bf16.mxu0 %v3750
    %5691 = vmatpush1.bf16.msra.mxu0 %v3749
    %5692 = vmatprep.subr.bf16.mxu0 %v3754
    %5693 = vmatpush1.bf16.msra.mxu0 %v3753
    %5694 = vmatprep.subr.bf16.mxu0 %v3758
    %5695 = vmatpush1.bf16.msra.mxu0 %v3757
    %5696 = vmatprep.subr.bf16.mxu0 %v3762
    %5697 = vmatpush1.bf16.msra.mxu0 %v3761
    %5698 = vmatprep.subr.bf16.mxu0 %v3766
    %5699 = vmatpush1.bf16.msra.mxu0 %v3765
    %5700 = vmatprep.subr.bf16.mxu0 %v3770
    %5701 = vmatpush1.bf16.msra.mxu0 %v3769
    %5702 = vmatprep.subr.bf16.mxu0 %v3774
    %5703 = vmatpush1.bf16.msra.mxu0 %v3773
    %5704 = vmatprep.subr.bf16.mxu0 %v3778
    %5705 = vmatpush1.bf16.msra.mxu0 %v3777
    %5706 = vmatprep.mubr.bf16.mxu0 %v412
    %5707 = vmatmul.mubr.bf16.gmra.mrb[0].mxu0 %v411
    %v5708 = vpop.f32.mrb[0].mxu0
    %v5709 = vadd.f32 %v5668, %v5708
    %v5710 = vpop.f32.mrb[0].mxu0
    %v5711 = vadd.f32 %v5670, %v5710
    %v5712 = vpop.f32.mrb[0].mxu0
    %v5713 = vpop.f32.mrb[0].mxu0
    %5714 = vdwg.mxu0
    %5715 = vmatprep.subr.bf16.mxu0 %v3782
    %5716 = vmatpush1.bf16.msra.mxu0 %v3781
    %5717 = vmatprep.subr.bf16.mxu0 %v3786
    %5718 = vmatpush1.bf16.msra.mxu0 %v3785
    %5719 = vmatprep.subr.bf16.mxu0 %v3790
    %5720 = vmatpush1.bf16.msra.mxu0 %v3789
    %5721 = vmatprep.subr.bf16.mxu0 %v3794
    %5722 = vmatpush1.bf16.msra.mxu0 %v3793
    %5723 = vmatprep.subr.bf16.mxu0 %v3798
    %5724 = vmatpush1.bf16.msra.mxu0 %v3797
    %5725 = vmatprep.subr.bf16.mxu0 %v3802
    %5726 = vmatpush1.bf16.msra.mxu0 %v3801
    %5727 = vmatprep.subr.bf16.mxu0 %v3806
    %5728 = vmatpush1.bf16.msra.mxu0 %v3805
    %5729 = vmatprep.subr.bf16.mxu0 %v3810
    %5730 = vmatpush1.bf16.msra.mxu0 %v3809
    %5731 = vmatprep.subr.bf16.mxu0 %v3814
    %5732 = vmatpush1.bf16.msra.mxu0 %v3813
    %5733 = vmatprep.subr.bf16.mxu0 %v3818
    %5734 = vmatpush1.bf16.msra.mxu0 %v3817
    %5735 = vmatprep.subr.bf16.mxu0 %v3822
    %5736 = vmatpush1.bf16.msra.mxu0 %v3821
    %5737 = vmatprep.subr.bf16.mxu0 %v3826
    %5738 = vmatpush1.bf16.msra.mxu0 %v3825
    %5739 = vmatprep.subr.bf16.mxu0 %v3830
    %5740 = vmatpush1.bf16.msra.mxu0 %v3829
    %5741 = vmatprep.subr.bf16.mxu0 %v3834
    %5742 = vmatpush1.bf16.msra.mxu0 %v3833
    %5743 = vmatprep.subr.bf16.mxu0 %v3838
    %5744 = vmatpush1.bf16.msra.mxu0 %v3837
    %5745 = vmatprep.subr.bf16.mxu0 %v3842
    %5746 = vmatpush1.bf16.msra.mxu0 %v3841
    %5747 = vmatprep.mubr.bf16.mxu0 %v414
    %5748 = vmatmul.mubr.bf16.gmra.mrb[0].mxu0 %v413
    %v5749 = vpop.f32.mrb[0].mxu0
    %v5750 = vadd.f32 %v5709, %v5749
    %v5751 = vpop.f32.mrb[0].mxu0
    %v5752 = vadd.f32 %v5711, %v5751
    %v5753 = vpop.f32.mrb[0].mxu0
    %v5754 = vpop.f32.mrb[0].mxu0
    %5755 = vdwg.mxu0
    %5756 = vmatprep.subr.bf16.mxu0 %v3846
    %5757 = vmatpush1.bf16.msra.mxu0 %v3845
    %5758 = vmatprep.subr.bf16.mxu0 %v3850
    %5759 = vmatpush1.bf16.msra.mxu0 %v3849
    %5760 = vmatprep.subr.bf16.mxu0 %v3854
    %5761 = vmatpush1.bf16.msra.mxu0 %v3853
    %5762 = vmatprep.subr.bf16.mxu0 %v3858
    %5763 = vmatpush1.bf16.msra.mxu0 %v3857
    %5764 = vmatprep.subr.bf16.mxu0 %v3862
    %5765 = vmatpush1.bf16.msra.mxu0 %v3861
    %5766 = vmatprep.subr.bf16.mxu0 %v3866
    %5767 = vmatpush1.bf16.msra.mxu0 %v3865
    %5768 = vmatprep.subr.bf16.mxu0 %v3870
    %5769 = vmatpush1.bf16.msra.mxu0 %v3869
    %5770 = vmatprep.subr.bf16.mxu0 %v3874
    %5771 = vmatpush1.bf16.msra.mxu0 %v3873
    %5772 = vmatprep.subr.bf16.mxu0 %v3878
    %5773 = vmatpush1.bf16.msra.mxu0 %v3877
    %5774 = vmatprep.subr.bf16.mxu0 %v3882
    %5775 = vmatpush1.bf16.msra.mxu0 %v3881
    %5776 = vmatprep.subr.bf16.mxu0 %v3886
    %5777 = vmatpush1.bf16.msra.mxu0 %v3885
    %5778 = vmatprep.subr.bf16.mxu0 %v3890
    %5779 = vmatpush1.bf16.msra.mxu0 %v3889
    %5780 = vmatprep.subr.bf16.mxu0 %v3894
    %5781 = vmatpush1.bf16.msra.mxu0 %v3893
    %5782 = vmatprep.subr.bf16.mxu0 %v3898
    %5783 = vmatpush1.bf16.msra.mxu0 %v3897
    %5784 = vmatprep.subr.bf16.mxu0 %v3902
    %5785 = vmatpush1.bf16.msra.mxu0 %v3901
    %5786 = vmatprep.subr.bf16.mxu0 %v3906
    %5787 = vmatpush1.bf16.msra.mxu0 %v3905
    %5788 = vmatprep.mubr.bf16.mxu0 %v416
    %5789 = vmatmul.mubr.bf16.gmra.mrb[0].mxu0 %v415
    %v5790 = vpop.f32.mrb[0].mxu0
    %v5791 = vadd.f32 %v5750, %v5790
    %v5792 = vpop.f32.mrb[0].mxu0
    %v5793 = vadd.f32 %v5752, %v5792
    %v5794 = vpop.f32.mrb[0].mxu0
    %v5795 = vpop.f32.mrb[0].mxu0
    %5796 = vdwg.mxu0
    %5797 = vmatprep.subr.bf16.mxu0 %v3910
    %5798 = vmatpush1.bf16.msra.mxu0 %v3909
    %5799 = vmatprep.subr.bf16.mxu0 %v3914
    %5800 = vmatpush1.bf16.msra.mxu0 %v3913
    %5801 = vmatprep.subr.bf16.mxu0 %v3918
    %5802 = vmatpush1.bf16.msra.mxu0 %v3917
    %5803 = vmatprep.subr.bf16.mxu0 %v3922
    %5804 = vmatpush1.bf16.msra.mxu0 %v3921
    %5805 = vmatprep.subr.bf16.mxu0 %v3926
    %5806 = vmatpush1.bf16.msra.mxu0 %v3925
    %5807 = vmatprep.subr.bf16.mxu0 %v3930
    %5808 = vmatpush1.bf16.msra.mxu0 %v3929
    %5809 = vmatprep.subr.bf16.mxu0 %v3934
    %5810 = vmatpush1.bf16.msra.mxu0 %v3933
    %5811 = vmatprep.subr.bf16.mxu0 %v3938
    %5812 = vmatpush1.bf16.msra.mxu0 %v3937
    %5813 = vmatprep.subr.bf16.mxu0 %v3942
    %5814 = vmatpush1.bf16.msra.mxu0 %v3941
    %5815 = vmatprep.subr.bf16.mxu0 %v3946
    %5816 = vmatpush1.bf16.msra.mxu0 %v3945
    %5817 = vmatprep.subr.bf16.mxu0 %v3950
    %5818 = vmatpush1.bf16.msra.mxu0 %v3949
    %5819 = vmatprep.subr.bf16.mxu0 %v3954
    %5820 = vmatpush1.bf16.msra.mxu0 %v3953
    %5821 = vmatprep.subr.bf16.mxu0 %v3958
    %5822 = vmatpush1.bf16.msra.mxu0 %v3957
    %5823 = vmatprep.subr.bf16.mxu0 %v3962
    %5824 = vmatpush1.bf16.msra.mxu0 %v3961
    %5825 = vmatprep.subr.bf16.mxu0 %v3966
    %5826 = vmatpush1.bf16.msra.mxu0 %v3965
    %5827 = vmatprep.subr.bf16.mxu0 %v3970
    %5828 = vmatpush1.bf16.msra.mxu0 %v3969
    %5829 = vmatprep.mubr.bf16.mxu0 %v418
    %5830 = vmatmul.mubr.bf16.gmra.mrb[0].mxu0 %v417
    %v5831 = vpop.f32.mrb[0].mxu0
    %v5832 = vadd.f32 %v5791, %v5831
    %v5833 = vpop.f32.mrb[0].mxu0
    %v5834 = vadd.f32 %v5793, %v5833
    %v5835 = vpop.f32.mrb[0].mxu0
    %v5836 = vpop.f32.mrb[0].mxu0
    %5837 = vdwg.mxu0
    %5838 = vmatprep.subr.bf16.mxu0 %v3974
    %5839 = vmatpush1.bf16.msra.mxu0 %v3973
    %5840 = vmatprep.subr.bf16.mxu0 %v3978
    %5841 = vmatpush1.bf16.msra.mxu0 %v3977
    %5842 = vmatprep.subr.bf16.mxu0 %v3982
    %5843 = vmatpush1.bf16.msra.mxu0 %v3981
    %5844 = vmatprep.subr.bf16.mxu0 %v3986
    %5845 = vmatpush1.bf16.msra.mxu0 %v3985
    %5846 = vmatprep.subr.bf16.mxu0 %v3990
    %5847 = vmatpush1.bf16.msra.mxu0 %v3989
    %5848 = vmatprep.subr.bf16.mxu0 %v3994
    %5849 = vmatpush1.bf16.msra.mxu0 %v3993
    %5850 = vmatprep.subr.bf16.mxu0 %v3998
    %5851 = vmatpush1.bf16.msra.mxu0 %v3997
    %5852 = vmatprep.subr.bf16.mxu0 %v4002
    %5853 = vmatpush1.bf16.msra.mxu0 %v4001
    %5854 = vmatprep.subr.bf16.mxu0 %v4006
    %5855 = vmatpush1.bf16.msra.mxu0 %v4005
    %5856 = vmatprep.subr.bf16.mxu0 %v4010
    %5857 = vmatpush1.bf16.msra.mxu0 %v4009
    %5858 = vmatprep.subr.bf16.mxu0 %v4014
    %5859 = vmatpush1.bf16.msra.mxu0 %v4013
    %5860 = vmatprep.subr.bf16.mxu0 %v4018
    %5861 = vmatpush1.bf16.msra.mxu0 %v4017
    %5862 = vmatprep.subr.bf16.mxu0 %v4022
    %5863 = vmatpush1.bf16.msra.mxu0 %v4021
    %5864 = vmatprep.subr.bf16.mxu0 %v4026
    %5865 = vmatpush1.bf16.msra.mxu0 %v4025
    %5866 = vmatprep.subr.bf16.mxu0 %v4030
    %5867 = vmatpush1.bf16.msra.mxu0 %v4029
    %5868 = vmatprep.subr.bf16.mxu0 %v4034
    %5869 = vmatpush1.bf16.msra.mxu0 %v4033
    %5870 = vmatprep.mubr.bf16.mxu0 %v420
    %5871 = vmatmul.mubr.bf16.gmra.mrb[0].mxu0 %v419
    %v5872 = vpop.f32.mrb[0].mxu0
    %v5873 = vadd.f32 %v5832, %v5872
    %v5874 = vpop.f32.mrb[0].mxu0
    %v5875 = vadd.f32 %v5834, %v5874
    %v5876 = vpop.f32.mrb[0].mxu0
    %v5877 = vpop.f32.mrb[0].mxu0
    %5878 = vdwg.mxu0
    %5879 = vmatprep.subr.bf16.mxu0 %v4038
    %5880 = vmatpush1.bf16.msra.mxu0 %v4037
    %5881 = vmatprep.subr.bf16.mxu0 %v4042
    %5882 = vmatpush1.bf16.msra.mxu0 %v4041
    %5883 = vmatprep.subr.bf16.mxu0 %v4046
    %5884 = vmatpush1.bf16.msra.mxu0 %v4045
    %5885 = vmatprep.subr.bf16.mxu0 %v4050
    %5886 = vmatpush1.bf16.msra.mxu0 %v4049
    %5887 = vmatprep.subr.bf16.mxu0 %v4054
    %5888 = vmatpush1.bf16.msra.mxu0 %v4053
    %5889 = vmatprep.subr.bf16.mxu0 %v4058
    %5890 = vmatpush1.bf16.msra.mxu0 %v4057
    %5891 = vmatprep.subr.bf16.mxu0 %v4062
    %5892 = vmatpush1.bf16.msra.mxu0 %v4061
    %5893 = vmatprep.subr.bf16.mxu0 %v4066
    %5894 = vmatpush1.bf16.msra.mxu0 %v4065
    %5895 = vmatprep.subr.bf16.mxu0 %v4070
    %5896 = vmatpush1.bf16.msra.mxu0 %v4069
    %5897 = vmatprep.subr.bf16.mxu0 %v4074
    %5898 = vmatpush1.bf16.msra.mxu0 %v4073
    %5899 = vmatprep.subr.bf16.mxu0 %v4078
    %5900 = vmatpush1.bf16.msra.mxu0 %v4077
    %5901 = vmatprep.subr.bf16.mxu0 %v4082
    %5902 = vmatpush1.bf16.msra.mxu0 %v4081
    %5903 = vmatprep.subr.bf16.mxu0 %v4086
    %5904 = vmatpush1.bf16.msra.mxu0 %v4085
    %5905 = vmatprep.subr.bf16.mxu0 %v4090
    %5906 = vmatpush1.bf16.msra.mxu0 %v4089
    %5907 = vmatprep.subr.bf16.mxu0 %v4094
    %5908 = vmatpush1.bf16.msra.mxu0 %v4093
    %5909 = vmatprep.subr.bf16.mxu0 %v4098
    %5910 = vmatpush1.bf16.msra.mxu0 %v4097
    %5911 = vmatprep.mubr.bf16.mxu0 %v422
    %5912 = vmatmul.mubr.bf16.gmra.mrb[0].mxu0 %v421
    %v5913 = vpop.f32.mrb[0].mxu0
    %v5914 = vadd.f32 %v5873, %v5913
    %v5915 = vpop.f32.mrb[0].mxu0
    %v5916 = vadd.f32 %v5875, %v5915
    %v5917 = vpop.f32.mrb[0].mxu0
    %v5918 = vpop.f32.mrb[0].mxu0
    %5919 = vdwg.mxu0
    %5920 = vmatprep.subr.bf16.mxu0 %v4102
    %5921 = vmatpush1.bf16.msra.mxu0 %v4101
    %5922 = vmatprep.subr.bf16.mxu0 %v4106
    %5923 = vmatpush1.bf16.msra.mxu0 %v4105
    %5924 = vmatprep.subr.bf16.mxu0 %v4110
    %5925 = vmatpush1.bf16.msra.mxu0 %v4109
    %5926 = vmatprep.subr.bf16.mxu0 %v4114
    %5927 = vmatpush1.bf16.msra.mxu0 %v4113
    %5928 = vmatprep.subr.bf16.mxu0 %v4118
    %5929 = vmatpush1.bf16.msra.mxu0 %v4117
    %5930 = vmatprep.subr.bf16.mxu0 %v4122
    %5931 = vmatpush1.bf16.msra.mxu0 %v4121
    %5932 = vmatprep.subr.bf16.mxu0 %v4126
    %5933 = vmatpush1.bf16.msra.mxu0 %v4125
    %5934 = vmatprep.subr.bf16.mxu0 %v4130
    %5935 = vmatpush1.bf16.msra.mxu0 %v4129
    %5936 = vmatprep.subr.bf16.mxu0 %v4134
    %5937 = vmatpush1.bf16.msra.mxu0 %v4133
    %5938 = vmatprep.subr.bf16.mxu0 %v4138
    %5939 = vmatpush1.bf16.msra.mxu0 %v4137
    %5940 = vmatprep.subr.bf16.mxu0 %v4142
    %5941 = vmatpush1.bf16.msra.mxu0 %v4141
    %5942 = vmatprep.subr.bf16.mxu0 %v4146
    %5943 = vmatpush1.bf16.msra.mxu0 %v4145
    %5944 = vmatprep.subr.bf16.mxu0 %v4150
    %5945 = vmatpush1.bf16.msra.mxu0 %v4149
    %5946 = vmatprep.subr.bf16.mxu0 %v4154
    %5947 = vmatpush1.bf16.msra.mxu0 %v4153
    %5948 = vmatprep.subr.bf16.mxu0 %v4158
    %5949 = vmatpush1.bf16.msra.mxu0 %v4157
    %5950 = vmatprep.subr.bf16.mxu0 %v4162
    %5951 = vmatpush1.bf16.msra.mxu0 %v4161
    %5952 = vmatprep.mubr.bf16.mxu0 %v424
    %5953 = vmatmul.mubr.bf16.gmra.mrb[0].mxu0 %v423
    %v5954 = vpop.f32.mrb[0].mxu0
    %v5955 = vadd.f32 %v5914, %v5954
    %v5956 = vpop.f32.mrb[0].mxu0
    %v5957 = vadd.f32 %v5916, %v5956
    %v5958 = vpop.f32.mrb[0].mxu0
    %v5959 = vpop.f32.mrb[0].mxu0
    %5960 = vdwg.mxu0
    %5961 = vmatprep.subr.bf16.mxu0 %v4166
    %5962 = vmatpush1.bf16.msra.mxu0 %v4165
    %5963 = vmatprep.subr.bf16.mxu0 %v4170
    %5964 = vmatpush1.bf16.msra.mxu0 %v4169
    %5965 = vmatprep.subr.bf16.mxu0 %v4174
    %5966 = vmatpush1.bf16.msra.mxu0 %v4173
    %5967 = vmatprep.subr.bf16.mxu0 %v4178
    %5968 = vmatpush1.bf16.msra.mxu0 %v4177
    %5969 = vmatprep.subr.bf16.mxu0 %v4182
    %5970 = vmatpush1.bf16.msra.mxu0 %v4181
    %5971 = vmatprep.subr.bf16.mxu0 %v4186
    %5972 = vmatpush1.bf16.msra.mxu0 %v4185
    %5973 = vmatprep.subr.bf16.mxu0 %v4190
    %5974 = vmatpush1.bf16.msra.mxu0 %v4189
    %5975 = vmatprep.subr.bf16.mxu0 %v4194
    %5976 = vmatpush1.bf16.msra.mxu0 %v4193
    %5977 = vmatprep.subr.bf16.mxu0 %v4198
    %5978 = vmatpush1.bf16.msra.mxu0 %v4197
    %5979 = vmatprep.subr.bf16.mxu0 %v4202
    %5980 = vmatpush1.bf16.msra.mxu0 %v4201
    %5981 = vmatprep.subr.bf16.mxu0 %v4206
    %5982 = vmatpush1.bf16.msra.mxu0 %v4205
    %5983 = vmatprep.subr.bf16.mxu0 %v4210
    %5984 = vmatpush1.bf16.msra.mxu0 %v4209
    %5985 = vmatprep.subr.bf16.mxu0 %v4214
    %5986 = vmatpush1.bf16.msra.mxu0 %v4213
    %5987 = vmatprep.subr.bf16.mxu0 %v4218
    %5988 = vmatpush1.bf16.msra.mxu0 %v4217
    %5989 = vmatprep.subr.bf16.mxu0 %v4222
    %5990 = vmatpush1.bf16.msra.mxu0 %v4221
    %5991 = vmatprep.subr.bf16.mxu0 %v4226
    %5992 = vmatpush1.bf16.msra.mxu0 %v4225
    %5993 = vmatprep.mubr.bf16.mxu0 %v426
    %5994 = vmatmul.mubr.bf16.gmra.mrb[0].mxu0 %v425
    %v5995 = vpop.f32.mrb[0].mxu0
    %v5996 = vadd.f32 %v5955, %v5995
    %v5997 = vpop.f32.mrb[0].mxu0
    %v5998 = vadd.f32 %v5957, %v5997
    %v5999 = vpop.f32.mrb[0].mxu0
    %v6000 = vpop.f32.mrb[0].mxu0
    %6001 = vdwg.mxu0
    %6002 = vmatprep.subr.bf16.mxu0 %v4230
    %6003 = vmatpush1.bf16.msra.mxu0 %v4229
    %6004 = vmatprep.subr.bf16.mxu0 %v4234
    %6005 = vmatpush1.bf16.msra.mxu0 %v4233
    %6006 = vmatprep.subr.bf16.mxu0 %v4238
    %6007 = vmatpush1.bf16.msra.mxu0 %v4237
    %6008 = vmatprep.subr.bf16.mxu0 %v4242
    %6009 = vmatpush1.bf16.msra.mxu0 %v4241
    %6010 = vmatprep.subr.bf16.mxu0 %v4246
    %6011 = vmatpush1.bf16.msra.mxu0 %v4245
    %6012 = vmatprep.subr.bf16.mxu0 %v4250
    %6013 = vmatpush1.bf16.msra.mxu0 %v4249
    %6014 = vmatprep.subr.bf16.mxu0 %v4254
    %6015 = vmatpush1.bf16.msra.mxu0 %v4253
    %6016 = vmatprep.subr.bf16.mxu0 %v4258
    %6017 = vmatpush1.bf16.msra.mxu0 %v4257
    %6018 = vmatprep.subr.bf16.mxu0 %v4262
    %6019 = vmatpush1.bf16.msra.mxu0 %v4261
    %6020 = vmatprep.subr.bf16.mxu0 %v4266
    %6021 = vmatpush1.bf16.msra.mxu0 %v4265
    %6022 = vmatprep.subr.bf16.mxu0 %v4270
    %6023 = vmatpush1.bf16.msra.mxu0 %v4269
    %6024 = vmatprep.subr.bf16.mxu0 %v4274
    %6025 = vmatpush1.bf16.msra.mxu0 %v4273
    %6026 = vmatprep.subr.bf16.mxu0 %v4278
    %6027 = vmatpush1.bf16.msra.mxu0 %v4277
    %6028 = vmatprep.subr.bf16.mxu0 %v4282
    %6029 = vmatpush1.bf16.msra.mxu0 %v4281
    %6030 = vmatprep.subr.bf16.mxu0 %v4286
    %6031 = vmatpush1.bf16.msra.mxu0 %v4285
    %6032 = vmatprep.subr.bf16.mxu0 %v4290
    %6033 = vmatpush1.bf16.msra.mxu0 %v4289
    %6034 = vmatprep.mubr.bf16.mxu0 %v428
    %6035 = vmatmul.mubr.bf16.gmra.mrb[0].mxu0 %v427
    %v6036 = vpop.f32.mrb[0].mxu0
    %v6037 = vadd.f32 %v5996, %v6036
    %v6038 = vpop.f32.mrb[0].mxu0
    %v6039 = vadd.f32 %v5998, %v6038
    %v6040 = vpop.f32.mrb[0].mxu0
    %v6041 = vpop.f32.mrb[0].mxu0
    %6042 = vdwg.mxu0
    %v6043 = vmax.f32 %v5545, 0.0
    %v6044 = vmax.f32 %v5547, 0.0
    %v6045 = vmax.f32 %v6037, 0.0
    %v6046 = vmax.f32 %v6039, 0.0
    %v6047 = vpack.c.bf16 %v6043, %v6043
    %v6048 = vpack.c.bf16 %v6044, %v6044
    %v6049 = vpack.c.bf16 %v6045, %v6045
    %v6050 = vpack.c.bf16 %v6046, %v6046
    %v6051 = vld [vmem:[#allocation8] sm:$0xff]
    %v6052 = vld [vmem:[#allocation8 + $0x8] sm:$0xff]
    %v6053 = vld [vmem:[#allocation8 + $0x10] sm:$0xff]
    %v6054 = vld [vmem:[#allocation8 + $0x18] sm:$0xff]
    %v6055 = vld [vmem:[#allocation8 + $0x20] sm:$0xff]
    %v6056 = vld [vmem:[#allocation8 + $0x28] sm:$0xff]
    %v6057 = vld [vmem:[#allocation8 + $0x30] sm:$0xff]
    %v6058 = vld [vmem:[#allocation8 + $0x38] sm:$0xff]
    %v6059 = vld [vmem:[#allocation8 + $0x40] sm:$0xff]
    %v6060 = vld [vmem:[#allocation8 + $0x48] sm:$0xff]
    %v6061 = vld [vmem:[#allocation8 + $0x50] sm:$0xff]
    %v6062 = vld [vmem:[#allocation8 + $0x58] sm:$0xff]
    %v6063 = vld [vmem:[#allocation8 + $0x60] sm:$0xff]
    %v6064 = vld [vmem:[#allocation8 + $0x68] sm:$0xff]
    %v6065 = vld [vmem:[#allocation8 + $0x70] sm:$0xff]
    %v6066 = vld [vmem:[#allocation8 + $0x78] sm:$0xff]
    %v6067 = vld [vmem:[#allocation8 + $0x80] sm:$0xff]
    %v6068 = vld [vmem:[#allocation8 + $0x88] sm:$0xff]
    %v6069 = vld [vmem:[#allocation8 + $0x90] sm:$0xff]
    %v6070 = vld [vmem:[#allocation8 + $0x98] sm:$0xff]
    %v6071 = vld [vmem:[#allocation8 + $0xa0] sm:$0xff]
    %v6072 = vld [vmem:[#allocation8 + $0xa8] sm:$0xff]
    %v6073 = vld [vmem:[#allocation8 + $0xb0] sm:$0xff]
    %v6074 = vld [vmem:[#allocation8 + $0xb8] sm:$0xff]
    %v6075 = vld [vmem:[#allocation8 + $0xc0] sm:$0xff]
    %v6076 = vld [vmem:[#allocation8 + $0xc8] sm:$0xff]
    %v6077 = vld [vmem:[#allocation8 + $0xd0] sm:$0xff]
    %v6078 = vld [vmem:[#allocation8 + $0xd8] sm:$0xff]
    %v6079 = vld [vmem:[#allocation8 + $0xe0] sm:$0xff]
    %v6080 = vld [vmem:[#allocation8 + $0xe8] sm:$0xff]
    %v6081 = vld [vmem:[#allocation8 + $0xf0] sm:$0xff]
    %v6082 = vld [vmem:[#allocation8 + $0xf8] sm:$0xff]
    %v6083 = vld [vmem:[#allocation8 + $0x100] sm:$0xff]
    %v6084 = vld [vmem:[#allocation8 + $0x108] sm:$0xff]
    %v6085 = vld [vmem:[#allocation8 + $0x110] sm:$0xff]
    %v6086 = vld [vmem:[#allocation8 + $0x118] sm:$0xff]
    %v6087 = vld [vmem:[#allocation8 + $0x120] sm:$0xff]
    %v6088 = vld [vmem:[#allocation8 + $0x128] sm:$0xff]
    %v6089 = vld [vmem:[#allocation8 + $0x130] sm:$0xff]
    %v6090 = vld [vmem:[#allocation8 + $0x138] sm:$0xff]
    %v6091 = vld [vmem:[#allocation8 + $0x140] sm:$0xff]
    %v6092 = vld [vmem:[#allocation8 + $0x148] sm:$0xff]
    %v6093 = vld [vmem:[#allocation8 + $0x150] sm:$0xff]
    %v6094 = vld [vmem:[#allocation8 + $0x158] sm:$0xff]
    %v6095 = vld [vmem:[#allocation8 + $0x160] sm:$0xff]
    %v6096 = vld [vmem:[#allocation8 + $0x168] sm:$0xff]
    %v6097 = vld [vmem:[#allocation8 + $0x170] sm:$0xff]
    %v6098 = vld [vmem:[#allocation8 + $0x178] sm:$0xff]
    %v6099 = vld [vmem:[#allocation8 + $0x180] sm:$0xff]
    %v6100 = vld [vmem:[#allocation8 + $0x188] sm:$0xff]
    %v6101 = vld [vmem:[#allocation8 + $0x190] sm:$0xff]
    %v6102 = vld [vmem:[#allocation8 + $0x198] sm:$0xff]
    %v6103 = vld [vmem:[#allocation8 + $0x1a0] sm:$0xff]
    %v6104 = vld [vmem:[#allocation8 + $0x1a8] sm:$0xff]
    %v6105 = vld [vmem:[#allocation8 + $0x1b0] sm:$0xff]
    %v6106 = vld [vmem:[#allocation8 + $0x1b8] sm:$0xff]
    %v6107 = vld [vmem:[#allocation8 + $0x1c0] sm:$0xff]
    %v6108 = vld [vmem:[#allocation8 + $0x1c8] sm:$0xff]
    %v6109 = vld [vmem:[#allocation8 + $0x1d0] sm:$0xff]
    %v6110 = vld [vmem:[#allocation8 + $0x1d8] sm:$0xff]
    %v6111 = vld [vmem:[#allocation8 + $0x1e0] sm:$0xff]
    %v6112 = vld [vmem:[#allocation8 + $0x1e8] sm:$0xff]
    %v6113 = vld [vmem:[#allocation8 + $0x1f0] sm:$0xff]
    %v6114 = vld [vmem:[#allocation8 + $0x1f8] sm:$0xff]
    %v6115 = vld [vmem:[#allocation8 + $0x200] sm:$0xff]
    %v6116 = vld [vmem:[#allocation8 + $0x208] sm:$0xff]
    %v6117 = vld [vmem:[#allocation8 + $0x210] sm:$0xff]
    %v6118 = vld [vmem:[#allocation8 + $0x218] sm:$0xff]
    %v6119 = vld [vmem:[#allocation8 + $0x220] sm:$0xff]
    %v6120 = vld [vmem:[#allocation8 + $0x228] sm:$0xff]
    %v6121 = vld [vmem:[#allocation8 + $0x230] sm:$0xff]
    %v6122 = vld [vmem:[#allocation8 + $0x238] sm:$0xff]
    %v6123 = vld [vmem:[#allocation8 + $0x240] sm:$0xff]
    %v6124 = vld [vmem:[#allocation8 + $0x248] sm:$0xff]
    %v6125 = vld [vmem:[#allocation8 + $0x250] sm:$0xff]
    %v6126 = vld [vmem:[#allocation8 + $0x258] sm:$0xff]
    %v6127 = vld [vmem:[#allocation8 + $0x260] sm:$0xff]
    %v6128 = vld [vmem:[#allocation8 + $0x268] sm:$0xff]
    %v6129 = vld [vmem:[#allocation8 + $0x270] sm:$0xff]
    %v6130 = vld [vmem:[#allocation8 + $0x278] sm:$0xff]
    %v6131 = vld [vmem:[#allocation8 + $0x280] sm:$0xff]
    %v6132 = vld [vmem:[#allocation8 + $0x288] sm:$0xff]
    %v6133 = vld [vmem:[#allocation8 + $0x290] sm:$0xff]
    %v6134 = vld [vmem:[#allocation8 + $0x298] sm:$0xff]
    %v6135 = vld [vmem:[#allocation8 + $0x2a0] sm:$0xff]
    %v6136 = vld [vmem:[#allocation8 + $0x2a8] sm:$0xff]
    %v6137 = vld [vmem:[#allocation8 + $0x2b0] sm:$0xff]
    %v6138 = vld [vmem:[#allocation8 + $0x2b8] sm:$0xff]
    %v6139 = vld [vmem:[#allocation8 + $0x2c0] sm:$0xff]
    %v6140 = vld [vmem:[#allocation8 + $0x2c8] sm:$0xff]
    %v6141 = vld [vmem:[#allocation8 + $0x2d0] sm:$0xff]
    %v6142 = vld [vmem:[#allocation8 + $0x2d8] sm:$0xff]
    %v6143 = vld [vmem:[#allocation8 + $0x2e0] sm:$0xff]
    %v6144 = vld [vmem:[#allocation8 + $0x2e8] sm:$0xff]
    %v6145 = vld [vmem:[#allocation8 + $0x2f0] sm:$0xff]
    %v6146 = vld [vmem:[#allocation8 + $0x2f8] sm:$0xff]
    %v6147 = vld [vmem:[#allocation8 + $0x300] sm:$0xff]
    %v6148 = vld [vmem:[#allocation8 + $0x308] sm:$0xff]
    %v6149 = vld [vmem:[#allocation8 + $0x310] sm:$0xff]
    %v6150 = vld [vmem:[#allocation8 + $0x318] sm:$0xff]
    %v6151 = vld [vmem:[#allocation8 + $0x320] sm:$0xff]
    %v6152 = vld [vmem:[#allocation8 + $0x328] sm:$0xff]
    %v6153 = vld [vmem:[#allocation8 + $0x330] sm:$0xff]
    %v6154 = vld [vmem:[#allocation8 + $0x338] sm:$0xff]
    %v6155 = vld [vmem:[#allocation8 + $0x340] sm:$0xff]
    %v6156 = vld [vmem:[#allocation8 + $0x348] sm:$0xff]
    %v6157 = vld [vmem:[#allocation8 + $0x350] sm:$0xff]
    %v6158 = vld [vmem:[#allocation8 + $0x358] sm:$0xff]
    %v6159 = vld [vmem:[#allocation8 + $0x360] sm:$0xff]
    %v6160 = vld [vmem:[#allocation8 + $0x368] sm:$0xff]
    %v6161 = vld [vmem:[#allocation8 + $0x370] sm:$0xff]
    %v6162 = vld [vmem:[#allocation8 + $0x378] sm:$0xff]
    %v6163 = vld [vmem:[#allocation8 + $0x380] sm:$0xff]
    %v6164 = vld [vmem:[#allocation8 + $0x388] sm:$0xff]
    %v6165 = vld [vmem:[#allocation8 + $0x390] sm:$0xff]
    %v6166 = vld [vmem:[#allocation8 + $0x398] sm:$0xff]
    %v6167 = vld [vmem:[#allocation8 + $0x3a0] sm:$0xff]
    %v6168 = vld [vmem:[#allocation8 + $0x3a8] sm:$0xff]
    %v6169 = vld [vmem:[#allocation8 + $0x3b0] sm:$0xff]
    %v6170 = vld [vmem:[#allocation8 + $0x3b8] sm:$0xff]
    %v6171 = vld [vmem:[#allocation8 + $0x3c0] sm:$0xff]
    %v6172 = vld [vmem:[#allocation8 + $0x3c8] sm:$0xff]
    %v6173 = vld [vmem:[#allocation8 + $0x3d0] sm:$0xff]
    %v6174 = vld [vmem:[#allocation8 + $0x3d8] sm:$0xff]
    %v6175 = vld [vmem:[#allocation8 + $0x3e0] sm:$0xff]
    %v6176 = vld [vmem:[#allocation8 + $0x3e8] sm:$0xff]
    %v6177 = vld [vmem:[#allocation8 + $0x3f0] sm:$0xff]
    %v6178 = vld [vmem:[#allocation8 + $0x3f8] sm:$0xff]
    %v6179 = vld [vmem:[#allocation10] sm:$0xf]
    %v6181 = vlaneseq
    %v6182 = vshrl.u32 %v6181, 7
    %v6183 = vsub.s32 0, %v6182
    %v6184 = vrot.slane %v6179, %v6183
    %v6185 = vlaneseq
    %v6186 = vshrl.u32 %v6185, 7
    %v6187 = vsub.s32 1, %v6186
    %v6188 = vrot.slane %v6179, %v6187
    %v6189 = vlaneseq
    %v6190 = vshrl.u32 %v6189, 7
    %v6191 = vsub.s32 2, %v6190
    %v6192 = vrot.slane %v6179, %v6191
    %v6193 = vlaneseq
    %v6194 = vshrl.u32 %v6193, 7
    %v6195 = vsub.s32 3, %v6194
    %v6196 = vrot.slane %v6179, %v6195
    %v6329 = vunpack.c.l.b16 %v6051
    %v6330 = vunpack.c.h.b16 %v6051
    %v6331 = vunpack.c.l.b16 %v6052
    %v6332 = vunpack.c.h.b16 %v6052
    %v6333 = vunpack.c.l.b16 %v6053
    %v6334 = vunpack.c.h.b16 %v6053
    %v6335 = vunpack.c.l.b16 %v6054
    %v6336 = vunpack.c.h.b16 %v6054
    %v6337 = vunpack.c.l.b16 %v6055
    %v6338 = vunpack.c.h.b16 %v6055
    %v6339 = vunpack.c.l.b16 %v6056
    %v6340 = vunpack.c.h.b16 %v6056
    %v6341 = vunpack.c.l.b16 %v6057
    %v6342 = vunpack.c.h.b16 %v6057
    %v6343 = vunpack.c.l.b16 %v6058
    %v6344 = vunpack.c.h.b16 %v6058
    %v6345 = vunpack.c.l.b16 %v6059
    %v6346 = vunpack.c.h.b16 %v6059
    %v6347 = vunpack.c.l.b16 %v6060
    %v6348 = vunpack.c.h.b16 %v6060
    %v6349 = vunpack.c.l.b16 %v6061
    %v6350 = vunpack.c.h.b16 %v6061
    %v6351 = vunpack.c.l.b16 %v6062
    %v6352 = vunpack.c.h.b16 %v6062
    %v6353 = vunpack.c.l.b16 %v6063
    %v6354 = vunpack.c.h.b16 %v6063
    %v6355 = vunpack.c.l.b16 %v6064
    %v6356 = vunpack.c.h.b16 %v6064
    %v6357 = vunpack.c.l.b16 %v6065
    %v6358 = vunpack.c.h.b16 %v6065
    %v6359 = vunpack.c.l.b16 %v6066
    %v6360 = vunpack.c.h.b16 %v6066
    %v6361 = vunpack.c.l.b16 %v6067
    %v6362 = vunpack.c.h.b16 %v6067
    %v6363 = vunpack.c.l.b16 %v6068
    %v6364 = vunpack.c.h.b16 %v6068
    %v6365 = vunpack.c.l.b16 %v6069
    %v6366 = vunpack.c.h.b16 %v6069
    %v6367 = vunpack.c.l.b16 %v6070
    %v6368 = vunpack.c.h.b16 %v6070
    %v6369 = vunpack.c.l.b16 %v6071
    %v6370 = vunpack.c.h.b16 %v6071
    %v6371 = vunpack.c.l.b16 %v6072
    %v6372 = vunpack.c.h.b16 %v6072
    %v6373 = vunpack.c.l.b16 %v6073
    %v6374 = vunpack.c.h.b16 %v6073
    %v6375 = vunpack.c.l.b16 %v6074
    %v6376 = vunpack.c.h.b16 %v6074
    %v6377 = vunpack.c.l.b16 %v6075
    %v6378 = vunpack.c.h.b16 %v6075
    %v6379 = vunpack.c.l.b16 %v6076
    %v6380 = vunpack.c.h.b16 %v6076
    %v6381 = vunpack.c.l.b16 %v6077
    %v6382 = vunpack.c.h.b16 %v6077
    %v6383 = vunpack.c.l.b16 %v6078
    %v6384 = vunpack.c.h.b16 %v6078
    %v6385 = vunpack.c.l.b16 %v6079
    %v6386 = vunpack.c.h.b16 %v6079
    %v6387 = vunpack.c.l.b16 %v6080
    %v6388 = vunpack.c.h.b16 %v6080
    %v6389 = vunpack.c.l.b16 %v6081
    %v6390 = vunpack.c.h.b16 %v6081
    %v6391 = vunpack.c.l.b16 %v6082
    %v6392 = vunpack.c.h.b16 %v6082
    %v6393 = vunpack.c.l.b16 %v6083
    %v6394 = vunpack.c.h.b16 %v6083
    %v6395 = vunpack.c.l.b16 %v6084
    %v6396 = vunpack.c.h.b16 %v6084
    %v6397 = vunpack.c.l.b16 %v6085
    %v6398 = vunpack.c.h.b16 %v6085
    %v6399 = vunpack.c.l.b16 %v6086
    %v6400 = vunpack.c.h.b16 %v6086
    %v6401 = vunpack.c.l.b16 %v6087
    %v6402 = vunpack.c.h.b16 %v6087
    %v6403 = vunpack.c.l.b16 %v6088
    %v6404 = vunpack.c.h.b16 %v6088
    %v6405 = vunpack.c.l.b16 %v6089
    %v6406 = vunpack.c.h.b16 %v6089
    %v6407 = vunpack.c.l.b16 %v6090
    %v6408 = vunpack.c.h.b16 %v6090
    %v6409 = vunpack.c.l.b16 %v6091
    %v6410 = vunpack.c.h.b16 %v6091
    %v6411 = vunpack.c.l.b16 %v6092
    %v6412 = vunpack.c.h.b16 %v6092
    %v6413 = vunpack.c.l.b16 %v6093
    %v6414 = vunpack.c.h.b16 %v6093
    %v6415 = vunpack.c.l.b16 %v6094
    %v6416 = vunpack.c.h.b16 %v6094
    %v6417 = vunpack.c.l.b16 %v6095
    %v6418 = vunpack.c.h.b16 %v6095
    %v6419 = vunpack.c.l.b16 %v6096
    %v6420 = vunpack.c.h.b16 %v6096
    %v6421 = vunpack.c.l.b16 %v6097
    %v6422 = vunpack.c.h.b16 %v6097
    %v6423 = vunpack.c.l.b16 %v6098
    %v6424 = vunpack.c.h.b16 %v6098
    %v6425 = vunpack.c.l.b16 %v6099
    %v6426 = vunpack.c.h.b16 %v6099
    %v6427 = vunpack.c.l.b16 %v6100
    %v6428 = vunpack.c.h.b16 %v6100
    %v6429 = vunpack.c.l.b16 %v6101
    %v6430 = vunpack.c.h.b16 %v6101
    %v6431 = vunpack.c.l.b16 %v6102
    %v6432 = vunpack.c.h.b16 %v6102
    %v6433 = vunpack.c.l.b16 %v6103
    %v6434 = vunpack.c.h.b16 %v6103
    %v6435 = vunpack.c.l.b16 %v6104
    %v6436 = vunpack.c.h.b16 %v6104
    %v6437 = vunpack.c.l.b16 %v6105
    %v6438 = vunpack.c.h.b16 %v6105
    %v6439 = vunpack.c.l.b16 %v6106
    %v6440 = vunpack.c.h.b16 %v6106
    %v6441 = vunpack.c.l.b16 %v6107
    %v6442 = vunpack.c.h.b16 %v6107
    %v6443 = vunpack.c.l.b16 %v6108
    %v6444 = vunpack.c.h.b16 %v6108
    %v6445 = vunpack.c.l.b16 %v6109
    %v6446 = vunpack.c.h.b16 %v6109
    %v6447 = vunpack.c.l.b16 %v6110
    %v6448 = vunpack.c.h.b16 %v6110
    %v6449 = vunpack.c.l.b16 %v6111
    %v6450 = vunpack.c.h.b16 %v6111
    %v6451 = vunpack.c.l.b16 %v6112
    %v6452 = vunpack.c.h.b16 %v6112
    %v6453 = vunpack.c.l.b16 %v6113
    %v6454 = vunpack.c.h.b16 %v6113
    %v6455 = vunpack.c.l.b16 %v6114
    %v6456 = vunpack.c.h.b16 %v6114
    %v6457 = vunpack.c.l.b16 %v6115
    %v6458 = vunpack.c.h.b16 %v6115
    %v6459 = vunpack.c.l.b16 %v6116
    %v6460 = vunpack.c.h.b16 %v6116
    %v6461 = vunpack.c.l.b16 %v6117
    %v6462 = vunpack.c.h.b16 %v6117
    %v6463 = vunpack.c.l.b16 %v6118
    %v6464 = vunpack.c.h.b16 %v6118
    %v6465 = vunpack.c.l.b16 %v6119
    %v6466 = vunpack.c.h.b16 %v6119
    %v6467 = vunpack.c.l.b16 %v6120
    %v6468 = vunpack.c.h.b16 %v6120
    %v6469 = vunpack.c.l.b16 %v6121
    %v6470 = vunpack.c.h.b16 %v6121
    %v6471 = vunpack.c.l.b16 %v6122
    %v6472 = vunpack.c.h.b16 %v6122
    %v6473 = vunpack.c.l.b16 %v6123
    %v6474 = vunpack.c.h.b16 %v6123
    %v6475 = vunpack.c.l.b16 %v6124
    %v6476 = vunpack.c.h.b16 %v6124
    %v6477 = vunpack.c.l.b16 %v6125
    %v6478 = vunpack.c.h.b16 %v6125
    %v6479 = vunpack.c.l.b16 %v6126
    %v6480 = vunpack.c.h.b16 %v6126
    %v6481 = vunpack.c.l.b16 %v6127
    %v6482 = vunpack.c.h.b16 %v6127
    %v6483 = vunpack.c.l.b16 %v6128
    %v6484 = vunpack.c.h.b16 %v6128
    %v6485 = vunpack.c.l.b16 %v6129
    %v6486 = vunpack.c.h.b16 %v6129
    %v6487 = vunpack.c.l.b16 %v6130
    %v6488 = vunpack.c.h.b16 %v6130
    %v6489 = vunpack.c.l.b16 %v6131
    %v6490 = vunpack.c.h.b16 %v6131
    %v6491 = vunpack.c.l.b16 %v6132
    %v6492 = vunpack.c.h.b16 %v6132
    %v6493 = vunpack.c.l.b16 %v6133
    %v6494 = vunpack.c.h.b16 %v6133
    %v6495 = vunpack.c.l.b16 %v6134
    %v6496 = vunpack.c.h.b16 %v6134
    %v6497 = vunpack.c.l.b16 %v6135
    %v6498 = vunpack.c.h.b16 %v6135
    %v6499 = vunpack.c.l.b16 %v6136
    %v6500 = vunpack.c.h.b16 %v6136
    %v6501 = vunpack.c.l.b16 %v6137
    %v6502 = vunpack.c.h.b16 %v6137
    %v6503 = vunpack.c.l.b16 %v6138
    %v6504 = vunpack.c.h.b16 %v6138
    %v6505 = vunpack.c.l.b16 %v6139
    %v6506 = vunpack.c.h.b16 %v6139
    %v6507 = vunpack.c.l.b16 %v6140
    %v6508 = vunpack.c.h.b16 %v6140
    %v6509 = vunpack.c.l.b16 %v6141
    %v6510 = vunpack.c.h.b16 %v6141
    %v6511 = vunpack.c.l.b16 %v6142
    %v6512 = vunpack.c.h.b16 %v6142
    %v6513 = vunpack.c.l.b16 %v6143
    %v6514 = vunpack.c.h.b16 %v6143
    %v6515 = vunpack.c.l.b16 %v6144
    %v6516 = vunpack.c.h.b16 %v6144
    %v6517 = vunpack.c.l.b16 %v6145
    %v6518 = vunpack.c.h.b16 %v6145
    %v6519 = vunpack.c.l.b16 %v6146
    %v6520 = vunpack.c.h.b16 %v6146
    %v6521 = vunpack.c.l.b16 %v6147
    %v6522 = vunpack.c.h.b16 %v6147
    %v6523 = vunpack.c.l.b16 %v6148
    %v6524 = vunpack.c.h.b16 %v6148
    %v6525 = vunpack.c.l.b16 %v6149
    %v6526 = vunpack.c.h.b16 %v6149
    %v6527 = vunpack.c.l.b16 %v6150
    %v6528 = vunpack.c.h.b16 %v6150
    %v6529 = vunpack.c.l.b16 %v6151
    %v6530 = vunpack.c.h.b16 %v6151
    %v6531 = vunpack.c.l.b16 %v6152
    %v6532 = vunpack.c.h.b16 %v6152
    %v6533 = vunpack.c.l.b16 %v6153
    %v6534 = vunpack.c.h.b16 %v6153
    %v6535 = vunpack.c.l.b16 %v6154
    %v6536 = vunpack.c.h.b16 %v6154
    %v6537 = vunpack.c.l.b16 %v6155
    %v6538 = vunpack.c.h.b16 %v6155
    %v6539 = vunpack.c.l.b16 %v6156
    %v6540 = vunpack.c.h.b16 %v6156
    %v6541 = vunpack.c.l.b16 %v6157
    %v6542 = vunpack.c.h.b16 %v6157
    %v6543 = vunpack.c.l.b16 %v6158
    %v6544 = vunpack.c.h.b16 %v6158
    %v6545 = vunpack.c.l.b16 %v6159
    %v6546 = vunpack.c.h.b16 %v6159
    %v6547 = vunpack.c.l.b16 %v6160
    %v6548 = vunpack.c.h.b16 %v6160
    %v6549 = vunpack.c.l.b16 %v6161
    %v6550 = vunpack.c.h.b16 %v6161
    %v6551 = vunpack.c.l.b16 %v6162
    %v6552 = vunpack.c.h.b16 %v6162
    %v6553 = vunpack.c.l.b16 %v6163
    %v6554 = vunpack.c.h.b16 %v6163
    %v6555 = vunpack.c.l.b16 %v6164
    %v6556 = vunpack.c.h.b16 %v6164
    %v6557 = vunpack.c.l.b16 %v6165
    %v6558 = vunpack.c.h.b16 %v6165
    %v6559 = vunpack.c.l.b16 %v6166
    %v6560 = vunpack.c.h.b16 %v6166
    %v6561 = vunpack.c.l.b16 %v6167
    %v6562 = vunpack.c.h.b16 %v6167
    %v6563 = vunpack.c.l.b16 %v6168
    %v6564 = vunpack.c.h.b16 %v6168
    %v6565 = vunpack.c.l.b16 %v6169
    %v6566 = vunpack.c.h.b16 %v6169
    %v6567 = vunpack.c.l.b16 %v6170
    %v6568 = vunpack.c.h.b16 %v6170
    %v6569 = vunpack.c.l.b16 %v6171
    %v6570 = vunpack.c.h.b16 %v6171
    %v6571 = vunpack.c.l.b16 %v6172
    %v6572 = vunpack.c.h.b16 %v6172
    %v6573 = vunpack.c.l.b16 %v6173
    %v6574 = vunpack.c.h.b16 %v6173
    %v6575 = vunpack.c.l.b16 %v6174
    %v6576 = vunpack.c.h.b16 %v6174
    %v6577 = vunpack.c.l.b16 %v6175
    %v6578 = vunpack.c.h.b16 %v6175
    %v6579 = vunpack.c.l.b16 %v6176
    %v6580 = vunpack.c.h.b16 %v6176
    %v6581 = vunpack.c.l.b16 %v6177
    %v6582 = vunpack.c.h.b16 %v6177
    %v6583 = vunpack.c.l.b16 %v6178
    %v6584 = vunpack.c.h.b16 %v6178
    %v6585 = vpack.c.b16 %v6333, %v6329
    %v6586 = vpack.c.b16 %v6334, %v6330
    %v6587 = vpack.c.b16 %v6335, %v6331
    %v6588 = vpack.c.b16 %v6336, %v6332
    %v6589 = vpack.c.b16 %v6341, %v6337
    %v6590 = vpack.c.b16 %v6342, %v6338
    %v6591 = vpack.c.b16 %v6343, %v6339
    %v6592 = vpack.c.b16 %v6344, %v6340
    %v6593 = vpack.c.b16 %v6349, %v6345
    %v6594 = vpack.c.b16 %v6350, %v6346
    %v6595 = vpack.c.b16 %v6351, %v6347
    %v6596 = vpack.c.b16 %v6352, %v6348
    %v6597 = vpack.c.b16 %v6357, %v6353
    %v6598 = vpack.c.b16 %v6358, %v6354
    %v6599 = vpack.c.b16 %v6359, %v6355
    %v6600 = vpack.c.b16 %v6360, %v6356
    %v6601 = vpack.c.b16 %v6365, %v6361
    %v6602 = vpack.c.b16 %v6366, %v6362
    %v6603 = vpack.c.b16 %v6367, %v6363
    %v6604 = vpack.c.b16 %v6368, %v6364
    %v6605 = vpack.c.b16 %v6373, %v6369
    %v6606 = vpack.c.b16 %v6374, %v6370
    %v6607 = vpack.c.b16 %v6375, %v6371
    %v6608 = vpack.c.b16 %v6376, %v6372
    %v6609 = vpack.c.b16 %v6381, %v6377
    %v6610 = vpack.c.b16 %v6382, %v6378
    %v6611 = vpack.c.b16 %v6383, %v6379
    %v6612 = vpack.c.b16 %v6384, %v6380
    %v6613 = vpack.c.b16 %v6389, %v6385
    %v6614 = vpack.c.b16 %v6390, %v6386
    %v6615 = vpack.c.b16 %v6391, %v6387
    %v6616 = vpack.c.b16 %v6392, %v6388
    %v6617 = vpack.c.b16 %v6397, %v6393
    %v6618 = vpack.c.b16 %v6398, %v6394
    %v6619 = vpack.c.b16 %v6399, %v6395
    %v6620 = vpack.c.b16 %v6400, %v6396
    %v6621 = vpack.c.b16 %v6405, %v6401
    %v6622 = vpack.c.b16 %v6406, %v6402
    %v6623 = vpack.c.b16 %v6407, %v6403
    %v6624 = vpack.c.b16 %v6408, %v6404
    %v6625 = vpack.c.b16 %v6413, %v6409
    %v6626 = vpack.c.b16 %v6414, %v6410
    %v6627 = vpack.c.b16 %v6415, %v6411
    %v6628 = vpack.c.b16 %v6416, %v6412
    %v6629 = vpack.c.b16 %v6421, %v6417
    %v6630 = vpack.c.b16 %v6422, %v6418
    %v6631 = vpack.c.b16 %v6423, %v6419
    %v6632 = vpack.c.b16 %v6424, %v6420
    %v6633 = vpack.c.b16 %v6429, %v6425
    %v6634 = vpack.c.b16 %v6430, %v6426
    %v6635 = vpack.c.b16 %v6431, %v6427
    %v6636 = vpack.c.b16 %v6432, %v6428
    %v6637 = vpack.c.b16 %v6437, %v6433
    %v6638 = vpack.c.b16 %v6438, %v6434
    %v6639 = vpack.c.b16 %v6439, %v6435
    %v6640 = vpack.c.b16 %v6440, %v6436
    %v6641 = vpack.c.b16 %v6445, %v6441
    %v6642 = vpack.c.b16 %v6446, %v6442
    %v6643 = vpack.c.b16 %v6447, %v6443
    %v6644 = vpack.c.b16 %v6448, %v6444
    %v6645 = vpack.c.b16 %v6453, %v6449
    %v6646 = vpack.c.b16 %v6454, %v6450
    %v6647 = vpack.c.b16 %v6455, %v6451
    %v6648 = vpack.c.b16 %v6456, %v6452
    %v6649 = vpack.c.b16 %v6461, %v6457
    %v6650 = vpack.c.b16 %v6462, %v6458
    %v6651 = vpack.c.b16 %v6463, %v6459
    %v6652 = vpack.c.b16 %v6464, %v6460
    %v6653 = vpack.c.b16 %v6469, %v6465
    %v6654 = vpack.c.b16 %v6470, %v6466
    %v6655 = vpack.c.b16 %v6471, %v6467
    %v6656 = vpack.c.b16 %v6472, %v6468
    %v6657 = vpack.c.b16 %v6477, %v6473
    %v6658 = vpack.c.b16 %v6478, %v6474
    %v6659 = vpack.c.b16 %v6479, %v6475
    %v6660 = vpack.c.b16 %v6480, %v6476
    %v6661 = vpack.c.b16 %v6485, %v6481
    %v6662 = vpack.c.b16 %v6486, %v6482
    %v6663 = vpack.c.b16 %v6487, %v6483
    %v6664 = vpack.c.b16 %v6488, %v6484
    %v6665 = vpack.c.b16 %v6493, %v6489
    %v6666 = vpack.c.b16 %v6494, %v6490
    %v6667 = vpack.c.b16 %v6495, %v6491
    %v6668 = vpack.c.b16 %v6496, %v6492
    %v6669 = vpack.c.b16 %v6501, %v6497
    %v6670 = vpack.c.b16 %v6502, %v6498
    %v6671 = vpack.c.b16 %v6503, %v6499
    %v6672 = vpack.c.b16 %v6504, %v6500
    %v6673 = vpack.c.b16 %v6509, %v6505
    %v6674 = vpack.c.b16 %v6510, %v6506
    %v6675 = vpack.c.b16 %v6511, %v6507
    %v6676 = vpack.c.b16 %v6512, %v6508
    %v6677 = vpack.c.b16 %v6517, %v6513
    %v6678 = vpack.c.b16 %v6518, %v6514
    %v6679 = vpack.c.b16 %v6519, %v6515
    %v6680 = vpack.c.b16 %v6520, %v6516
    %v6681 = vpack.c.b16 %v6525, %v6521
    %v6682 = vpack.c.b16 %v6526, %v6522
    %v6683 = vpack.c.b16 %v6527, %v6523
    %v6684 = vpack.c.b16 %v6528, %v6524
    %v6685 = vpack.c.b16 %v6533, %v6529
    %v6686 = vpack.c.b16 %v6534, %v6530
    %v6687 = vpack.c.b16 %v6535, %v6531
    %v6688 = vpack.c.b16 %v6536, %v6532
    %v6689 = vpack.c.b16 %v6541, %v6537
    %v6690 = vpack.c.b16 %v6542, %v6538
    %v6691 = vpack.c.b16 %v6543, %v6539
    %v6692 = vpack.c.b16 %v6544, %v6540
    %v6693 = vpack.c.b16 %v6549, %v6545
    %v6694 = vpack.c.b16 %v6550, %v6546
    %v6695 = vpack.c.b16 %v6551, %v6547
    %v6696 = vpack.c.b16 %v6552, %v6548
    %v6697 = vpack.c.b16 %v6557, %v6553
    %v6698 = vpack.c.b16 %v6558, %v6554
    %v6699 = vpack.c.b16 %v6559, %v6555
    %v6700 = vpack.c.b16 %v6560, %v6556
    %v6701 = vpack.c.b16 %v6565, %v6561
    %v6702 = vpack.c.b16 %v6566, %v6562
    %v6703 = vpack.c.b16 %v6567, %v6563
    %v6704 = vpack.c.b16 %v6568, %v6564
    %v6705 = vpack.c.b16 %v6573, %v6569
    %v6706 = vpack.c.b16 %v6574, %v6570
    %v6707 = vpack.c.b16 %v6575, %v6571
    %v6708 = vpack.c.b16 %v6576, %v6572
    %v6709 = vpack.c.b16 %v6581, %v6577
    %v6710 = vpack.c.b16 %v6582, %v6578
    %v6711 = vpack.c.b16 %v6583, %v6579
    %v6712 = vpack.c.b16 %v6584, %v6580
    %6841 = vmatprep.subr.bf16.mxu0 %v6586
    %6842 = vmatpush1.bf16.msra.mxu0 %v6585
    %6843 = vmatprep.subr.bf16.mxu0 %v6590
    %6844 = vmatpush1.bf16.msra.mxu0 %v6589
    %6845 = vmatprep.subr.bf16.mxu0 %v6594
    %6846 = vmatpush1.bf16.msra.mxu0 %v6593
    %6847 = vmatprep.subr.bf16.mxu0 %v6598
    %6848 = vmatpush1.bf16.msra.mxu0 %v6597
    %6849 = vmatprep.subr.bf16.mxu0 %v6602
    %6850 = vmatpush1.bf16.msra.mxu0 %v6601
    %6851 = vmatprep.subr.bf16.mxu0 %v6606
    %6852 = vmatpush1.bf16.msra.mxu0 %v6605
    %6853 = vmatprep.subr.bf16.mxu0 %v6610
    %6854 = vmatpush1.bf16.msra.mxu0 %v6609
    %6855 = vmatprep.subr.bf16.mxu0 %v6614
    %6856 = vmatpush1.bf16.msra.mxu0 %v6613
    %6857 = vmatprep.subr.bf16.mxu0 %v6618
    %6858 = vmatpush1.bf16.msra.mxu0 %v6617
    %6859 = vmatprep.subr.bf16.mxu0 %v6622
    %6860 = vmatpush1.bf16.msra.mxu0 %v6621
    %6861 = vmatprep.subr.bf16.mxu0 %v6626
    %6862 = vmatpush1.bf16.msra.mxu0 %v6625
    %6863 = vmatprep.subr.bf16.mxu0 %v6630
    %6864 = vmatpush1.bf16.msra.mxu0 %v6629
    %6865 = vmatprep.subr.bf16.mxu0 %v6634
    %6866 = vmatpush1.bf16.msra.mxu0 %v6633
    %6867 = vmatprep.subr.bf16.mxu0 %v6638
    %6868 = vmatpush1.bf16.msra.mxu0 %v6637
    %6869 = vmatprep.subr.bf16.mxu0 %v6642
    %6870 = vmatpush1.bf16.msra.mxu0 %v6641
    %6871 = vmatprep.subr.bf16.mxu0 %v6646
    %6872 = vmatpush1.bf16.msra.mxu0 %v6645
    %6873 = vmatprep.mubr.bf16.mxu0 %v6048
    %6874 = vmatmul.mubr.bf16.gmra.mrb[0].mxu0 %v6047
    %v6875 = vpop.f32.mrb[0].mxu0
    %v6876 = vadd.f32 %v6184, %v6875
    %v6877 = vpop.f32.mrb[0].mxu0
    %v6878 = vadd.f32 %v6188, %v6877
    %v6879 = vpop.f32.mrb[0].mxu0
    %v6880 = vpop.f32.mrb[0].mxu0
    %6881 = vdwg.mxu0
    %6882 = vmatprep.subr.bf16.mxu0 %v6650
    %6883 = vmatpush1.bf16.msra.mxu0 %v6649
    %6884 = vmatprep.subr.bf16.mxu0 %v6654
    %6885 = vmatpush1.bf16.msra.mxu0 %v6653
    %6886 = vmatprep.subr.bf16.mxu0 %v6658
    %6887 = vmatpush1.bf16.msra.mxu0 %v6657
    %6888 = vmatprep.subr.bf16.mxu0 %v6662
    %6889 = vmatpush1.bf16.msra.mxu0 %v6661
    %6890 = vmatprep.subr.bf16.mxu0 %v6666
    %6891 = vmatpush1.bf16.msra.mxu0 %v6665
    %6892 = vmatprep.subr.bf16.mxu0 %v6670
    %6893 = vmatpush1.bf16.msra.mxu0 %v6669
    %6894 = vmatprep.subr.bf16.mxu0 %v6674
    %6895 = vmatpush1.bf16.msra.mxu0 %v6673
    %6896 = vmatprep.subr.bf16.mxu0 %v6678
    %6897 = vmatpush1.bf16.msra.mxu0 %v6677
    %6898 = vmatprep.subr.bf16.mxu0 %v6682
    %6899 = vmatpush1.bf16.msra.mxu0 %v6681
    %6900 = vmatprep.subr.bf16.mxu0 %v6686
    %6901 = vmatpush1.bf16.msra.mxu0 %v6685
    %6902 = vmatprep.subr.bf16.mxu0 %v6690
    %6903 = vmatpush1.bf16.msra.mxu0 %v6689
    %6904 = vmatprep.subr.bf16.mxu0 %v6694
    %6905 = vmatpush1.bf16.msra.mxu0 %v6693
    %6906 = vmatprep.subr.bf16.mxu0 %v6698
    %6907 = vmatpush1.bf16.msra.mxu0 %v6697
    %6908 = vmatprep.subr.bf16.mxu0 %v6702
    %6909 = vmatpush1.bf16.msra.mxu0 %v6701
    %6910 = vmatprep.subr.bf16.mxu0 %v6706
    %6911 = vmatpush1.bf16.msra.mxu0 %v6705
    %6912 = vmatprep.subr.bf16.mxu0 %v6710
    %6913 = vmatpush1.bf16.msra.mxu0 %v6709
    %6914 = vmatprep.mubr.bf16.mxu0 %v6050
    %6915 = vmatmul.mubr.bf16.gmra.mrb[0].mxu0 %v6049
    %v6916 = vpop.f32.mrb[0].mxu0
    %v6917 = vadd.f32 %v6876, %v6916
    %v6918 = vpop.f32.mrb[0].mxu0
    %v6919 = vadd.f32 %v6878, %v6918
    %v6920 = vpop.f32.mrb[0].mxu0
    %v6921 = vpop.f32.mrb[0].mxu0
    %6922 = vdwg.mxu0
    %6923 = vmatprep.subr.bf16.mxu0 %v6588
    %6924 = vmatpush1.bf16.msra.mxu0 %v6587
    %6925 = vmatprep.subr.bf16.mxu0 %v6592
    %6926 = vmatpush1.bf16.msra.mxu0 %v6591
    %6927 = vmatprep.subr.bf16.mxu0 %v6596
    %6928 = vmatpush1.bf16.msra.mxu0 %v6595
    %6929 = vmatprep.subr.bf16.mxu0 %v6600
    %6930 = vmatpush1.bf16.msra.mxu0 %v6599
    %6931 = vmatprep.subr.bf16.mxu0 %v6604
    %6932 = vmatpush1.bf16.msra.mxu0 %v6603
    %6933 = vmatprep.subr.bf16.mxu0 %v6608
    %6934 = vmatpush1.bf16.msra.mxu0 %v6607
    %6935 = vmatprep.subr.bf16.mxu0 %v6612
    %6936 = vmatpush1.bf16.msra.mxu0 %v6611
    %6937 = vmatprep.subr.bf16.mxu0 %v6616
    %6938 = vmatpush1.bf16.msra.mxu0 %v6615
    %6939 = vmatprep.subr.bf16.mxu0 %v6620
    %6940 = vmatpush1.bf16.msra.mxu0 %v6619
    %6941 = vmatprep.subr.bf16.mxu0 %v6624
    %6942 = vmatpush1.bf16.msra.mxu0 %v6623
    %6943 = vmatprep.subr.bf16.mxu0 %v6628
    %6944 = vmatpush1.bf16.msra.mxu0 %v6627
    %6945 = vmatprep.subr.bf16.mxu0 %v6632
    %6946 = vmatpush1.bf16.msra.mxu0 %v6631
    %6947 = vmatprep.subr.bf16.mxu0 %v6636
    %6948 = vmatpush1.bf16.msra.mxu0 %v6635
    %6949 = vmatprep.subr.bf16.mxu0 %v6640
    %6950 = vmatpush1.bf16.msra.mxu0 %v6639
    %6951 = vmatprep.subr.bf16.mxu0 %v6644
    %6952 = vmatpush1.bf16.msra.mxu0 %v6643
    %6953 = vmatprep.subr.bf16.mxu0 %v6648
    %6954 = vmatpush1.bf16.msra.mxu0 %v6647
    %6955 = vmatprep.mubr.bf16.mxu0 %v6048
    %6956 = vmatmul.mubr.bf16.gmra.mrb[0].mxu0 %v6047
    %v6957 = vpop.f32.mrb[0].mxu0
    %v6958 = vadd.f32 %v6192, %v6957
    %v6959 = vpop.f32.mrb[0].mxu0
    %v6960 = vadd.f32 %v6196, %v6959
    %v6961 = vpop.f32.mrb[0].mxu0
    %v6962 = vpop.f32.mrb[0].mxu0
    %6963 = vdwg.mxu0
    %6964 = vmatprep.subr.bf16.mxu0 %v6652
    %6965 = vmatpush1.bf16.msra.mxu0 %v6651
    %6966 = vmatprep.subr.bf16.mxu0 %v6656
    %6967 = vmatpush1.bf16.msra.mxu0 %v6655
    %6968 = vmatprep.subr.bf16.mxu0 %v6660
    %6969 = vmatpush1.bf16.msra.mxu0 %v6659
    %6970 = vmatprep.subr.bf16.mxu0 %v6664
    %6971 = vmatpush1.bf16.msra.mxu0 %v6663
    %6972 = vmatprep.subr.bf16.mxu0 %v6668
    %6973 = vmatpush1.bf16.msra.mxu0 %v6667
    %6974 = vmatprep.subr.bf16.mxu0 %v6672
    %6975 = vmatpush1.bf16.msra.mxu0 %v6671
    %6976 = vmatprep.subr.bf16.mxu0 %v6676
    %6977 = vmatpush1.bf16.msra.mxu0 %v6675
    %6978 = vmatprep.subr.bf16.mxu0 %v6680
    %6979 = vmatpush1.bf16.msra.mxu0 %v6679
    %6980 = vmatprep.subr.bf16.mxu0 %v6684
    %6981 = vmatpush1.bf16.msra.mxu0 %v6683
    %6982 = vmatprep.subr.bf16.mxu0 %v6688
    %6983 = vmatpush1.bf16.msra.mxu0 %v6687
    %6984 = vmatprep.subr.bf16.mxu0 %v6692
    %6985 = vmatpush1.bf16.msra.mxu0 %v6691
    %6986 = vmatprep.subr.bf16.mxu0 %v6696
    %6987 = vmatpush1.bf16.msra.mxu0 %v6695
    %6988 = vmatprep.subr.bf16.mxu0 %v6700
    %6989 = vmatpush1.bf16.msra.mxu0 %v6699
    %6990 = vmatprep.subr.bf16.mxu0 %v6704
    %6991 = vmatpush1.bf16.msra.mxu0 %v6703
    %6992 = vmatprep.subr.bf16.mxu0 %v6708
    %6993 = vmatpush1.bf16.msra.mxu0 %v6707
    %6994 = vmatprep.subr.bf16.mxu0 %v6712
    %6995 = vmatpush1.bf16.msra.mxu0 %v6711
    %6996 = vmatprep.mubr.bf16.mxu0 %v6050
    %6997 = vmatmul.mubr.bf16.gmra.mrb[0].mxu0 %v6049
    %v6998 = vpop.f32.mrb[0].mxu0
    %v6999 = vadd.f32 %v6958, %v6998
    %v7000 = vpop.f32.mrb[0].mxu0
    %v7001 = vadd.f32 %v6960, %v7000
    %v7002 = vpop.f32.mrb[0].mxu0
    %v7003 = vpop.f32.mrb[0].mxu0
    %7004 = vdwg.mxu0
    %v7005 = vmax.f32 %v6917, 0.0
    %v7006 = vmax.f32 %v6919, 0.0
    %v7007 = vmax.f32 %v6999, 0.0
    %v7008 = vmax.f32 %v7001, 0.0
    %v7009 = vpack.c.bf16 %v7005, %v7005
    %v7010 = vpack.c.bf16 %v7006, %v7006
    %v7011 = vpack.c.bf16 %v7007, %v7007
    %v7012 = vpack.c.bf16 %v7008, %v7008
    %v7013 = vld [vmem:[#allocation11] sm:$0xf]
    %v7014 = vld [vmem:[#allocation11 + $0x4] sm:$0xf]
    %v7015 = vld [vmem:[#allocation11 + $0x8] sm:$0xf]
    %v7016 = vld [vmem:[#allocation11 + $0xc] sm:$0xf]
    %v7017 = vld [vmem:[#allocation11 + $0x10] sm:$0xf]
    %v7018 = vld [vmem:[#allocation11 + $0x14] sm:$0xf]
    %v7019 = vld [vmem:[#allocation11 + $0x18] sm:$0xf]
    %v7020 = vld [vmem:[#allocation11 + $0x1c] sm:$0xf]
    %v7021 = vld [vmem:[#allocation11 + $0x20] sm:$0xf]
    %v7022 = vld [vmem:[#allocation11 + $0x24] sm:$0xf]
    %v7023 = vld [vmem:[#allocation11 + $0x28] sm:$0xf]
    %v7024 = vld [vmem:[#allocation11 + $0x2c] sm:$0xf]
    %v7025 = vld [vmem:[#allocation11 + $0x30] sm:$0xf]
    %v7026 = vld [vmem:[#allocation11 + $0x34] sm:$0xf]
    %v7027 = vld [vmem:[#allocation11 + $0x38] sm:$0xf]
    %v7028 = vld [vmem:[#allocation11 + $0x3c] sm:$0xf]
    %v7029 = vld [vmem:[#allocation11 + $0x40] sm:$0xf]
    %v7030 = vld [vmem:[#allocation11 + $0x44] sm:$0xf]
    %v7031 = vld [vmem:[#allocation11 + $0x48] sm:$0xf]
    %v7032 = vld [vmem:[#allocation11 + $0x4c] sm:$0xf]
    %v7033 = vld [vmem:[#allocation11 + $0x50] sm:$0xf]
    %v7034 = vld [vmem:[#allocation11 + $0x54] sm:$0xf]
    %v7035 = vld [vmem:[#allocation11 + $0x58] sm:$0xf]
    %v7036 = vld [vmem:[#allocation11 + $0x5c] sm:$0xf]
    %v7037 = vld [vmem:[#allocation11 + $0x60] sm:$0xf]
    %v7038 = vld [vmem:[#allocation11 + $0x64] sm:$0xf]
    %v7039 = vld [vmem:[#allocation11 + $0x68] sm:$0xf]
    %v7040 = vld [vmem:[#allocation11 + $0x6c] sm:$0xf]
    %v7041 = vld [vmem:[#allocation11 + $0x70] sm:$0xf]
    %v7042 = vld [vmem:[#allocation11 + $0x74] sm:$0xf]
    %v7043 = vld [vmem:[#allocation11 + $0x78] sm:$0xf]
    %v7044 = vld [vmem:[#allocation11 + $0x7c] sm:$0xf]
    %v7045 = vld [vmem:[#allocation11 + $0x80] sm:$0xf]
    %v7046 = vld [vmem:[#allocation11 + $0x84] sm:$0xf]
    %v7047 = vld [vmem:[#allocation11 + $0x88] sm:$0xf]
    %v7048 = vld [vmem:[#allocation11 + $0x8c] sm:$0xf]
    %v7049 = vld [vmem:[#allocation11 + $0x90] sm:$0xf]
    %v7050 = vld [vmem:[#allocation11 + $0x94] sm:$0xf]
    %v7051 = vld [vmem:[#allocation11 + $0x98] sm:$0xf]
    %v7052 = vld [vmem:[#allocation11 + $0x9c] sm:$0xf]
    %v7053 = vld [vmem:[#allocation11 + $0xa0] sm:$0xf]
    %v7054 = vld [vmem:[#allocation11 + $0xa4] sm:$0xf]
    %v7055 = vld [vmem:[#allocation11 + $0xa8] sm:$0xf]
    %v7056 = vld [vmem:[#allocation11 + $0xac] sm:$0xf]
    %v7057 = vld [vmem:[#allocation11 + $0xb0] sm:$0xf]
    %v7058 = vld [vmem:[#allocation11 + $0xb4] sm:$0xf]
    %v7059 = vld [vmem:[#allocation11 + $0xb8] sm:$0xf]
    %v7060 = vld [vmem:[#allocation11 + $0xbc] sm:$0xf]
    %v7061 = vld [vmem:[#allocation11 + $0xc0] sm:$0xf]
    %v7062 = vld [vmem:[#allocation11 + $0xc4] sm:$0xf]
    %v7063 = vld [vmem:[#allocation11 + $0xc8] sm:$0xf]
    %v7064 = vld [vmem:[#allocation11 + $0xcc] sm:$0xf]
    %v7065 = vld [vmem:[#allocation11 + $0xd0] sm:$0xf]
    %v7066 = vld [vmem:[#allocation11 + $0xd4] sm:$0xf]
    %v7067 = vld [vmem:[#allocation11 + $0xd8] sm:$0xf]
    %v7068 = vld [vmem:[#allocation11 + $0xdc] sm:$0xf]
    %v7069 = vld [vmem:[#allocation11 + $0xe0] sm:$0xf]
    %v7070 = vld [vmem:[#allocation11 + $0xe4] sm:$0xf]
    %v7071 = vld [vmem:[#allocation11 + $0xe8] sm:$0xf]
    %v7072 = vld [vmem:[#allocation11 + $0xec] sm:$0xf]
    %v7073 = vld [vmem:[#allocation11 + $0xf0] sm:$0xf]
    %v7074 = vld [vmem:[#allocation11 + $0xf4] sm:$0xf]
    %v7075 = vld [vmem:[#allocation11 + $0xf8] sm:$0xf]
    %v7076 = vld [vmem:[#allocation11 + $0xfc] sm:$0xf]
    %v7077 = vld [vmem:[#allocation13] sm:$0x1]
    %v7079 = vlaneseq
    %v7080 = vshrl.u32 %v7079, 7
    %v7081 = vsub.s32 0, %v7080
    %v7082 = vrot.slane %v7077, %v7081
    %v7148 = vunpack.c.l.b16 %v7013
    %v7149 = vunpack.c.l.b16 %v7014
    %v7150 = vunpack.c.l.b16 %v7015
    %v7151 = vunpack.c.l.b16 %v7016
    %v7152 = vunpack.c.l.b16 %v7017
    %v7153 = vunpack.c.l.b16 %v7018
    %v7154 = vunpack.c.l.b16 %v7019
    %v7155 = vunpack.c.l.b16 %v7020
    %v7156 = vunpack.c.l.b16 %v7021
    %v7157 = vunpack.c.l.b16 %v7022
    %v7158 = vunpack.c.l.b16 %v7023
    %v7159 = vunpack.c.l.b16 %v7024
    %v7160 = vunpack.c.l.b16 %v7025
    %v7161 = vunpack.c.l.b16 %v7026
    %v7162 = vunpack.c.l.b16 %v7027
    %v7163 = vunpack.c.l.b16 %v7028
    %v7164 = vunpack.c.l.b16 %v7029
    %v7165 = vunpack.c.l.b16 %v7030
    %v7166 = vunpack.c.l.b16 %v7031
    %v7167 = vunpack.c.l.b16 %v7032
    %v7168 = vunpack.c.l.b16 %v7033
    %v7169 = vunpack.c.l.b16 %v7034
    %v7170 = vunpack.c.l.b16 %v7035
    %v7171 = vunpack.c.l.b16 %v7036
    %v7172 = vunpack.c.l.b16 %v7037
    %v7173 = vunpack.c.l.b16 %v7038
    %v7174 = vunpack.c.l.b16 %v7039
    %v7175 = vunpack.c.l.b16 %v7040
    %v7176 = vunpack.c.l.b16 %v7041
    %v7177 = vunpack.c.l.b16 %v7042
    %v7178 = vunpack.c.l.b16 %v7043
    %v7179 = vunpack.c.l.b16 %v7044
    %v7180 = vunpack.c.l.b16 %v7045
    %v7181 = vunpack.c.l.b16 %v7046
    %v7182 = vunpack.c.l.b16 %v7047
    %v7183 = vunpack.c.l.b16 %v7048
    %v7184 = vunpack.c.l.b16 %v7049
    %v7185 = vunpack.c.l.b16 %v7050
    %v7186 = vunpack.c.l.b16 %v7051
    %v7187 = vunpack.c.l.b16 %v7052
    %v7188 = vunpack.c.l.b16 %v7053
    %v7189 = vunpack.c.l.b16 %v7054
    %v7190 = vunpack.c.l.b16 %v7055
    %v7191 = vunpack.c.l.b16 %v7056
    %v7192 = vunpack.c.l.b16 %v7057
    %v7193 = vunpack.c.l.b16 %v7058
    %v7194 = vunpack.c.l.b16 %v7059
    %v7195 = vunpack.c.l.b16 %v7060
    %v7196 = vunpack.c.l.b16 %v7061
    %v7197 = vunpack.c.l.b16 %v7062
    %v7198 = vunpack.c.l.b16 %v7063
    %v7199 = vunpack.c.l.b16 %v7064
    %v7200 = vunpack.c.l.b16 %v7065
    %v7201 = vunpack.c.l.b16 %v7066
    %v7202 = vunpack.c.l.b16 %v7067
    %v7203 = vunpack.c.l.b16 %v7068
    %v7204 = vunpack.c.l.b16 %v7069
    %v7205 = vunpack.c.l.b16 %v7070
    %v7206 = vunpack.c.l.b16 %v7071
    %v7207 = vunpack.c.l.b16 %v7072
    %v7208 = vunpack.c.l.b16 %v7073
    %v7209 = vunpack.c.l.b16 %v7074
    %v7210 = vunpack.c.l.b16 %v7075
    %v7211 = vunpack.c.l.b16 %v7076
    %v7212 = vpack.c.b16 %v7149, %v7148
    %v7213 = vpack.c.b16 %v7151, %v7150
    %v7214 = vpack.c.b16 %v7153, %v7152
    %v7215 = vpack.c.b16 %v7155, %v7154
    %v7216 = vpack.c.b16 %v7157, %v7156
    %v7217 = vpack.c.b16 %v7159, %v7158
    %v7218 = vpack.c.b16 %v7161, %v7160
    %v7219 = vpack.c.b16 %v7163, %v7162
    %v7220 = vpack.c.b16 %v7165, %v7164
    %v7221 = vpack.c.b16 %v7167, %v7166
    %v7222 = vpack.c.b16 %v7169, %v7168
    %v7223 = vpack.c.b16 %v7171, %v7170
    %v7224 = vpack.c.b16 %v7173, %v7172
    %v7225 = vpack.c.b16 %v7175, %v7174
    %v7226 = vpack.c.b16 %v7177, %v7176
    %v7227 = vpack.c.b16 %v7179, %v7178
    %v7228 = vpack.c.b16 %v7181, %v7180
    %v7229 = vpack.c.b16 %v7183, %v7182
    %v7230 = vpack.c.b16 %v7185, %v7184
    %v7231 = vpack.c.b16 %v7187, %v7186
    %v7232 = vpack.c.b16 %v7189, %v7188
    %v7233 = vpack.c.b16 %v7191, %v7190
    %v7234 = vpack.c.b16 %v7193, %v7192
    %v7235 = vpack.c.b16 %v7195, %v7194
    %v7236 = vpack.c.b16 %v7197, %v7196
    %v7237 = vpack.c.b16 %v7199, %v7198
    %v7238 = vpack.c.b16 %v7201, %v7200
    %v7239 = vpack.c.b16 %v7203, %v7202
    %v7240 = vpack.c.b16 %v7205, %v7204
    %v7241 = vpack.c.b16 %v7207, %v7206
    %v7242 = vpack.c.b16 %v7209, %v7208
    %v7243 = vpack.c.b16 %v7211, %v7210
    %7276 = vmatprep.subr.bf16.mxu0 0
    %7277 = vmatpush1.bf16.msra.mxu0 %v7212
    %7278 = vmatprep.subr.bf16.mxu0 0
    %7279 = vmatpush1.bf16.msra.mxu0 %v7213
    %7280 = vmatprep.subr.bf16.mxu0 0
    %7281 = vmatpush1.bf16.msra.mxu0 %v7214
    %7282 = vmatprep.subr.bf16.mxu0 0
    %7283 = vmatpush1.bf16.msra.mxu0 %v7215
    %7284 = vmatprep.subr.bf16.mxu0 0
    %7285 = vmatpush1.bf16.msra.mxu0 %v7216
    %7286 = vmatprep.subr.bf16.mxu0 0
    %7287 = vmatpush1.bf16.msra.mxu0 %v7217
    %7288 = vmatprep.subr.bf16.mxu0 0
    %7289 = vmatpush1.bf16.msra.mxu0 %v7218
    %7290 = vmatprep.subr.bf16.mxu0 0
    %7291 = vmatpush1.bf16.msra.mxu0 %v7219
    %7292 = vmatprep.subr.bf16.mxu0 0
    %7293 = vmatpush1.bf16.msra.mxu0 %v7220
    %7294 = vmatprep.subr.bf16.mxu0 0
    %7295 = vmatpush1.bf16.msra.mxu0 %v7221
    %7296 = vmatprep.subr.bf16.mxu0 0
    %7297 = vmatpush1.bf16.msra.mxu0 %v7222
    %7298 = vmatprep.subr.bf16.mxu0 0
    %7299 = vmatpush1.bf16.msra.mxu0 %v7223
    %7300 = vmatprep.subr.bf16.mxu0 0
    %7301 = vmatpush1.bf16.msra.mxu0 %v7224
    %7302 = vmatprep.subr.bf16.mxu0 0
    %7303 = vmatpush1.bf16.msra.mxu0 %v7225
    %7304 = vmatprep.subr.bf16.mxu0 0
    %7305 = vmatpush1.bf16.msra.mxu0 %v7226
    %7306 = vmatprep.subr.bf16.mxu0 0
    %7307 = vmatpush1.bf16.msra.mxu0 %v7227
    %7308 = vmatprep.mubr.bf16.mxu0 %v7010
    %7309 = vmatmul.mubr.bf16.gmra.mrb[0].mxu0 %v7009
    %v7310 = vpop.f32.mrb[0].mxu0
    %v7311 = vadd.f32 %v7082, %v7310
    %v7312 = vpop.f32.mrb[0].mxu0
    %v7313 = vpop.f32.mrb[0].mxu0
    %v7314 = vpop.f32.mrb[0].mxu0
    %7315 = vdwg.mxu0
    %7316 = vmatprep.subr.bf16.mxu0 0
    %7317 = vmatpush1.bf16.msra.mxu0 %v7228
    %7318 = vmatprep.subr.bf16.mxu0 0
    %7319 = vmatpush1.bf16.msra.mxu0 %v7229
    %7320 = vmatprep.subr.bf16.mxu0 0
    %7321 = vmatpush1.bf16.msra.mxu0 %v7230
    %7322 = vmatprep.subr.bf16.mxu0 0
    %7323 = vmatpush1.bf16.msra.mxu0 %v7231
    %7324 = vmatprep.subr.bf16.mxu0 0
    %7325 = vmatpush1.bf16.msra.mxu0 %v7232
    %7326 = vmatprep.subr.bf16.mxu0 0
    %7327 = vmatpush1.bf16.msra.mxu0 %v7233
    %7328 = vmatprep.subr.bf16.mxu0 0
    %7329 = vmatpush1.bf16.msra.mxu0 %v7234
    %7330 = vmatprep.subr.bf16.mxu0 0
    %7331 = vmatpush1.bf16.msra.mxu0 %v7235
    %7332 = vmatprep.subr.bf16.mxu0 0
    %7333 = vmatpush1.bf16.msra.mxu0 %v7236
    %7334 = vmatprep.subr.bf16.mxu0 0
    %7335 = vmatpush1.bf16.msra.mxu0 %v7237
    %7336 = vmatprep.subr.bf16.mxu0 0
    %7337 = vmatpush1.bf16.msra.mxu0 %v7238
    %7338 = vmatprep.subr.bf16.mxu0 0
    %7339 = vmatpush1.bf16.msra.mxu0 %v7239
    %7340 = vmatprep.subr.bf16.mxu0 0
    %7341 = vmatpush1.bf16.msra.mxu0 %v7240
    %7342 = vmatprep.subr.bf16.mxu0 0
    %7343 = vmatpush1.bf16.msra.mxu0 %v7241
    %7344 = vmatprep.subr.bf16.mxu0 0
    %7345 = vmatpush1.bf16.msra.mxu0 %v7242
    %7346 = vmatprep.subr.bf16.mxu0 0
    %7347 = vmatpush1.bf16.msra.mxu0 %v7243
    %7348 = vmatprep.mubr.bf16.mxu0 %v7012
    %7349 = vmatmul.mubr.bf16.gmra.mrb[0].mxu0 %v7011
    %v7350 = vpop.f32.mrb[0].mxu0
    %v7351 = vadd.f32 %v7311, %v7350
    %v7352 = vpop.f32.mrb[0].mxu0
    %v7353 = vpop.f32.mrb[0].mxu0
    %v7354 = vpop.f32.mrb[0].mxu0
    %7355 = vdwg.mxu0
    %7356 = vmax.xlane.f32.xlu0 %v7351
    %v7357 = vpop.xlane.xlu0 %7356
    %v7358 = vsub.f32 %v7351, %v7357
    %v7359 = vmul.f32 %v7358, 1.442695
    %v7360 = vpow.pop %v7359
    %7361 = vadd.xlane.f32.xlu0 %v7360
    %v7362 = vpop.xlane.xlu0 %7361
    %v7363 = vrcp.pop %v7362
    %v7364 = vmul.f32 %v7360, %v7363
    %7365 = vst [vmem:[#allocation14] sm:$0xff] %v7364
    // Predicated region
    $region58: #{tpu_custom_call.1} parent=1 // pred_check
      _
    $region59: #{tpu_custom_call.1} parent=1 // pred_check_branch
      %7367 = sbr.rel (0) target = $region61
    $region60: #{tpu_custom_call.1} parent=1 // pred_region
      %s7369 = ssub.s32 128, 32
      %7370 = vsyncadd [#allocation4], %s7369
      %s7371 = sshll.u32 [#allocation14], 4
      %s7372 = int_to_ptr.vmem [resolvable:$true] %s7371
      %7377 = dma.vmem_to_hbm [thread:$0]  %s7372, 32, %s7, [#allocation4], 32, 32, 2
    $region61: #{tpu_custom_call.1} parent=1 // pred_fallthru
      _
    // Predicated region
    $region62: #{tpu_custom_call.1} parent=1 // pred_check
      _
    $region63: #{tpu_custom_call.1} parent=1 // pred_check_branch
      %7379 = sbr.rel (0) target = $region65
    $region64: #{tpu_custom_call.1} parent=1 // pred_region
      %7380 = dma.done [#allocation4], 128
    $region65: #{tpu_custom_call.1} parent=1 // pred_fallthru
      _
    %7381 = vsyncpa [#allocation3], 1
    %7382 = vsyncpa [#allocation6], 1
    %7383 = vsyncpa [#allocation9], 1
    %7384 = vsyncpa [#allocation12], 1
    %7385 = vsyncpa [#allocation4], 1

</llo_original>
